<compile_context>
chip_gen: v5e
topology: v5e:2x2
jax: 0.10.0
libtpu: 0.0.40
codegen_flags: <defaults>
</compile_context>

<pallas_src>
import functools

import jax
import jax.numpy as jnp
from jax.experimental import pallas as pl
from jax.experimental.pallas import tpu as pltpu


# --------------------------------------------------------------------------- #
# Kernel
# --------------------------------------------------------------------------- #
def _window_attn_kernel(x_ref, wqkv_ref, bqkv_ref, bias_ref, wproj_ref,
                        bproj_ref, o_ref, heads_ref, *, num_heads, head_dim,
                        bw, n_tok, c):
    """One grid step == BW windows.

    Ref shapes (per block):
      x_ref     : (BW*N, C)         activation tile (M rows for the MXU)
      wqkv_ref  : (C, 3C)   bf16    qk scale pre-folded into the Q columns
      bqkv_ref  : (1, 3C)   f32
      bias_ref  : (H, N, N) f32     relative position bias, pre-gathered
      wproj_ref : (C, C)    bf16
      bproj_ref : (1, C)    f32
      o_ref     : (BW*N, C)
      heads_ref : (BW*N, C) bf16    VMEM scratch for per-head outputs
    """
    m = bw * n_tok
    bh = num_heads * bw
    hd = head_dim

    # ---- fused QKV projection: one (M, C) x (C, 3C) bf16 MXU matmul ----
    x2d = x_ref[...].astype(jnp.bfloat16)
    qkv = jnp.dot(x2d, wqkv_ref[...], preferred_element_type=jnp.float32)
    qkv = qkv + bqkv_ref[...]                                  # (M, 3C) f32

    # ---- head-major (H*BW, N, hd) batches via leading-axis stacking only
    #      (no middle-dim transpose, no lane-axis concatenate) ----
    def split_heads(slab_f32):                                 # (M, C) -> (H*BW, N, hd)
        slab = slab_f32.astype(jnp.bfloat16)
        parts = [slab[:, h * hd:(h + 1) * hd].reshape(bw, n_tok, hd)
                 for h in range(num_heads)]
        return jnp.concatenate(parts, axis=0)

    q = split_heads(qkv[:, :c])
    k = split_heads(qkv[:, c:2 * c])
    v = split_heads(qkv[:, 2 * c:])

    # ---- attention core: ONE batched matmul per stage over all heads ----
    s = jnp.einsum("bqd,bkd->bqk", q, k,
                   preferred_element_type=jnp.float32)         # (H*BW, N, N)
    s = (s.reshape(num_heads, bw, n_tok, n_tok)
         + bias_ref[...][:, None, :, :]).reshape(bh, n_tok, n_tok)

    # softmax over keys (f32); denominator on the EUP fast path
    s = s - jnp.max(s, axis=-1, keepdims=True)
    p = jnp.exp(s)
    p = p * pl.reciprocal(jnp.sum(p, axis=-1, keepdims=True), approx=True)

    o = jnp.einsum("bqk,bkd->bqd", p.astype(jnp.bfloat16), v,
                   preferred_element_type=jnp.float32)         # (H*BW, N, hd)

    # ---- scatter head outputs into the (M, C) bf16 scratch (no lane concat) ----
    for h in range(num_heads):
        heads_ref[:, h * hd:(h + 1) * hd] = (
            o[h * bw:(h + 1) * bw].reshape(m, hd).astype(jnp.bfloat16))

    # ---- single output projection with full contraction K = C ----
    out = jnp.dot(heads_ref[...], wproj_ref[...],
                  preferred_element_type=jnp.float32) + bproj_ref[...]
    o_ref[...] = out.astype(o_ref.dtype)


# --------------------------------------------------------------------------- #
# Generation-aware sizing helpers
# --------------------------------------------------------------------------- #
def _round_up(x, m):
    return -(-x // m) * m


def _vmem_capacity_bytes():
    """Per-core VMEM capacity, with a conservative fallback (v7x: 64 MiB/TC)."""
    try:
        cap = int(getattr(pltpu.get_tpu_info(), "vmem_capacity_bytes", 0))
        if cap > 0:
            return cap
    except Exception:
        pass
    return 64 * 1024 * 1024


def _vmem_bytes_estimate(bw, n_p, c, num_heads):
    """Rough lane-padded VMEM footprint of one grid step."""
    lanes_c = _round_up(c, 128)
    lanes_3c = _round_up(3 * c, 128)
    lanes_n = _round_up(n_p, 128)
    lanes_hd = _round_up(max(c // num_heads, 1), 128)
    m = bw * n_p
    act = 2 * 2 * m * lanes_c * 4                          # double-buffered in/out tiles (f32)
    weights = 2 * (c * lanes_3c + c * lanes_c) * 2         # bf16 Wqkv + Wproj (double-buffered)
    biases = 2 * (num_heads * n_p * lanes_n + 8 * lanes_c) * 4
    live = (m * 3 * lanes_c * 4                            # qkv (f32)
            + 3 * num_heads * m * lanes_hd * 2             # head-major q/k/v (bf16)
            + 2 * num_heads * bw * n_p * lanes_n * 4       # scores + probs (f32, lane padded)
            + num_heads * m * lanes_hd * 4                 # attn @ v (f32)
            + m * lanes_c * (2 + 4))                       # heads scratch (bf16) + proj out (f32)
    return act + weights + biases + live


def _choose_bw(B_, n_p, c, num_heads, vmem_cap):
    """Windows per grid step: target >=512 MXU rows, stay inside ~75% of this
    chip's VMEM, keep >=2 grid steps when possible (v7x has 2 TensorCores)."""
    target_rows = 512
    bw = max(1, -(-target_rows // n_p))
    budget = int(0.75 * vmem_cap)
    while bw > 1 and _vmem_bytes_estimate(bw, n_p, c, num_heads) > budget:
        bw -= 1
    if B_ >= 16:
        bw = min(bw, -(-B_ // 2))          # at least two grid steps
    return max(1, min(bw, B_))


def _vmem_limit_bytes(bw, n_p, c, num_heads, vmem_cap):
    est = int(1.3 * _vmem_bytes_estimate(bw, n_p, c, num_heads))
    ceiling = int(0.75 * vmem_cap)         # ~96 MiB on v5e/v6e, ~48 MiB on v7x
    return max(16 * 1024 * 1024, min(est, ceiling))


# --------------------------------------------------------------------------- #
# Wrapper
# --------------------------------------------------------------------------- #
def window_attention(x, params, *, window_size, num_heads, qk_scale=None):
    """x: (B_, N, C) with N == window_size[0] * window_size[1]."""
    B_, N, C = x.shape
    head_dim = C // num_heads
    scale = qk_scale or head_dim ** (-0.5)
    Wh, Ww = window_size
    assert N == Wh * Ww

    # ---- relative position bias (plain-JAX glue: gather from the table) ----
    coords = jnp.stack(jnp.meshgrid(jnp.arange(Wh), jnp.arange(Ww), indexing="ij"))
    cf = coords.reshape(2, -1)                                             # (2, N)
    rel = (cf[:, :, None] - cf[:, None, :]).transpose(1, 2, 0)             # (N, N, 2)
    idx = (rel[..., 0] + (Wh - 1)) * (2 * Ww - 1) + (rel[..., 1] + (Ww - 1))
    bias = params["rel_pos_bias_table"][idx.reshape(-1)]                   # (N*N, H)
    bias = bias.reshape(N, N, num_heads).transpose(2, 0, 1)                # (H, N, N)
    bias = bias.astype(jnp.float32)

    # ---- pad tokens/window to a sublane multiple; mask padded keys ----
    N_p = _round_up(N, 8)
    if N_p != N:
        bias = jnp.pad(bias, ((0, 0), (0, N_p - N), (0, N_p - N)))
        bias = bias.at[:, :, N:].set(-1e30)          # padded keys never attended
        x = jnp.pad(x, ((0, 0), (0, N_p - N), (0, 0)))

    # ---- fold qk scale into the Q columns of the fused qkv weight/bias ----
    scale_vec = jnp.concatenate(
        [jnp.full((C,), scale, jnp.float32), jnp.ones((2 * C,), jnp.float32)])
    wqkv = (params["wqkv"].astype(jnp.float32) * scale_vec[None, :]).astype(jnp.bfloat16)
    bqkv = params["bqkv"].astype(jnp.float32) * scale_vec[None, :]         # (1, 3C) f32
    wproj = params["wproj"].astype(jnp.bfloat16)                           # (C, C)
    bproj = params["bproj"].astype(jnp.float32)                            # (1, C)

    # ---- batch windows per grid step (generation-aware); pad if needed ----
    vmem_cap = _vmem_capacity_bytes()
    bw = _choose_bw(B_, N_p, C, num_heads, vmem_cap)
    pad_b = (-B_) % bw
    if pad_b:
        x = jnp.pad(x, ((0, pad_b), (0, 0), (0, 0)))
    Bp = B_ + pad_b
    num_blocks = Bp // bw

    # Present activations as a 2-D (Bp*N_p, C) slab: matmuls consume it
    # directly (no in-kernel relayout) and it is lane-dense when C % 128 == 0.
    x2d = x.reshape(Bp * N_p, C)
    rows = bw * N_p

    kernel = functools.partial(_window_attn_kernel, num_heads=num_heads,
                               head_dim=head_dim, bw=bw, n_tok=N_p, c=C)

    full2d = lambda i: (0, 0)
    full3d = lambda i: (0, 0, 0)

    # NOTE: the grid-invariant weight/bias blocks could use
    # pipeline_mode=pl.Buffered(1) to skip their second pipeline buffer (helps
    # most inside v7x's 64 MiB VMEM at large C); left at the default buffering
    # to keep lowering portable.
    out = pl.pallas_call(
        kernel,
        out_shape=jax.ShapeDtypeStruct((Bp * N_p, C), x.dtype),
        grid_spec=pltpu.PrefetchScalarGridSpec(
            num_scalar_prefetch=0,
            grid=(num_blocks,),
            in_specs=[
                pl.BlockSpec((rows, C), lambda i: (i, 0)),                 # x tile
                pl.BlockSpec((C, 3 * C), full2d),                          # Wqkv (bf16)
                pl.BlockSpec((1, 3 * C), full2d),                          # bqkv (f32)
                pl.BlockSpec((num_heads, N_p, N_p), full3d),               # bias (f32)
                pl.BlockSpec((C, C), full2d),                              # Wproj (bf16)
                pl.BlockSpec((1, C), full2d),                              # bproj (f32)
            ],
            out_specs=pl.BlockSpec((rows, C), lambda i: (i, 0)),
            scratch_shapes=[pltpu.VMEM((rows, C), jnp.bfloat16)],          # head outputs
        ),
        compiler_params=pltpu.CompilerParams(
            dimension_semantics=("parallel",),
            vmem_limit_bytes=_vmem_limit_bytes(bw, N_p, C, num_heads, vmem_cap),
        ),
    )(x2d, wqkv, bqkv, bias, wproj, bproj)

    out = out.reshape(Bp, N_p, C)[:B_, :N, :]
    return out


# --------------------------------------------------------------------------- #
# Pure-JAX reference (mirrors the PyTorch forward, eval mode)
# --------------------------------------------------------------------------- #
def window_attention_reference(x, params, *, window_size, num_heads, qk_scale=None):
    B_, N, C = x.shape
    head_dim = C // num_heads
    scale = qk_scale or head_dim ** (-0.5)
    Wh, Ww = window_size

    coords = jnp.stack(jnp.meshgrid(jnp.arange(Wh), jnp.arange(Ww), indexing="ij"))
    cf = coords.reshape(2, -1)
    rel = (cf[:, :, None] - cf[:, None, :]).transpose(1, 2, 0)
    idx = (rel[..., 0] + (Wh - 1)) * (2 * Ww - 1) + (rel[..., 1] + (Ww - 1))
    bias = params["rel_pos_bias_table"][idx.reshape(-1)].reshape(N, N, num_heads)
    bias = bias.transpose(2, 0, 1)                                         # (H, N, N)

    qkv = x @ params["wqkv"] + params["bqkv"]                              # (B_, N, 3C)
    qkv = qkv.reshape(B_, N, 3, num_heads, head_dim).transpose(2, 0, 3, 1, 4)
    q, k, v = qkv[0] * scale, qkv[1], qkv[2]                               # (B_, H, N, hd)
    attn = jnp.einsum("bhqd,bhkd->bhqk", q, k) + bias[None]
    attn = jax.nn.softmax(attn, axis=-1)
    out = jnp.einsum("bhqk,bhkd->bhqd", attn, v)
    out = out.transpose(0, 2, 1, 3).reshape(B_, N, C)
    return out @ params["wproj"] + params["bproj"]


def init_params(key, dim, window_size, num_heads):
    Wh, Ww = window_size
    ks = jax.random.split(key, 5)
    s = 0.02
    # Weights stored in "x @ W" layout; qkv fused like nn.Linear(dim, 3*dim).
    return {
        "wqkv": jax.random.normal(ks[0], (dim, 3 * dim), jnp.float32) * s,
        "bqkv": jax.random.normal(ks[1], (1, 3 * dim), jnp.float32) * s,
        "wproj": jax.random.normal(ks[2], (dim, dim), jnp.float32) * s,
        "bproj": jnp.zeros((1, dim), jnp.float32),
        # trunc_normal_(std=0.02) approximated by plain normal (synthetic init).
        "rel_pos_bias_table": jax.random.normal(
            ks[3], ((2 * Wh - 1) * (2 * Ww - 1), num_heads), jnp.float32) * s,
    }


if __name__ == "__main__":
    B_ = 8                                 # number of windows
    window_size = (4, 4)
    N = window_size[0] * window_size[1]    # 16 tokens per window
    dim = 32
    num_heads = 4

    key = jax.random.PRNGKey(0)
    kx, kp = jax.random.split(key)
    x = jax.random.normal(kx, (B_, N, dim), jnp.float32)
    params = init_params(kp, dim, window_size, num_heads)

    out = window_attention(x, params, window_size=window_size, num_heads=num_heads)
    out = jax.block_until_ready(out)

    ref = window_attention_reference(x, params, window_size=window_size,
                                     num_heads=num_heads)
    ref = jax.block_until_ready(ref)

    assert out.shape == (B_, N, dim)
    # bf16 matmul operands + approx reciprocal => slightly loosened tolerance.
    assert jnp.allclose(out, ref, atol=1e-2, rtol=1e-2), (
        f"max abs diff {jnp.max(jnp.abs(out - ref))}")
    print("KERNEL_OK")
</pallas_src>

<mosaic_0001>
module attributes {stable_mosaic.version = 11 : i64} {
  func.func @_window_attn_kernel(%arg0: i32, %arg1: memref<128x32xf32, #tpu.memory_space<vmem>>, %arg2: memref<32x96xbf16, #tpu.memory_space<vmem>>, %arg3: memref<1x96xf32, #tpu.memory_space<vmem>>, %arg4: memref<4x16x16xf32, #tpu.memory_space<vmem>>, %arg5: memref<32x32xbf16, #tpu.memory_space<vmem>>, %arg6: memref<1x32xf32, #tpu.memory_space<vmem>>, %arg7: memref<128x32xf32, #tpu.memory_space<vmem>>, %arg8: memref<128x32xbf16, #tpu.memory_space<vmem>>) attributes {dimension_semantics = [#tpu.dimension_semantics<parallel>], iteration_bounds = array<i64: 1>, scalar_prefetch = 0 : i64, scratch_operands = 1 : i64, tpu.core_type = #tpu.core_type<tc>, window_params = [{transform_indices = @transform_0, window_bounds = array<i64: 128, 32>}, {pipeline_mode = #tpu.pipeline_mode<synchronous>, transform_indices = @transform_1, window_bounds = array<i64: 32, 96>}, {pipeline_mode = #tpu.pipeline_mode<synchronous>, transform_indices = @transform_2, window_bounds = array<i64: 1, 96>}, {pipeline_mode = #tpu.pipeline_mode<synchronous>, transform_indices = @transform_3, window_bounds = array<i64: 4, 16, 16>}, {pipeline_mode = #tpu.pipeline_mode<synchronous>, transform_indices = @transform_4, window_bounds = array<i64: 32, 32>}, {pipeline_mode = #tpu.pipeline_mode<synchronous>, transform_indices = @transform_5, window_bounds = array<i64: 1, 32>}, {transform_indices = @transform_6, window_bounds = array<i64: 128, 32>}]} {
    %c0 = arith.constant 0 : index
    %c0_0 = arith.constant 0 : index
    %0 = vector.load %arg1[%c0, %c0_0] : memref<128x32xf32, #tpu.memory_space<vmem>>, vector<128x32xf32>
    %1 = arith.truncf %0 : vector<128x32xf32> to vector<128x32xbf16>
    %c0_1 = arith.constant 0 : index
    %c0_2 = arith.constant 0 : index
    %2 = vector.load %arg2[%c0_1, %c0_2] : memref<32x96xbf16, #tpu.memory_space<vmem>>, vector<32x96xbf16>
    %cst = arith.constant dense<0.000000e+00> : vector<128x96xf32>
    %3 = tpu.matmul %1, %2, %cst {dimension_numbers = #tpu.dot_dimension_numbers<[1], [0], [0], [1], [0, 0, 1, 1], [], []>} : vector<128x32xbf16>, vector<32x96xbf16>, vector<128x96xf32> -> vector<128x96xf32>
    %c0_3 = arith.constant 0 : index
    %c0_4 = arith.constant 0 : index
    %4 = vector.load %arg3[%c0_3, %c0_4] : memref<1x96xf32, #tpu.memory_space<vmem>>, vector<1x96xf32>
    %5 = vector.broadcast %4 : vector<1x96xf32> to vector<128x96xf32>
    %6 = arith.addf %3, %5 : vector<128x96xf32>
    %7 = vector.extract_strided_slice %6 {offsets = [0, 0], sizes = [128, 32], strides = [1, 1]} : vector<128x96xf32> to vector<128x32xf32>
    %8 = arith.truncf %7 : vector<128x32xf32> to vector<128x32xbf16>
    %9 = vector.extract_strided_slice %8 {offsets = [0, 0], sizes = [128, 8], strides = [1, 1]} : vector<128x32xbf16> to vector<128x8xbf16>
    %10 = vector.shape_cast %9 : vector<128x8xbf16> to vector<8x16x8xbf16>
    %11 = vector.extract_strided_slice %8 {offsets = [0, 8], sizes = [128, 8], strides = [1, 1]} : vector<128x32xbf16> to vector<128x8xbf16>
    %12 = vector.shape_cast %11 : vector<128x8xbf16> to vector<8x16x8xbf16>
    %13 = vector.extract_strided_slice %8 {offsets = [0, 16], sizes = [128, 8], strides = [1, 1]} : vector<128x32xbf16> to vector<128x8xbf16>
    %14 = vector.shape_cast %13 : vector<128x8xbf16> to vector<8x16x8xbf16>
    %15 = vector.extract_strided_slice %8 {offsets = [0, 24], sizes = [128, 8], strides = [1, 1]} : vector<128x32xbf16> to vector<128x8xbf16>
    %16 = vector.shape_cast %15 : vector<128x8xbf16> to vector<8x16x8xbf16>
    %17 = tpu.concatenate %10, %12, %14, %16 in 0 : vector<8x16x8xbf16>, vector<8x16x8xbf16>, vector<8x16x8xbf16>, vector<8x16x8xbf16> -> vector<32x16x8xbf16>
    %18 = vector.extract_strided_slice %6 {offsets = [0, 32], sizes = [128, 32], strides = [1, 1]} : vector<128x96xf32> to vector<128x32xf32>
    %19 = arith.truncf %18 : vector<128x32xf32> to vector<128x32xbf16>
    %20 = vector.extract_strided_slice %19 {offsets = [0, 0], sizes = [128, 8], strides = [1, 1]} : vector<128x32xbf16> to vector<128x8xbf16>
    %21 = vector.shape_cast %20 : vector<128x8xbf16> to vector<8x16x8xbf16>
    %22 = vector.extract_strided_slice %19 {offsets = [0, 8], sizes = [128, 8], strides = [1, 1]} : vector<128x32xbf16> to vector<128x8xbf16>
    %23 = vector.shape_cast %22 : vector<128x8xbf16> to vector<8x16x8xbf16>
    %24 = vector.extract_strided_slice %19 {offsets = [0, 16], sizes = [128, 8], strides = [1, 1]} : vector<128x32xbf16> to vector<128x8xbf16>
    %25 = vector.shape_cast %24 : vector<128x8xbf16> to vector<8x16x8xbf16>
    %26 = vector.extract_strided_slice %19 {offsets = [0, 24], sizes = [128, 8], strides = [1, 1]} : vector<128x32xbf16> to vector<128x8xbf16>
    %27 = vector.shape_cast %26 : vector<128x8xbf16> to vector<8x16x8xbf16>
    %28 = tpu.concatenate %21, %23, %25, %27 in 0 : vector<8x16x8xbf16>, vector<8x16x8xbf16>, vector<8x16x8xbf16>, vector<8x16x8xbf16> -> vector<32x16x8xbf16>
    %29 = vector.extract_strided_slice %6 {offsets = [0, 64], sizes = [128, 32], strides = [1, 1]} : vector<128x96xf32> to vector<128x32xf32>
    %30 = arith.truncf %29 : vector<128x32xf32> to vector<128x32xbf16>
    %31 = vector.extract_strided_slice %30 {offsets = [0, 0], sizes = [128, 8], strides = [1, 1]} : vector<128x32xbf16> to vector<128x8xbf16>
    %32 = vector.shape_cast %31 : vector<128x8xbf16> to vector<8x16x8xbf16>
    %33 = vector.extract_strided_slice %30 {offsets = [0, 8], sizes = [128, 8], strides = [1, 1]} : vector<128x32xbf16> to vector<128x8xbf16>
    %34 = vector.shape_cast %33 : vector<128x8xbf16> to vector<8x16x8xbf16>
    %35 = vector.extract_strided_slice %30 {offsets = [0, 16], sizes = [128, 8], strides = [1, 1]} : vector<128x32xbf16> to vector<128x8xbf16>
    %36 = vector.shape_cast %35 : vector<128x8xbf16> to vector<8x16x8xbf16>
    %37 = vector.extract_strided_slice %30 {offsets = [0, 24], sizes = [128, 8], strides = [1, 1]} : vector<128x32xbf16> to vector<128x8xbf16>
    %38 = vector.shape_cast %37 : vector<128x8xbf16> to vector<8x16x8xbf16>
    %39 = tpu.concatenate %32, %34, %36, %38 in 0 : vector<8x16x8xbf16>, vector<8x16x8xbf16>, vector<8x16x8xbf16>, vector<8x16x8xbf16> -> vector<32x16x8xbf16>
    "tpu.trace_start"() <{level = 10 : i32, message = "bqd,bkd->bqk"}> : () -> ()
    %cst_5 = arith.constant dense<0.000000e+00> : vector<32x16x16xf32>
    %40 = tpu.matmul %17, %28, %cst_5 {dimension_numbers = #tpu.dot_dimension_numbers<[2], [2], [1], [1], [0, 0, 0, 1, 1, 1], [0], [0]>} : vector<32x16x8xbf16>, vector<32x16x8xbf16>, vector<32x16x16xf32> -> vector<32x16x16xf32>
    "tpu.trace_stop"() : () -> ()
    %41 = vector.shape_cast %40 : vector<32x16x16xf32> to vector<4x8x16x16xf32>
    %c0_6 = arith.constant 0 : index
    %c0_7 = arith.constant 0 : index
    %c0_8 = arith.constant 0 : index
    %42 = vector.load %arg4[%c0_6, %c0_7, %c0_8] : memref<4x16x16xf32, #tpu.memory_space<vmem>>, vector<4x16x16xf32>
    %43 = vector.shape_cast %42 : vector<4x16x16xf32> to vector<4x1x16x16xf32>
    %44 = vector.broadcast %43 : vector<4x1x16x16xf32> to vector<4x8x16x16xf32>
    %45 = arith.addf %41, %44 : vector<4x8x16x16xf32>
    %46 = vector.shape_cast %45 : vector<4x8x16x16xf32> to vector<32x16x16xf32>
    %cst_9 = arith.constant dense<0xFF800000> : vector<32x16xf32>
    %47 = vector.multi_reduction <maximumf>, %46, %cst_9 [2] : vector<32x16x16xf32> to vector<32x16xf32>
    %48 = vector.shape_cast %47 : vector<32x16xf32> to vector<32x16x1xf32>
    %49 = vector.broadcast %48 : vector<32x16x1xf32> to vector<32x16x16xf32>
    %50 = arith.subf %46, %49 : vector<32x16x16xf32>
    %51 = math.exp %50 : vector<32x16x16xf32>
    %cst_10 = arith.constant dense<0.000000e+00> : vector<32x16xf32>
    %52 = vector.multi_reduction <add>, %51, %cst_10 [2] : vector<32x16x16xf32> to vector<32x16xf32>
    %53 = vector.shape_cast %52 : vector<32x16xf32> to vector<32x16x1xf32>
    %54 = tpu.reciprocal %53 {approx = true} : vector<32x16x1xf32> -> vector<32x16x1xf32>
    %55 = vector.broadcast %54 : vector<32x16x1xf32> to vector<32x16x16xf32>
    %56 = arith.mulf %51, %55 : vector<32x16x16xf32>
    %57 = arith.truncf %56 : vector<32x16x16xf32> to vector<32x16x16xbf16>
    "tpu.trace_start"() <{level = 10 : i32, message = "bqk,bkd->bqd"}> : () -> ()
    %cst_11 = arith.constant dense<0.000000e+00> : vector<32x16x8xf32>
    %58 = tpu.matmul %57, %39, %cst_11 {dimension_numbers = #tpu.dot_dimension_numbers<[2], [1], [1], [2], [0, 0, 0, 1, 1, 2], [0], [0]>} : vector<32x16x16xbf16>, vector<32x16x8xbf16>, vector<32x16x8xf32> -> vector<32x16x8xf32>
    "tpu.trace_stop"() : () -> ()
    %59 = vector.extract_strided_slice %58 {offsets = [0, 0, 0], sizes = [8, 16, 8], strides = [1, 1, 1]} : vector<32x16x8xf32> to vector<8x16x8xf32>
    %60 = vector.shape_cast %59 : vector<8x16x8xf32> to vector<128x8xf32>
    %61 = arith.truncf %60 : vector<128x8xf32> to vector<128x8xbf16>
    %c0_12 = arith.constant 0 : index
    %c0_13 = arith.constant 0 : index
    %62 = vector.load %arg8[%c0_12, %c0_13] : memref<128x32xbf16, #tpu.memory_space<vmem>>, vector<128x8xbf16>
    tpu.vector_store %arg8[%c0_12, %c0_13], %61 {strides = array<i32>} : memref<128x32xbf16, #tpu.memory_space<vmem>>, vector<128x8xbf16>,
    %63 = vector.extract_strided_slice %58 {offsets = [8, 0, 0], sizes = [8, 16, 8], strides = [1, 1, 1]} : vector<32x16x8xf32> to vector<8x16x8xf32>
    %64 = vector.shape_cast %63 : vector<8x16x8xf32> to vector<128x8xf32>
    %65 = arith.truncf %64 : vector<128x8xf32> to vector<128x8xbf16>
    %c0_14 = arith.constant 0 : index
    %c8 = arith.constant 8 : index
    %66 = vector.load %arg8[%c0_14, %c8] : memref<128x32xbf16, #tpu.memory_space<vmem>>, vector<128x8xbf16>
    tpu.vector_store %arg8[%c0_14, %c8], %65 {strides = array<i32>} : memref<128x32xbf16, #tpu.memory_space<vmem>>, vector<128x8xbf16>,
    %67 = vector.extract_strided_slice %58 {offsets = [16, 0, 0], sizes = [8, 16, 8], strides = [1, 1, 1]} : vector<32x16x8xf32> to vector<8x16x8xf32>
    %68 = vector.shape_cast %67 : vector<8x16x8xf32> to vector<128x8xf32>
    %69 = arith.truncf %68 : vector<128x8xf32> to vector<128x8xbf16>
    %c0_15 = arith.constant 0 : index
    %c16 = arith.constant 16 : index
    %70 = vector.load %arg8[%c0_15, %c16] : memref<128x32xbf16, #tpu.memory_space<vmem>>, vector<128x8xbf16>
    tpu.vector_store %arg8[%c0_15, %c16], %69 {strides = array<i32>} : memref<128x32xbf16, #tpu.memory_space<vmem>>, vector<128x8xbf16>,
    %71 = vector.extract_strided_slice %58 {offsets = [24, 0, 0], sizes = [8, 16, 8], strides = [1, 1, 1]} : vector<32x16x8xf32> to vector<8x16x8xf32>
    %72 = vector.shape_cast %71 : vector<8x16x8xf32> to vector<128x8xf32>
    %73 = arith.truncf %72 : vector<128x8xf32> to vector<128x8xbf16>
    %c0_16 = arith.constant 0 : index
    %c24 = arith.constant 24 : index
    %74 = vector.load %arg8[%c0_16, %c24] : memref<128x32xbf16, #tpu.memory_space<vmem>>, vector<128x8xbf16>
    tpu.vector_store %arg8[%c0_16, %c24], %73 {strides = array<i32>} : memref<128x32xbf16, #tpu.memory_space<vmem>>, vector<128x8xbf16>,
    %c0_17 = arith.constant 0 : index
    %c0_18 = arith.constant 0 : index
    %75 = vector.load %arg8[%c0_17, %c0_18] : memref<128x32xbf16, #tpu.memory_space<vmem>>, vector<128x32xbf16>
    %c0_19 = arith.constant 0 : index
    %c0_20 = arith.constant 0 : index
    %76 = vector.load %arg5[%c0_19, %c0_20] : memref<32x32xbf16, #tpu.memory_space<vmem>>, vector<32x32xbf16>
    %cst_21 = arith.constant dense<0.000000e+00> : vector<128x32xf32>
    %77 = tpu.matmul %75, %76, %cst_21 {dimension_numbers = #tpu.dot_dimension_numbers<[1], [0], [0], [1], [0, 0, 1, 1], [], []>} : vector<128x32xbf16>, vector<32x32xbf16>, vector<128x32xf32> -> vector<128x32xf32>
    %c0_22 = arith.constant 0 : index
    %c0_23 = arith.constant 0 : index
    %78 = vector.load %arg6[%c0_22, %c0_23] : memref<1x32xf32, #tpu.memory_space<vmem>>, vector<1x32xf32>
    %79 = vector.broadcast %78 : vector<1x32xf32> to vector<128x32xf32>
    %80 = arith.addf %77, %79 : vector<128x32xf32>
    %c0_24 = arith.constant 0 : index
    %c0_25 = arith.constant 0 : index
    %81 = vector.load %arg7[%c0_24, %c0_25] : memref<128x32xf32, #tpu.memory_space<vmem>>, vector<128x32xf32>
    tpu.vector_store %arg7[%c0_24, %c0_25], %80 {strides = array<i32>} : memref<128x32xf32, #tpu.memory_space<vmem>>, vector<128x32xf32>,
    return
  }
  func.func @transform_0(%arg0: i32) -> (i32, i32) {
    %c0_i32 = arith.constant 0 : i32
    %c0_i32_0 = arith.constant 0 : i32
    return %arg0, %c0_i32 : i32, i32
  }
  func.func @transform_1(%arg0: i32) -> (i32, i32) {
    %c0_i32 = arith.constant 0 : i32
    %c0_i32_0 = arith.constant 0 : i32
    %c0_i32_1 = arith.constant 0 : i32
    return %c0_i32, %c0_i32_0 : i32, i32
  }
  func.func @transform_2(%arg0: i32) -> (i32, i32) {
    %c0_i32 = arith.constant 0 : i32
    %c0_i32_0 = arith.constant 0 : i32
    %c0_i32_1 = arith.constant 0 : i32
    return %c0_i32, %c0_i32_0 : i32, i32
  }
  func.func @transform_3(%arg0: i32) -> (i32, i32, i32) {
    %c0_i32 = arith.constant 0 : i32
    %c0_i32_0 = arith.constant 0 : i32
    %c0_i32_1 = arith.constant 0 : i32
    %c0_i32_2 = arith.constant 0 : i32
    return %c0_i32, %c0_i32_0, %c0_i32_1 : i32, i32, i32
  }
  func.func @transform_4(%arg0: i32) -> (i32, i32) {
    %c0_i32 = arith.constant 0 : i32
    %c0_i32_0 = arith.constant 0 : i32
    %c0_i32_1 = arith.constant 0 : i32
    return %c0_i32, %c0_i32_0 : i32, i32
  }
  func.func @transform_5(%arg0: i32) -> (i32, i32) {
    %c0_i32 = arith.constant 0 : i32
    %c0_i32_0 = arith.constant 0 : i32
    %c0_i32_1 = arith.constant 0 : i32
    return %c0_i32, %c0_i32_0 : i32, i32
  }
  func.func @transform_6(%arg0: i32) -> (i32, i32) {
    %c0_i32 = arith.constant 0 : i32
    %c0_i32_0 = arith.constant 0 : i32
    return %arg0, %c0_i32 : i32, i32
  }
}

</mosaic_0001>

<llo_original>
// kernel: tpu_custom_call.1
$region0: #{tpu_custom_call.1}
  #allocation0 [shape = 'u32[]', space=smem, size = 0x4, offset = 0x4, fixed_abs, tag = 'smem constant byte address 0x4 - core index']
  #allocation1 [shape = 'u32[72,128]{1,0:T(1,128)}', space=vmem, size = 0x9000, scoped, tag = 'internal scratch']
  #allocation2 [shape = 'bf16[128,32]{1,0:T(8,128)(2,1)}', space=vmem, size = 0x8000, scoped, tag = 'scratch operand']
  %s0 = inlined_call_operand.vmem [shape: f32[128,32], index: 0, kind: input, shape index: {}]
  %s1 = inlined_call_operand.vmem [shape: bf16[32,96], index: 1, kind: input, shape index: {}]
  %s2 = inlined_call_operand.vmem [shape: f32[1,96], index: 2, kind: input, shape index: {}]
  %s3 = inlined_call_operand.vmem [shape: f32[4,16,16], index: 3, kind: input, shape index: {}]
  %s4 = inlined_call_operand.vmem [shape: bf16[32,32], index: 4, kind: input, shape index: {}]
  %s5 = inlined_call_operand.vmem [shape: f32[1,32], index: 5, kind: input, shape index: {}]
  %s6 = inlined_call_operand.vmem [shape: f32[128,32], index: 6, kind: output, shape index: {}]
  %s7 = sld [smem:[#allocation0]]
  $region34: #{tpu_custom_call.1} parent=0
    _
  %s9 = ssub.s32 1, %s7
  %s10 = scalar_select 0, %s9, %s7
  // Predicated region
  $region2: #{tpu_custom_call.1} parent=0 // pred_check
    _
  $region3: #{tpu_custom_call.1} parent=0 // pred_check_branch
    %12 = sbr.rel (0) target = $region5
  $region4: #{tpu_custom_call.1} parent=0 // pred_region
    _
  $region5: #{tpu_custom_call.1} parent=0 // pred_fallthru
    _
  // Predicated region
  $region6: #{tpu_custom_call.1} parent=0 // pred_check
    _
  $region7: #{tpu_custom_call.1} parent=0 // pred_check_branch
    %14 = sbr.rel (0) target = $region9
  $region8: #{tpu_custom_call.1} parent=0 // pred_region
    _
  $region9: #{tpu_custom_call.1} parent=0 // pred_fallthru
    _
  // Predicated region
  $region10: #{tpu_custom_call.1} parent=0 // pred_check
    _
  $region11: #{tpu_custom_call.1} parent=0 // pred_check_branch
    %16 = sbr.rel (0) target = $region13
  $region12: #{tpu_custom_call.1} parent=0 // pred_region
    _
  $region13: #{tpu_custom_call.1} parent=0 // pred_fallthru
    _
  // Predicated region
  $region14: #{tpu_custom_call.1} parent=0 // pred_check
    _
  $region15: #{tpu_custom_call.1} parent=0 // pred_check_branch
    %18 = sbr.rel (0) target = $region17
  $region16: #{tpu_custom_call.1} parent=0 // pred_region
    _
  $region17: #{tpu_custom_call.1} parent=0 // pred_fallthru
    _
  // Predicated region
  $region18: #{tpu_custom_call.1} parent=0 // pred_check
    _
  $region19: #{tpu_custom_call.1} parent=0 // pred_check_branch
    %20 = sbr.rel (0) target = $region21
  $region20: #{tpu_custom_call.1} parent=0 // pred_region
    _
  $region21: #{tpu_custom_call.1} parent=0 // pred_fallthru
    _
  // Predicated region
  $region22: #{tpu_custom_call.1} parent=0 // pred_check
    _
  $region23: #{tpu_custom_call.1} parent=0 // pred_check_branch
    %22 = sbr.rel (0) target = $region25
  $region24: #{tpu_custom_call.1} parent=0 // pred_region
    _
  $region25: #{tpu_custom_call.1} parent=0 // pred_fallthru
    _
  %v24 = vld [vmem:[%s0] sm:$0xff]
  %v25 = vld [vmem:[%s0 + $0x8] sm:$0xff]
  %v26 = vld [vmem:[%s0 + $0x10] sm:$0xff]
  %v27 = vld [vmem:[%s0 + $0x18] sm:$0xff]
  %v28 = vld [vmem:[%s0 + $0x20] sm:$0xff]
  %v29 = vld [vmem:[%s0 + $0x28] sm:$0xff]
  %v30 = vld [vmem:[%s0 + $0x30] sm:$0xff]
  %v31 = vld [vmem:[%s0 + $0x38] sm:$0xff]
  %v32 = vld [vmem:[%s0 + $0x40] sm:$0xff]
  %v33 = vld [vmem:[%s0 + $0x48] sm:$0xff]
  %v34 = vld [vmem:[%s0 + $0x50] sm:$0xff]
  %v35 = vld [vmem:[%s0 + $0x58] sm:$0xff]
  %v36 = vld [vmem:[%s0 + $0x60] sm:$0xff]
  %v37 = vld [vmem:[%s0 + $0x68] sm:$0xff]
  %v38 = vld [vmem:[%s0 + $0x70] sm:$0xff]
  %v39 = vld [vmem:[%s0 + $0x78] sm:$0xff]
  %v40 = vpack.c.bf16 %v25, %v24
  %v41 = vpack.c.bf16 %v27, %v26
  %v42 = vpack.c.bf16 %v29, %v28
  %v43 = vpack.c.bf16 %v31, %v30
  %v44 = vpack.c.bf16 %v33, %v32
  %v45 = vpack.c.bf16 %v35, %v34
  %v46 = vpack.c.bf16 %v37, %v36
  %v47 = vpack.c.bf16 %v39, %v38
  %v48 = vld [vmem:[%s1] sm:$0xf]
  %v49 = vld [vmem:[%s1 + $0x4] sm:$0xf]
  %v50 = vld [vmem:[%s1 + $0x8] sm:$0xf]
  %v51 = vld [vmem:[%s1 + $0xc] sm:$0xf]
  %v52 = vld [vmem:[%s2] sm:$0x1]
  %v54 = vperm.slane %v52, 0
  %v60 = vunpack.c.l.b16 %v48
  %v61 = vunpack.c.l.b16 %v49
  %v62 = vunpack.c.l.b16 %v50
  %v63 = vunpack.c.l.b16 %v51
  %v64 = vpack.c.b16 %v61, %v60
  %v65 = vpack.c.b16 %v63, %v62
  %vm68 = vcmask 261120
  %v70 = vsel %vm68, %v40, 0
  %v73 = vsel %vm68, %v41, 0
  %v76 = vsel %vm68, %v42, 0
  %v79 = vsel %vm68, %v43, 0
  %v82 = vsel %vm68, %v44, 0
  %v85 = vsel %vm68, %v45, 0
  %v88 = vsel %vm68, %v46, 0
  %v91 = vsel %vm68, %v47, 0
  %93 = vmatpush.bf16.msra.mxu0 0
  %94 = vmatpush.bf16.msra.mxu0 0
  %95 = vmatpush.bf16.msra.mxu0 0
  %96 = vmatpush.bf16.msra.mxu0 0
  %97 = vmatpush.bf16.msra.mxu0 0
  %98 = vmatpush.bf16.msra.mxu0 0
  %99 = vmatpush.bf16.msra.mxu0 %v65
  %100 = vmatpush.bf16.msra.mxu0 %v64
  %101 = vmatmul.bf16.gmra.mxu0 %v70
  %v102 = vpop.f32.mrf.mxu0
  %v103 = vadd.f32 %v54, %v102
  %v104 = vpop.f32.mrf.mxu0
  %v105 = vadd.f32 %v54, %v104
  %106 = vmatmul.bf16.gmra.mxu0 %v73
  %v107 = vpop.f32.mrf.mxu0
  %v108 = vadd.f32 %v54, %v107
  %v109 = vpop.f32.mrf.mxu0
  %v110 = vadd.f32 %v54, %v109
  %111 = vmatmul.bf16.gmra.mxu0 %v76
  %v112 = vpop.f32.mrf.mxu0
  %v113 = vadd.f32 %v54, %v112
  %v114 = vpop.f32.mrf.mxu0
  %v115 = vadd.f32 %v54, %v114
  %116 = vmatmul.bf16.gmra.mxu0 %v79
  %v117 = vpop.f32.mrf.mxu0
  %v118 = vadd.f32 %v54, %v117
  %v119 = vpop.f32.mrf.mxu0
  %v120 = vadd.f32 %v54, %v119
  %121 = vmatmul.bf16.gmra.mxu0 %v82
  %v122 = vpop.f32.mrf.mxu0
  %v123 = vadd.f32 %v54, %v122
  %v124 = vpop.f32.mrf.mxu0
  %v125 = vadd.f32 %v54, %v124
  %126 = vmatmul.bf16.gmra.mxu0 %v85
  %v127 = vpop.f32.mrf.mxu0
  %v128 = vadd.f32 %v54, %v127
  %v129 = vpop.f32.mrf.mxu0
  %v130 = vadd.f32 %v54, %v129
  %131 = vmatmul.bf16.gmra.mxu0 %v88
  %v132 = vpop.f32.mrf.mxu0
  %v133 = vadd.f32 %v54, %v132
  %v134 = vpop.f32.mrf.mxu0
  %v135 = vadd.f32 %v54, %v134
  %136 = vmatmul.bf16.gmra.mxu0 %v91
  %v137 = vpop.f32.mrf.mxu0
  %v138 = vadd.f32 %v54, %v137
  %v139 = vpop.f32.mrf.mxu0
  %v140 = vadd.f32 %v54, %v139
  %141 = vdwg.mxu0
  %v142 = vpack.c.bf16 %v103, %v103
  %v143 = vpack.c.bf16 %v105, %v105
  %v144 = vpack.c.bf16 %v108, %v108
  %v145 = vpack.c.bf16 %v110, %v110
  %v146 = vpack.c.bf16 %v113, %v113
  %v147 = vpack.c.bf16 %v115, %v115
  %v148 = vpack.c.bf16 %v118, %v118
  %v149 = vpack.c.bf16 %v120, %v120
  %v150 = vpack.c.bf16 %v123, %v123
  %v151 = vpack.c.bf16 %v125, %v125
  %v152 = vpack.c.bf16 %v128, %v128
  %v153 = vpack.c.bf16 %v130, %v130
  %v154 = vpack.c.bf16 %v133, %v133
  %v155 = vpack.c.bf16 %v135, %v135
  %v156 = vpack.c.bf16 %v138, %v138
  %v157 = vpack.c.bf16 %v140, %v140
  %174 = vrot.lane.b32.xlu0 %v142, 120
  %v175 = vpop.permute.xlu0 %174
  %176 = vrot.lane.b32.xlu0 %v143, 120
  %v177 = vpop.permute.xlu0 %176
  %178 = vrot.lane.b32.xlu0 %v144, 120
  %v179 = vpop.permute.xlu0 %178
  %180 = vrot.lane.b32.xlu0 %v145, 120
  %v181 = vpop.permute.xlu0 %180
  %182 = vrot.lane.b32.xlu0 %v146, 120
  %v183 = vpop.permute.xlu0 %182
  %184 = vrot.lane.b32.xlu0 %v147, 120
  %v185 = vpop.permute.xlu0 %184
  %186 = vrot.lane.b32.xlu0 %v148, 120
  %v187 = vpop.permute.xlu0 %186
  %188 = vrot.lane.b32.xlu0 %v149, 120
  %v189 = vpop.permute.xlu0 %188
  %190 = vrot.lane.b32.xlu0 %v150, 120
  %v191 = vpop.permute.xlu0 %190
  %192 = vrot.lane.b32.xlu0 %v151, 120
  %v193 = vpop.permute.xlu0 %192
  %194 = vrot.lane.b32.xlu0 %v152, 120
  %v195 = vpop.permute.xlu0 %194
  %196 = vrot.lane.b32.xlu0 %v153, 120
  %v197 = vpop.permute.xlu0 %196
  %198 = vrot.lane.b32.xlu0 %v154, 120
  %v199 = vpop.permute.xlu0 %198
  %200 = vrot.lane.b32.xlu0 %v155, 120
  %v201 = vpop.permute.xlu0 %200
  %202 = vrot.lane.b32.xlu0 %v156, 120
  %v203 = vpop.permute.xlu0 %202
  %204 = vrot.lane.b32.xlu0 %v157, 120
  %v205 = vpop.permute.xlu0 %204
  %206 = vrot.lane.b32.xlu0 %v142, 112
  %v207 = vpop.permute.xlu0 %206
  %208 = vrot.lane.b32.xlu0 %v143, 112
  %v209 = vpop.permute.xlu0 %208
  %210 = vrot.lane.b32.xlu0 %v144, 112
  %v211 = vpop.permute.xlu0 %210
  %212 = vrot.lane.b32.xlu0 %v145, 112
  %v213 = vpop.permute.xlu0 %212
  %214 = vrot.lane.b32.xlu0 %v146, 112
  %v215 = vpop.permute.xlu0 %214
  %216 = vrot.lane.b32.xlu0 %v147, 112
  %v217 = vpop.permute.xlu0 %216
  %218 = vrot.lane.b32.xlu0 %v148, 112
  %v219 = vpop.permute.xlu0 %218
  %220 = vrot.lane.b32.xlu0 %v149, 112
  %v221 = vpop.permute.xlu0 %220
  %222 = vrot.lane.b32.xlu0 %v150, 112
  %v223 = vpop.permute.xlu0 %222
  %224 = vrot.lane.b32.xlu0 %v151, 112
  %v225 = vpop.permute.xlu0 %224
  %226 = vrot.lane.b32.xlu0 %v152, 112
  %v227 = vpop.permute.xlu0 %226
  %228 = vrot.lane.b32.xlu0 %v153, 112
  %v229 = vpop.permute.xlu0 %228
  %230 = vrot.lane.b32.xlu0 %v154, 112
  %v231 = vpop.permute.xlu0 %230
  %232 = vrot.lane.b32.xlu0 %v155, 112
  %v233 = vpop.permute.xlu0 %232
  %234 = vrot.lane.b32.xlu0 %v156, 112
  %v235 = vpop.permute.xlu0 %234
  %236 = vrot.lane.b32.xlu0 %v157, 112
  %v237 = vpop.permute.xlu0 %236
  %238 = vrot.lane.b32.xlu0 %v142, 104
  %v239 = vpop.permute.xlu0 %238
  %240 = vrot.lane.b32.xlu0 %v143, 104
  %v241 = vpop.permute.xlu0 %240
  %242 = vrot.lane.b32.xlu0 %v144, 104
  %v243 = vpop.permute.xlu0 %242
  %244 = vrot.lane.b32.xlu0 %v145, 104
  %v245 = vpop.permute.xlu0 %244
  %246 = vrot.lane.b32.xlu0 %v146, 104
  %v247 = vpop.permute.xlu0 %246
  %248 = vrot.lane.b32.xlu0 %v147, 104
  %v249 = vpop.permute.xlu0 %248
  %250 = vrot.lane.b32.xlu0 %v148, 104
  %v251 = vpop.permute.xlu0 %250
  %252 = vrot.lane.b32.xlu0 %v149, 104
  %v253 = vpop.permute.xlu0 %252
  %254 = vrot.lane.b32.xlu0 %v150, 104
  %v255 = vpop.permute.xlu0 %254
  %256 = vrot.lane.b32.xlu0 %v151, 104
  %v257 = vpop.permute.xlu0 %256
  %258 = vrot.lane.b32.xlu0 %v152, 104
  %v259 = vpop.permute.xlu0 %258
  %260 = vrot.lane.b32.xlu0 %v153, 104
  %v261 = vpop.permute.xlu0 %260
  %262 = vrot.lane.b32.xlu0 %v154, 104
  %v263 = vpop.permute.xlu0 %262
  %264 = vrot.lane.b32.xlu0 %v155, 104
  %v265 = vpop.permute.xlu0 %264
  %266 = vrot.lane.b32.xlu0 %v156, 104
  %v267 = vpop.permute.xlu0 %266
  %268 = vrot.lane.b32.xlu0 %v157, 104
  %v269 = vpop.permute.xlu0 %268
  %v270 = vunpack.c.l.b16 %v142
  %v271 = vunpack.c.l.b16 %v143
  %v272 = vpack.c.b16 %v271, %v270
  %273 = vrot.lane.b32.xlu0 %v272, 96
  %v274 = vpop.permute.xlu0 %273
  %vm275 = vcmask 64512
  %v277 = vsel %vm275, %v272, 0
  %v280 = vsel %vm275, %v274, 0
  %282 = vmatpush.bf16.xpose.msra.mxu0 0
  %283 = vmatpush.bf16.xpose.msra.mxu0 0
  %284 = vmatpush.bf16.xpose.msra.mxu0 0
  %285 = vmatpush.bf16.xpose.msra.mxu0 0
  %286 = vmatpush.bf16.xpose.msra.mxu0 0
  %287 = vmatpush.bf16.xpose.msra.mxu0 0
  %288 = vmatpush.bf16.xpose.msra.mxu0 0
  %289 = vmatpush.bf16.xpose.msra.mxu0 %v280
  %290 = vmatmul.bf16.gmra.mxu0 %v277
  %v291 = vpop.f32.mrf.mxu0
  %v292 = vadd.f32 0.0, %v291
  %v293 = vpop.f32.mrf.mxu0
  %v294 = vadd.f32 0.0, %v293
  %295 = vdwg.mxu0
  %v296 = vunpack.c.l.b16 %v144
  %v297 = vunpack.c.l.b16 %v145
  %v298 = vpack.c.b16 %v297, %v296
  %299 = vrot.lane.b32.xlu0 %v298, 96
  %v300 = vpop.permute.xlu0 %299
  %v302 = vsel %vm275, %v298, 0
  %v305 = vsel %vm275, %v300, 0
  %307 = vmatpush.bf16.xpose.msra.mxu0 0
  %308 = vmatpush.bf16.xpose.msra.mxu0 0
  %309 = vmatpush.bf16.xpose.msra.mxu0 0
  %310 = vmatpush.bf16.xpose.msra.mxu0 0
  %311 = vmatpush.bf16.xpose.msra.mxu0 0
  %312 = vmatpush.bf16.xpose.msra.mxu0 0
  %313 = vmatpush.bf16.xpose.msra.mxu0 0
  %314 = vmatpush.bf16.xpose.msra.mxu0 %v305
  %315 = vmatmul.bf16.gmra.mxu0 %v302
  %v316 = vpop.f32.mrf.mxu0
  %v317 = vadd.f32 0.0, %v316
  %v318 = vpop.f32.mrf.mxu0
  %v319 = vadd.f32 0.0, %v318
  %320 = vdwg.mxu0
  %v321 = vunpack.c.l.b16 %v146
  %v322 = vunpack.c.l.b16 %v147
  %v323 = vpack.c.b16 %v322, %v321
  %324 = vrot.lane.b32.xlu0 %v323, 96
  %v325 = vpop.permute.xlu0 %324
  %v327 = vsel %vm275, %v323, 0
  %v330 = vsel %vm275, %v325, 0
  %332 = vmatpush.bf16.xpose.msra.mxu0 0
  %333 = vmatpush.bf16.xpose.msra.mxu0 0
  %334 = vmatpush.bf16.xpose.msra.mxu0 0
  %335 = vmatpush.bf16.xpose.msra.mxu0 0
  %336 = vmatpush.bf16.xpose.msra.mxu0 0
  %337 = vmatpush.bf16.xpose.msra.mxu0 0
  %338 = vmatpush.bf16.xpose.msra.mxu0 0
  %339 = vmatpush.bf16.xpose.msra.mxu0 %v330
  %340 = vmatmul.bf16.gmra.mxu0 %v327
  %v341 = vpop.f32.mrf.mxu0
  %v342 = vadd.f32 0.0, %v341
  %v343 = vpop.f32.mrf.mxu0
  %v344 = vadd.f32 0.0, %v343
  %345 = vdwg.mxu0
  %v346 = vunpack.c.l.b16 %v148
  %v347 = vunpack.c.l.b16 %v149
  %v348 = vpack.c.b16 %v347, %v346
  %349 = vrot.lane.b32.xlu0 %v348, 96
  %v350 = vpop.permute.xlu0 %349
  %v352 = vsel %vm275, %v348, 0
  %v355 = vsel %vm275, %v350, 0
  %357 = vmatpush.bf16.xpose.msra.mxu0 0
  %358 = vmatpush.bf16.xpose.msra.mxu0 0
  %359 = vmatpush.bf16.xpose.msra.mxu0 0
  %360 = vmatpush.bf16.xpose.msra.mxu0 0
  %361 = vmatpush.bf16.xpose.msra.mxu0 0
  %362 = vmatpush.bf16.xpose.msra.mxu0 0
  %363 = vmatpush.bf16.xpose.msra.mxu0 0
  %364 = vmatpush.bf16.xpose.msra.mxu0 %v355
  %365 = vmatmul.bf16.gmra.mxu0 %v352
  %v366 = vpop.f32.mrf.mxu0
  %v367 = vadd.f32 0.0, %v366
  %v368 = vpop.f32.mrf.mxu0
  %v369 = vadd.f32 0.0, %v368
  %370 = vdwg.mxu0
  %v371 = vunpack.c.l.b16 %v150
  %v372 = vunpack.c.l.b16 %v151
  %v373 = vpack.c.b16 %v372, %v371
  %374 = vrot.lane.b32.xlu0 %v373, 96
  %v375 = vpop.permute.xlu0 %374
  %v377 = vsel %vm275, %v373, 0
  %v380 = vsel %vm275, %v375, 0
  %382 = vmatpush.bf16.xpose.msra.mxu0 0
  %383 = vmatpush.bf16.xpose.msra.mxu0 0
  %384 = vmatpush.bf16.xpose.msra.mxu0 0
  %385 = vmatpush.bf16.xpose.msra.mxu0 0
  %386 = vmatpush.bf16.xpose.msra.mxu0 0
  %387 = vmatpush.bf16.xpose.msra.mxu0 0
  %388 = vmatpush.bf16.xpose.msra.mxu0 0
  %389 = vmatpush.bf16.xpose.msra.mxu0 %v380
  %390 = vmatmul.bf16.gmra.mxu0 %v377
  %v391 = vpop.f32.mrf.mxu0
  %v392 = vadd.f32 0.0, %v391
  %v393 = vpop.f32.mrf.mxu0
  %v394 = vadd.f32 0.0, %v393
  %395 = vdwg.mxu0
  %v396 = vunpack.c.l.b16 %v152
  %v397 = vunpack.c.l.b16 %v153
  %v398 = vpack.c.b16 %v397, %v396
  %399 = vrot.lane.b32.xlu0 %v398, 96
  %v400 = vpop.permute.xlu0 %399
  %v402 = vsel %vm275, %v398, 0
  %v405 = vsel %vm275, %v400, 0
  %407 = vmatpush.bf16.xpose.msra.mxu0 0
  %408 = vmatpush.bf16.xpose.msra.mxu0 0
  %409 = vmatpush.bf16.xpose.msra.mxu0 0
  %410 = vmatpush.bf16.xpose.msra.mxu0 0
  %411 = vmatpush.bf16.xpose.msra.mxu0 0
  %412 = vmatpush.bf16.xpose.msra.mxu0 0
  %413 = vmatpush.bf16.xpose.msra.mxu0 0
  %414 = vmatpush.bf16.xpose.msra.mxu0 %v405
  %415 = vmatmul.bf16.gmra.mxu0 %v402
  %v416 = vpop.f32.mrf.mxu0
  %v417 = vadd.f32 0.0, %v416
  %v418 = vpop.f32.mrf.mxu0
  %v419 = vadd.f32 0.0, %v418
  %420 = vdwg.mxu0
  %v421 = vunpack.c.l.b16 %v154
  %v422 = vunpack.c.l.b16 %v155
  %v423 = vpack.c.b16 %v422, %v421
  %424 = vrot.lane.b32.xlu0 %v423, 96
  %v425 = vpop.permute.xlu0 %424
  %v427 = vsel %vm275, %v423, 0
  %v430 = vsel %vm275, %v425, 0
  %432 = vmatpush.bf16.xpose.msra.mxu0 0
  %433 = vmatpush.bf16.xpose.msra.mxu0 0
  %434 = vmatpush.bf16.xpose.msra.mxu0 0
  %435 = vmatpush.bf16.xpose.msra.mxu0 0
  %436 = vmatpush.bf16.xpose.msra.mxu0 0
  %437 = vmatpush.bf16.xpose.msra.mxu0 0
  %438 = vmatpush.bf16.xpose.msra.mxu0 0
  %439 = vmatpush.bf16.xpose.msra.mxu0 %v430
  %440 = vmatmul.bf16.gmra.mxu0 %v427
  %v441 = vpop.f32.mrf.mxu0
  %v442 = vadd.f32 0.0, %v441
  %v443 = vpop.f32.mrf.mxu0
  %v444 = vadd.f32 0.0, %v443
  %445 = vdwg.mxu0
  %v446 = vunpack.c.l.b16 %v156
  %v447 = vunpack.c.l.b16 %v157
  %v448 = vpack.c.b16 %v447, %v446
  %449 = vrot.lane.b32.xlu0 %v448, 96
  %v450 = vpop.permute.xlu0 %449
  %v452 = vsel %vm275, %v448, 0
  %v455 = vsel %vm275, %v450, 0
  %457 = vmatpush.bf16.xpose.msra.mxu0 0
  %458 = vmatpush.bf16.xpose.msra.mxu0 0
  %459 = vmatpush.bf16.xpose.msra.mxu0 0
  %460 = vmatpush.bf16.xpose.msra.mxu0 0
  %461 = vmatpush.bf16.xpose.msra.mxu0 0
  %462 = vmatpush.bf16.xpose.msra.mxu0 0
  %463 = vmatpush.bf16.xpose.msra.mxu0 0
  %464 = vmatpush.bf16.xpose.msra.mxu0 %v455
  %465 = vmatmul.bf16.gmra.mxu0 %v452
  %v466 = vpop.f32.mrf.mxu0
  %v467 = vadd.f32 0.0, %v466
  %v468 = vpop.f32.mrf.mxu0
  %v469 = vadd.f32 0.0, %v468
  %470 = vdwg.mxu0
  %v471 = vunpack.c.l.b16 %v175
  %v472 = vunpack.c.l.b16 %v177
  %v473 = vpack.c.b16 %v472, %v471
  %474 = vrot.lane.b32.xlu0 %v473, 96
  %v475 = vpop.permute.xlu0 %474
  %v477 = vsel %vm275, %v473, 0
  %v480 = vsel %vm275, %v475, 0
  %482 = vmatpush.bf16.xpose.msra.mxu0 0
  %483 = vmatpush.bf16.xpose.msra.mxu0 0
  %484 = vmatpush.bf16.xpose.msra.mxu0 0
  %485 = vmatpush.bf16.xpose.msra.mxu0 0
  %486 = vmatpush.bf16.xpose.msra.mxu0 0
  %487 = vmatpush.bf16.xpose.msra.mxu0 0
  %488 = vmatpush.bf16.xpose.msra.mxu0 0
  %489 = vmatpush.bf16.xpose.msra.mxu0 %v480
  %490 = vmatmul.bf16.gmra.mxu0 %v477
  %v491 = vpop.f32.mrf.mxu0
  %v492 = vadd.f32 0.0, %v491
  %v493 = vpop.f32.mrf.mxu0
  %v494 = vadd.f32 0.0, %v493
  %495 = vdwg.mxu0
  %v496 = vunpack.c.l.b16 %v179
  %v497 = vunpack.c.l.b16 %v181
  %v498 = vpack.c.b16 %v497, %v496
  %499 = vrot.lane.b32.xlu0 %v498, 96
  %v500 = vpop.permute.xlu0 %499
  %v502 = vsel %vm275, %v498, 0
  %v505 = vsel %vm275, %v500, 0
  %507 = vmatpush.bf16.xpose.msra.mxu0 0
  %508 = vmatpush.bf16.xpose.msra.mxu0 0
  %509 = vmatpush.bf16.xpose.msra.mxu0 0
  %510 = vmatpush.bf16.xpose.msra.mxu0 0
  %511 = vmatpush.bf16.xpose.msra.mxu0 0
  %512 = vmatpush.bf16.xpose.msra.mxu0 0
  %513 = vmatpush.bf16.xpose.msra.mxu0 0
  %514 = vmatpush.bf16.xpose.msra.mxu0 %v505
  %515 = vmatmul.bf16.gmra.mxu0 %v502
  %v516 = vpop.f32.mrf.mxu0
  %v517 = vadd.f32 0.0, %v516
  %v518 = vpop.f32.mrf.mxu0
  %v519 = vadd.f32 0.0, %v518
  %520 = vdwg.mxu0
  %v521 = vunpack.c.l.b16 %v183
  %v522 = vunpack.c.l.b16 %v185
  %v523 = vpack.c.b16 %v522, %v521
  %524 = vrot.lane.b32.xlu0 %v523, 96
  %v525 = vpop.permute.xlu0 %524
  %v527 = vsel %vm275, %v523, 0
  %v530 = vsel %vm275, %v525, 0
  %532 = vmatpush.bf16.xpose.msra.mxu0 0
  %533 = vmatpush.bf16.xpose.msra.mxu0 0
  %534 = vmatpush.bf16.xpose.msra.mxu0 0
  %535 = vmatpush.bf16.xpose.msra.mxu0 0
  %536 = vmatpush.bf16.xpose.msra.mxu0 0
  %537 = vmatpush.bf16.xpose.msra.mxu0 0
  %538 = vmatpush.bf16.xpose.msra.mxu0 0
  %539 = vmatpush.bf16.xpose.msra.mxu0 %v530
  %540 = vmatmul.bf16.gmra.mxu0 %v527
  %v541 = vpop.f32.mrf.mxu0
  %v542 = vadd.f32 0.0, %v541
  %v543 = vpop.f32.mrf.mxu0
  %v544 = vadd.f32 0.0, %v543
  %545 = vdwg.mxu0
  %v546 = vunpack.c.l.b16 %v187
  %v547 = vunpack.c.l.b16 %v189
  %v548 = vpack.c.b16 %v547, %v546
  %549 = vrot.lane.b32.xlu0 %v548, 96
  %v550 = vpop.permute.xlu0 %549
  %v552 = vsel %vm275, %v548, 0
  %v555 = vsel %vm275, %v550, 0
  %557 = vmatpush.bf16.xpose.msra.mxu0 0
  %558 = vmatpush.bf16.xpose.msra.mxu0 0
  %559 = vmatpush.bf16.xpose.msra.mxu0 0
  %560 = vmatpush.bf16.xpose.msra.mxu0 0
  %561 = vmatpush.bf16.xpose.msra.mxu0 0
  %562 = vmatpush.bf16.xpose.msra.mxu0 0
  %563 = vmatpush.bf16.xpose.msra.mxu0 0
  %564 = vmatpush.bf16.xpose.msra.mxu0 %v555
  %565 = vmatmul.bf16.gmra.mxu0 %v552
  %v566 = vpop.f32.mrf.mxu0
  %v567 = vadd.f32 0.0, %v566
  %v568 = vpop.f32.mrf.mxu0
  %v569 = vadd.f32 0.0, %v568
  %570 = vdwg.mxu0
  %v571 = vunpack.c.l.b16 %v191
  %v572 = vunpack.c.l.b16 %v193
  %v573 = vpack.c.b16 %v572, %v571
  %574 = vrot.lane.b32.xlu0 %v573, 96
  %v575 = vpop.permute.xlu0 %574
  %v577 = vsel %vm275, %v573, 0
  %v580 = vsel %vm275, %v575, 0
  %582 = vmatpush.bf16.xpose.msra.mxu0 0
  %583 = vmatpush.bf16.xpose.msra.mxu0 0
  %584 = vmatpush.bf16.xpose.msra.mxu0 0
  %585 = vmatpush.bf16.xpose.msra.mxu0 0
  %586 = vmatpush.bf16.xpose.msra.mxu0 0
  %587 = vmatpush.bf16.xpose.msra.mxu0 0
  %588 = vmatpush.bf16.xpose.msra.mxu0 0
  %589 = vmatpush.bf16.xpose.msra.mxu0 %v580
  %590 = vmatmul.bf16.gmra.mxu0 %v577
  %v591 = vpop.f32.mrf.mxu0
  %v592 = vadd.f32 0.0, %v591
  %v593 = vpop.f32.mrf.mxu0
  %v594 = vadd.f32 0.0, %v593
  %595 = vdwg.mxu0
  %v596 = vunpack.c.l.b16 %v195
  %v597 = vunpack.c.l.b16 %v197
  %v598 = vpack.c.b16 %v597, %v596
  %599 = vrot.lane.b32.xlu0 %v598, 96
  %v600 = vpop.permute.xlu0 %599
  %v602 = vsel %vm275, %v598, 0
  %v605 = vsel %vm275, %v600, 0
  %607 = vmatpush.bf16.xpose.msra.mxu0 0
  %608 = vmatpush.bf16.xpose.msra.mxu0 0
  %609 = vmatpush.bf16.xpose.msra.mxu0 0
  %610 = vmatpush.bf16.xpose.msra.mxu0 0
  %611 = vmatpush.bf16.xpose.msra.mxu0 0
  %612 = vmatpush.bf16.xpose.msra.mxu0 0
  %613 = vmatpush.bf16.xpose.msra.mxu0 0
  %614 = vmatpush.bf16.xpose.msra.mxu0 %v605
  %615 = vmatmul.bf16.gmra.mxu0 %v602
  %v616 = vpop.f32.mrf.mxu0
  %v617 = vadd.f32 0.0, %v616
  %v618 = vpop.f32.mrf.mxu0
  %v619 = vadd.f32 0.0, %v618
  %620 = vdwg.mxu0
  %v621 = vunpack.c.l.b16 %v199
  %v622 = vunpack.c.l.b16 %v201
  %v623 = vpack.c.b16 %v622, %v621
  %624 = vrot.lane.b32.xlu0 %v623, 96
  %v625 = vpop.permute.xlu0 %624
  %v627 = vsel %vm275, %v623, 0
  %v630 = vsel %vm275, %v625, 0
  %632 = vmatpush.bf16.xpose.msra.mxu0 0
  %633 = vmatpush.bf16.xpose.msra.mxu0 0
  %634 = vmatpush.bf16.xpose.msra.mxu0 0
  %635 = vmatpush.bf16.xpose.msra.mxu0 0
  %636 = vmatpush.bf16.xpose.msra.mxu0 0
  %637 = vmatpush.bf16.xpose.msra.mxu0 0
  %638 = vmatpush.bf16.xpose.msra.mxu0 0
  %639 = vmatpush.bf16.xpose.msra.mxu0 %v630
  %640 = vmatmul.bf16.gmra.mxu0 %v627
  %v641 = vpop.f32.mrf.mxu0
  %v642 = vadd.f32 0.0, %v641
  %v643 = vpop.f32.mrf.mxu0
  %v644 = vadd.f32 0.0, %v643
  %645 = vdwg.mxu0
  %v646 = vunpack.c.l.b16 %v203
  %v647 = vunpack.c.l.b16 %v205
  %v648 = vpack.c.b16 %v647, %v646
  %649 = vrot.lane.b32.xlu0 %v648, 96
  %v650 = vpop.permute.xlu0 %649
  %v652 = vsel %vm275, %v648, 0
  %v655 = vsel %vm275, %v650, 0
  %657 = vmatpush.bf16.xpose.msra.mxu0 0
  %658 = vmatpush.bf16.xpose.msra.mxu0 0
  %659 = vmatpush.bf16.xpose.msra.mxu0 0
  %660 = vmatpush.bf16.xpose.msra.mxu0 0
  %661 = vmatpush.bf16.xpose.msra.mxu0 0
  %662 = vmatpush.bf16.xpose.msra.mxu0 0
  %663 = vmatpush.bf16.xpose.msra.mxu0 0
  %664 = vmatpush.bf16.xpose.msra.mxu0 %v655
  %665 = vmatmul.bf16.gmra.mxu0 %v652
  %v666 = vpop.f32.mrf.mxu0
  %v667 = vadd.f32 0.0, %v666
  %v668 = vpop.f32.mrf.mxu0
  %v669 = vadd.f32 0.0, %v668
  %670 = vdwg.mxu0
  %v671 = vunpack.c.l.b16 %v207
  %v672 = vunpack.c.l.b16 %v209
  %v673 = vpack.c.b16 %v672, %v671
  %674 = vrot.lane.b32.xlu0 %v673, 96
  %v675 = vpop.permute.xlu0 %674
  %v677 = vsel %vm275, %v673, 0
  %v680 = vsel %vm275, %v675, 0
  %682 = vmatpush.bf16.xpose.msra.mxu0 0
  %683 = vmatpush.bf16.xpose.msra.mxu0 0
  %684 = vmatpush.bf16.xpose.msra.mxu0 0
  %685 = vmatpush.bf16.xpose.msra.mxu0 0
  %686 = vmatpush.bf16.xpose.msra.mxu0 0
  %687 = vmatpush.bf16.xpose.msra.mxu0 0
  %688 = vmatpush.bf16.xpose.msra.mxu0 0
  %689 = vmatpush.bf16.xpose.msra.mxu0 %v680
  %690 = vmatmul.bf16.gmra.mxu0 %v677
  %v691 = vpop.f32.mrf.mxu0
  %v692 = vadd.f32 0.0, %v691
  %v693 = vpop.f32.mrf.mxu0
  %v694 = vadd.f32 0.0, %v693
  %695 = vdwg.mxu0
  %v696 = vunpack.c.l.b16 %v211
  %v697 = vunpack.c.l.b16 %v213
  %v698 = vpack.c.b16 %v697, %v696
  %699 = vrot.lane.b32.xlu0 %v698, 96
  %v700 = vpop.permute.xlu0 %699
  %v702 = vsel %vm275, %v698, 0
  %v705 = vsel %vm275, %v700, 0
  %707 = vmatpush.bf16.xpose.msra.mxu0 0
  %708 = vmatpush.bf16.xpose.msra.mxu0 0
  %709 = vmatpush.bf16.xpose.msra.mxu0 0
  %710 = vmatpush.bf16.xpose.msra.mxu0 0
  %711 = vmatpush.bf16.xpose.msra.mxu0 0
  %712 = vmatpush.bf16.xpose.msra.mxu0 0
  %713 = vmatpush.bf16.xpose.msra.mxu0 0
  %714 = vmatpush.bf16.xpose.msra.mxu0 %v705
  %715 = vmatmul.bf16.gmra.mxu0 %v702
  %v716 = vpop.f32.mrf.mxu0
  %v717 = vadd.f32 0.0, %v716
  %v718 = vpop.f32.mrf.mxu0
  %v719 = vadd.f32 0.0, %v718
  %720 = vdwg.mxu0
  %v721 = vunpack.c.l.b16 %v215
  %v722 = vunpack.c.l.b16 %v217
  %v723 = vpack.c.b16 %v722, %v721
  %724 = vrot.lane.b32.xlu0 %v723, 96
  %v725 = vpop.permute.xlu0 %724
  %v727 = vsel %vm275, %v723, 0
  %v730 = vsel %vm275, %v725, 0
  %732 = vmatpush.bf16.xpose.msra.mxu0 0
  %733 = vmatpush.bf16.xpose.msra.mxu0 0
  %734 = vmatpush.bf16.xpose.msra.mxu0 0
  %735 = vmatpush.bf16.xpose.msra.mxu0 0
  %736 = vmatpush.bf16.xpose.msra.mxu0 0
  %737 = vmatpush.bf16.xpose.msra.mxu0 0
  %738 = vmatpush.bf16.xpose.msra.mxu0 0
  %739 = vmatpush.bf16.xpose.msra.mxu0 %v730
  %740 = vmatmul.bf16.gmra.mxu0 %v727
  %v741 = vpop.f32.mrf.mxu0
  %v742 = vadd.f32 0.0, %v741
  %v743 = vpop.f32.mrf.mxu0
  %v744 = vadd.f32 0.0, %v743
  %745 = vdwg.mxu0
  %v746 = vunpack.c.l.b16 %v219
  %v747 = vunpack.c.l.b16 %v221
  %v748 = vpack.c.b16 %v747, %v746
  %749 = vrot.lane.b32.xlu0 %v748, 96
  %v750 = vpop.permute.xlu0 %749
  %v752 = vsel %vm275, %v748, 0
  %v755 = vsel %vm275, %v750, 0
  %757 = vmatpush.bf16.xpose.msra.mxu0 0
  %758 = vmatpush.bf16.xpose.msra.mxu0 0
  %759 = vmatpush.bf16.xpose.msra.mxu0 0
  %760 = vmatpush.bf16.xpose.msra.mxu0 0
  %761 = vmatpush.bf16.xpose.msra.mxu0 0
  %762 = vmatpush.bf16.xpose.msra.mxu0 0
  %763 = vmatpush.bf16.xpose.msra.mxu0 0
  %764 = vmatpush.bf16.xpose.msra.mxu0 %v755
  %765 = vmatmul.bf16.gmra.mxu0 %v752
  %v766 = vpop.f32.mrf.mxu0
  %v767 = vadd.f32 0.0, %v766
  %v768 = vpop.f32.mrf.mxu0
  %v769 = vadd.f32 0.0, %v768
  %770 = vdwg.mxu0
  %v771 = vunpack.c.l.b16 %v223
  %v772 = vunpack.c.l.b16 %v225
  %v773 = vpack.c.b16 %v772, %v771
  %774 = vrot.lane.b32.xlu0 %v773, 96
  %v775 = vpop.permute.xlu0 %774
  %v777 = vsel %vm275, %v773, 0
  %v780 = vsel %vm275, %v775, 0
  %782 = vmatpush.bf16.xpose.msra.mxu0 0
  %783 = vmatpush.bf16.xpose.msra.mxu0 0
  %784 = vmatpush.bf16.xpose.msra.mxu0 0
  %785 = vmatpush.bf16.xpose.msra.mxu0 0
  %786 = vmatpush.bf16.xpose.msra.mxu0 0
  %787 = vmatpush.bf16.xpose.msra.mxu0 0
  %788 = vmatpush.bf16.xpose.msra.mxu0 0
  %789 = vmatpush.bf16.xpose.msra.mxu0 %v780
  %790 = vmatmul.bf16.gmra.mxu0 %v777
  %v791 = vpop.f32.mrf.mxu0
  %v792 = vadd.f32 0.0, %v791
  %v793 = vpop.f32.mrf.mxu0
  %v794 = vadd.f32 0.0, %v793
  %795 = vdwg.mxu0
  %v796 = vunpack.c.l.b16 %v227
  %v797 = vunpack.c.l.b16 %v229
  %v798 = vpack.c.b16 %v797, %v796
  %799 = vrot.lane.b32.xlu0 %v798, 96
  %v800 = vpop.permute.xlu0 %799
  %v802 = vsel %vm275, %v798, 0
  %v805 = vsel %vm275, %v800, 0
  %807 = vmatpush.bf16.xpose.msra.mxu0 0
  %808 = vmatpush.bf16.xpose.msra.mxu0 0
  %809 = vmatpush.bf16.xpose.msra.mxu0 0
  %810 = vmatpush.bf16.xpose.msra.mxu0 0
  %811 = vmatpush.bf16.xpose.msra.mxu0 0
  %812 = vmatpush.bf16.xpose.msra.mxu0 0
  %813 = vmatpush.bf16.xpose.msra.mxu0 0
  %814 = vmatpush.bf16.xpose.msra.mxu0 %v805
  %815 = vmatmul.bf16.gmra.mxu0 %v802
  %v816 = vpop.f32.mrf.mxu0
  %v817 = vadd.f32 0.0, %v816
  %v818 = vpop.f32.mrf.mxu0
  %v819 = vadd.f32 0.0, %v818
  %820 = vdwg.mxu0
  %v821 = vunpack.c.l.b16 %v231
  %v822 = vunpack.c.l.b16 %v233
  %v823 = vpack.c.b16 %v822, %v821
  %824 = vrot.lane.b32.xlu0 %v823, 96
  %v825 = vpop.permute.xlu0 %824
  %v827 = vsel %vm275, %v823, 0
  %v830 = vsel %vm275, %v825, 0
  %832 = vmatpush.bf16.xpose.msra.mxu0 0
  %833 = vmatpush.bf16.xpose.msra.mxu0 0
  %834 = vmatpush.bf16.xpose.msra.mxu0 0
  %835 = vmatpush.bf16.xpose.msra.mxu0 0
  %836 = vmatpush.bf16.xpose.msra.mxu0 0
  %837 = vmatpush.bf16.xpose.msra.mxu0 0
  %838 = vmatpush.bf16.xpose.msra.mxu0 0
  %839 = vmatpush.bf16.xpose.msra.mxu0 %v830
  %840 = vmatmul.bf16.gmra.mxu0 %v827
  %v841 = vpop.f32.mrf.mxu0
  %v842 = vadd.f32 0.0, %v841
  %v843 = vpop.f32.mrf.mxu0
  %v844 = vadd.f32 0.0, %v843
  %845 = vdwg.mxu0
  %v846 = vunpack.c.l.b16 %v235
  %v847 = vunpack.c.l.b16 %v237
  %v848 = vpack.c.b16 %v847, %v846
  %849 = vrot.lane.b32.xlu0 %v848, 96
  %v850 = vpop.permute.xlu0 %849
  %v852 = vsel %vm275, %v848, 0
  %v855 = vsel %vm275, %v850, 0
  %857 = vmatpush.bf16.xpose.msra.mxu0 0
  %858 = vmatpush.bf16.xpose.msra.mxu0 0
  %859 = vmatpush.bf16.xpose.msra.mxu0 0
  %860 = vmatpush.bf16.xpose.msra.mxu0 0
  %861 = vmatpush.bf16.xpose.msra.mxu0 0
  %862 = vmatpush.bf16.xpose.msra.mxu0 0
  %863 = vmatpush.bf16.xpose.msra.mxu0 0
  %864 = vmatpush.bf16.xpose.msra.mxu0 %v855
  %865 = vmatmul.bf16.gmra.mxu0 %v852
  %v866 = vpop.f32.mrf.mxu0
  %v867 = vadd.f32 0.0, %v866
  %v868 = vpop.f32.mrf.mxu0
  %v869 = vadd.f32 0.0, %v868
  %870 = vdwg.mxu0
  %v871 = vunpack.c.l.b16 %v239
  %v872 = vunpack.c.l.b16 %v241
  %v873 = vpack.c.b16 %v872, %v871
  %874 = vrot.lane.b32.xlu0 %v873, 96
  %v875 = vpop.permute.xlu0 %874
  %v877 = vsel %vm275, %v873, 0
  %v880 = vsel %vm275, %v875, 0
  %882 = vmatpush.bf16.xpose.msra.mxu0 0
  %883 = vmatpush.bf16.xpose.msra.mxu0 0
  %884 = vmatpush.bf16.xpose.msra.mxu0 0
  %885 = vmatpush.bf16.xpose.msra.mxu0 0
  %886 = vmatpush.bf16.xpose.msra.mxu0 0
  %887 = vmatpush.bf16.xpose.msra.mxu0 0
  %888 = vmatpush.bf16.xpose.msra.mxu0 0
  %889 = vmatpush.bf16.xpose.msra.mxu0 %v880
  %890 = vmatmul.bf16.gmra.mxu0 %v877
  %v891 = vpop.f32.mrf.mxu0
  %v892 = vadd.f32 0.0, %v891
  %v893 = vpop.f32.mrf.mxu0
  %v894 = vadd.f32 0.0, %v893
  %895 = vdwg.mxu0
  %v896 = vunpack.c.l.b16 %v243
  %v897 = vunpack.c.l.b16 %v245
  %v898 = vpack.c.b16 %v897, %v896
  %899 = vrot.lane.b32.xlu0 %v898, 96
  %v900 = vpop.permute.xlu0 %899
  %v902 = vsel %vm275, %v898, 0
  %v905 = vsel %vm275, %v900, 0
  %907 = vmatpush.bf16.xpose.msra.mxu0 0
  %908 = vmatpush.bf16.xpose.msra.mxu0 0
  %909 = vmatpush.bf16.xpose.msra.mxu0 0
  %910 = vmatpush.bf16.xpose.msra.mxu0 0
  %911 = vmatpush.bf16.xpose.msra.mxu0 0
  %912 = vmatpush.bf16.xpose.msra.mxu0 0
  %913 = vmatpush.bf16.xpose.msra.mxu0 0
  %914 = vmatpush.bf16.xpose.msra.mxu0 %v905
  %915 = vmatmul.bf16.gmra.mxu0 %v902
  %v916 = vpop.f32.mrf.mxu0
  %v917 = vadd.f32 0.0, %v916
  %v918 = vpop.f32.mrf.mxu0
  %v919 = vadd.f32 0.0, %v918
  %920 = vdwg.mxu0
  %v921 = vunpack.c.l.b16 %v247
  %v922 = vunpack.c.l.b16 %v249
  %v923 = vpack.c.b16 %v922, %v921
  %924 = vrot.lane.b32.xlu0 %v923, 96
  %v925 = vpop.permute.xlu0 %924
  %v927 = vsel %vm275, %v923, 0
  %v930 = vsel %vm275, %v925, 0
  %932 = vmatpush.bf16.xpose.msra.mxu0 0
  %933 = vmatpush.bf16.xpose.msra.mxu0 0
  %934 = vmatpush.bf16.xpose.msra.mxu0 0
  %935 = vmatpush.bf16.xpose.msra.mxu0 0
  %936 = vmatpush.bf16.xpose.msra.mxu0 0
  %937 = vmatpush.bf16.xpose.msra.mxu0 0
  %938 = vmatpush.bf16.xpose.msra.mxu0 0
  %939 = vmatpush.bf16.xpose.msra.mxu0 %v930
  %940 = vmatmul.bf16.gmra.mxu0 %v927
  %v941 = vpop.f32.mrf.mxu0
  %v942 = vadd.f32 0.0, %v941
  %v943 = vpop.f32.mrf.mxu0
  %v944 = vadd.f32 0.0, %v943
  %945 = vdwg.mxu0
  %v946 = vunpack.c.l.b16 %v251
  %v947 = vunpack.c.l.b16 %v253
  %v948 = vpack.c.b16 %v947, %v946
  %949 = vrot.lane.b32.xlu0 %v948, 96
  %v950 = vpop.permute.xlu0 %949
  %v952 = vsel %vm275, %v948, 0
  %v955 = vsel %vm275, %v950, 0
  %957 = vmatpush.bf16.xpose.msra.mxu0 0
  %958 = vmatpush.bf16.xpose.msra.mxu0 0
  %959 = vmatpush.bf16.xpose.msra.mxu0 0
  %960 = vmatpush.bf16.xpose.msra.mxu0 0
  %961 = vmatpush.bf16.xpose.msra.mxu0 0
  %962 = vmatpush.bf16.xpose.msra.mxu0 0
  %963 = vmatpush.bf16.xpose.msra.mxu0 0
  %964 = vmatpush.bf16.xpose.msra.mxu0 %v955
  %965 = vmatmul.bf16.gmra.mxu0 %v952
  %v966 = vpop.f32.mrf.mxu0
  %v967 = vadd.f32 0.0, %v966
  %v968 = vpop.f32.mrf.mxu0
  %v969 = vadd.f32 0.0, %v968
  %970 = vdwg.mxu0
  %v971 = vunpack.c.l.b16 %v255
  %v972 = vunpack.c.l.b16 %v257
  %v973 = vpack.c.b16 %v972, %v971
  %974 = vrot.lane.b32.xlu0 %v973, 96
  %v975 = vpop.permute.xlu0 %974
  %v977 = vsel %vm275, %v973, 0
  %v980 = vsel %vm275, %v975, 0
  %982 = vmatpush.bf16.xpose.msra.mxu0 0
  %983 = vmatpush.bf16.xpose.msra.mxu0 0
  %984 = vmatpush.bf16.xpose.msra.mxu0 0
  %985 = vmatpush.bf16.xpose.msra.mxu0 0
  %986 = vmatpush.bf16.xpose.msra.mxu0 0
  %987 = vmatpush.bf16.xpose.msra.mxu0 0
  %988 = vmatpush.bf16.xpose.msra.mxu0 0
  %989 = vmatpush.bf16.xpose.msra.mxu0 %v980
  %990 = vmatmul.bf16.gmra.mxu0 %v977
  %v991 = vpop.f32.mrf.mxu0
  %v992 = vadd.f32 0.0, %v991
  %v993 = vpop.f32.mrf.mxu0
  %v994 = vadd.f32 0.0, %v993
  %995 = vdwg.mxu0
  %v996 = vunpack.c.l.b16 %v259
  %v997 = vunpack.c.l.b16 %v261
  %v998 = vpack.c.b16 %v997, %v996
  %999 = vrot.lane.b32.xlu0 %v998, 96
  %v1000 = vpop.permute.xlu0 %999
  %v1002 = vsel %vm275, %v998, 0
  %v1005 = vsel %vm275, %v1000, 0
  %1007 = vmatpush.bf16.xpose.msra.mxu0 0
  %1008 = vmatpush.bf16.xpose.msra.mxu0 0
  %1009 = vmatpush.bf16.xpose.msra.mxu0 0
  %1010 = vmatpush.bf16.xpose.msra.mxu0 0
  %1011 = vmatpush.bf16.xpose.msra.mxu0 0
  %1012 = vmatpush.bf16.xpose.msra.mxu0 0
  %1013 = vmatpush.bf16.xpose.msra.mxu0 0
  %1014 = vmatpush.bf16.xpose.msra.mxu0 %v1005
  %1015 = vmatmul.bf16.gmra.mxu0 %v1002
  %v1016 = vpop.f32.mrf.mxu0
  %v1017 = vadd.f32 0.0, %v1016
  %v1018 = vpop.f32.mrf.mxu0
  %v1019 = vadd.f32 0.0, %v1018
  %1020 = vdwg.mxu0
  %v1021 = vunpack.c.l.b16 %v263
  %v1022 = vunpack.c.l.b16 %v265
  %v1023 = vpack.c.b16 %v1022, %v1021
  %1024 = vrot.lane.b32.xlu0 %v1023, 96
  %v1025 = vpop.permute.xlu0 %1024
  %v1027 = vsel %vm275, %v1023, 0
  %v1030 = vsel %vm275, %v1025, 0
  %1032 = vmatpush.bf16.xpose.msra.mxu0 0
  %1033 = vmatpush.bf16.xpose.msra.mxu0 0
  %1034 = vmatpush.bf16.xpose.msra.mxu0 0
  %1035 = vmatpush.bf16.xpose.msra.mxu0 0
  %1036 = vmatpush.bf16.xpose.msra.mxu0 0
  %1037 = vmatpush.bf16.xpose.msra.mxu0 0
  %1038 = vmatpush.bf16.xpose.msra.mxu0 0
  %1039 = vmatpush.bf16.xpose.msra.mxu0 %v1030
  %1040 = vmatmul.bf16.gmra.mxu0 %v1027
  %v1041 = vpop.f32.mrf.mxu0
  %v1042 = vadd.f32 0.0, %v1041
  %v1043 = vpop.f32.mrf.mxu0
  %v1044 = vadd.f32 0.0, %v1043
  %1045 = vdwg.mxu0
  %v1046 = vunpack.c.l.b16 %v267
  %v1047 = vunpack.c.l.b16 %v269
  %v1048 = vpack.c.b16 %v1047, %v1046
  %1049 = vrot.lane.b32.xlu0 %v1048, 96
  %v1050 = vpop.permute.xlu0 %1049
  %v1052 = vsel %vm275, %v1048, 0
  %v1055 = vsel %vm275, %v1050, 0
  %1057 = vmatpush.bf16.xpose.msra.mxu0 0
  %1058 = vmatpush.bf16.xpose.msra.mxu0 0
  %1059 = vmatpush.bf16.xpose.msra.mxu0 0
  %1060 = vmatpush.bf16.xpose.msra.mxu0 0
  %1061 = vmatpush.bf16.xpose.msra.mxu0 0
  %1062 = vmatpush.bf16.xpose.msra.mxu0 0
  %1063 = vmatpush.bf16.xpose.msra.mxu0 0
  %1064 = vmatpush.bf16.xpose.msra.mxu0 %v1055
  %1065 = vmatmul.bf16.gmra.mxu0 %v1052
  %v1066 = vpop.f32.mrf.mxu0
  %v1067 = vadd.f32 0.0, %v1066
  %v1068 = vpop.f32.mrf.mxu0
  %v1069 = vadd.f32 0.0, %v1068
  %1070 = vdwg.mxu0
  %v1071 = vld [vmem:[%s3] sm:$0xff]
  %v1072 = vld [vmem:[%s3 + $0x8] sm:$0xff]
  %v1073 = vld [vmem:[%s3 + $0x10] sm:$0xff]
  %v1074 = vld [vmem:[%s3 + $0x18] sm:$0xff]
  %v1075 = vld [vmem:[%s3 + $0x20] sm:$0xff]
  %v1076 = vld [vmem:[%s3 + $0x28] sm:$0xff]
  %v1077 = vld [vmem:[%s3 + $0x30] sm:$0xff]
  %v1078 = vld [vmem:[%s3 + $0x38] sm:$0xff]
  %v1079 = vadd.f32 %v292, %v1071
  %v1080 = vadd.f32 %v294, %v1072
  %v1081 = vadd.f32 %v317, %v1071
  %v1082 = vadd.f32 %v319, %v1072
  %v1083 = vadd.f32 %v342, %v1071
  %v1084 = vadd.f32 %v344, %v1072
  %v1085 = vadd.f32 %v367, %v1071
  %v1086 = vadd.f32 %v369, %v1072
  %v1087 = vadd.f32 %v392, %v1071
  %v1088 = vadd.f32 %v394, %v1072
  %v1089 = vadd.f32 %v417, %v1071
  %v1090 = vadd.f32 %v419, %v1072
  %v1091 = vadd.f32 %v442, %v1071
  %v1092 = vadd.f32 %v444, %v1072
  %v1093 = vadd.f32 %v467, %v1071
  %v1094 = vadd.f32 %v469, %v1072
  %v1095 = vadd.f32 %v492, %v1073
  %v1096 = vadd.f32 %v494, %v1074
  %v1097 = vadd.f32 %v517, %v1073
  %v1098 = vadd.f32 %v519, %v1074
  %v1099 = vadd.f32 %v542, %v1073
  %v1100 = vadd.f32 %v544, %v1074
  %v1101 = vadd.f32 %v567, %v1073
  %v1102 = vadd.f32 %v569, %v1074
  %v1103 = vadd.f32 %v592, %v1073
  %v1104 = vadd.f32 %v594, %v1074
  %v1105 = vadd.f32 %v617, %v1073
  %v1106 = vadd.f32 %v619, %v1074
  %v1107 = vadd.f32 %v642, %v1073
  %v1108 = vadd.f32 %v644, %v1074
  %v1109 = vadd.f32 %v667, %v1073
  %v1110 = vadd.f32 %v669, %v1074
  %v1111 = vadd.f32 %v692, %v1075
  %v1112 = vadd.f32 %v694, %v1076
  %v1113 = vadd.f32 %v717, %v1075
  %v1114 = vadd.f32 %v719, %v1076
  %v1115 = vadd.f32 %v742, %v1075
  %v1116 = vadd.f32 %v744, %v1076
  %v1117 = vadd.f32 %v767, %v1075
  %v1118 = vadd.f32 %v769, %v1076
  %v1119 = vadd.f32 %v792, %v1075
  %v1120 = vadd.f32 %v794, %v1076
  %v1121 = vadd.f32 %v817, %v1075
  %v1122 = vadd.f32 %v819, %v1076
  %v1123 = vadd.f32 %v842, %v1075
  %v1124 = vadd.f32 %v844, %v1076
  %v1125 = vadd.f32 %v867, %v1075
  %v1126 = vadd.f32 %v869, %v1076
  %v1127 = vadd.f32 %v892, %v1077
  %v1128 = vadd.f32 %v894, %v1078
  %v1129 = vadd.f32 %v917, %v1077
  %v1130 = vadd.f32 %v919, %v1078
  %v1131 = vadd.f32 %v942, %v1077
  %v1132 = vadd.f32 %v944, %v1078
  %v1133 = vadd.f32 %v967, %v1077
  %v1134 = vadd.f32 %v969, %v1078
  %v1135 = vadd.f32 %v992, %v1077
  %v1136 = vadd.f32 %v994, %v1078
  %v1137 = vadd.f32 %v1017, %v1077
  %v1138 = vadd.f32 %v1019, %v1078
  %v1139 = vadd.f32 %v1042, %v1077
  %v1140 = vadd.f32 %v1044, %v1078
  %v1141 = vadd.f32 %v1067, %v1077
  %v1142 = vadd.f32 %v1069, %v1078
  %vm1143 = vcmask 130048
  %v1144 = vsel %vm1143, %v1079, -inf
  %1145 = vmax.xlane.f32.xlu0 %v1144
  %v1146 = vpop.xlane.xlu0 %1145
  %v1147 = vsel %vm1143, %v1080, -inf
  %1148 = vmax.xlane.f32.xlu0 %v1147
  %v1149 = vpop.xlane.xlu0 %1148
  %v1150 = vsel %vm1143, %v1081, -inf
  %1151 = vmax.xlane.f32.xlu0 %v1150
  %v1152 = vpop.xlane.xlu0 %1151
  %v1153 = vsel %vm1143, %v1082, -inf
  %1154 = vmax.xlane.f32.xlu0 %v1153
  %v1155 = vpop.xlane.xlu0 %1154
  %v1156 = vsel %vm1143, %v1083, -inf
  %1157 = vmax.xlane.f32.xlu0 %v1156
  %v1158 = vpop.xlane.xlu0 %1157
  %v1159 = vsel %vm1143, %v1084, -inf
  %1160 = vmax.xlane.f32.xlu0 %v1159
  %v1161 = vpop.xlane.xlu0 %1160
  %v1162 = vsel %vm1143, %v1085, -inf
  %1163 = vmax.xlane.f32.xlu0 %v1162
  %v1164 = vpop.xlane.xlu0 %1163
  %v1165 = vsel %vm1143, %v1086, -inf
  %1166 = vmax.xlane.f32.xlu0 %v1165
  %v1167 = vpop.xlane.xlu0 %1166
  %v1168 = vsel %vm1143, %v1087, -inf
  %1169 = vmax.xlane.f32.xlu0 %v1168
  %v1170 = vpop.xlane.xlu0 %1169
  %v1171 = vsel %vm1143, %v1088, -inf
  %1172 = vmax.xlane.f32.xlu0 %v1171
  %v1173 = vpop.xlane.xlu0 %1172
  %v1174 = vsel %vm1143, %v1089, -inf
  %1175 = vmax.xlane.f32.xlu0 %v1174
  %v1176 = vpop.xlane.xlu0 %1175
  %v1177 = vsel %vm1143, %v1090, -inf
  %1178 = vmax.xlane.f32.xlu0 %v1177
  %v1179 = vpop.xlane.xlu0 %1178
  %v1180 = vsel %vm1143, %v1091, -inf
  %1181 = vmax.xlane.f32.xlu0 %v1180
  %v1182 = vpop.xlane.xlu0 %1181
  %v1183 = vsel %vm1143, %v1092, -inf
  %1184 = vmax.xlane.f32.xlu0 %v1183
  %v1185 = vpop.xlane.xlu0 %1184
  %v1186 = vsel %vm1143, %v1093, -inf
  %1187 = vmax.xlane.f32.xlu0 %v1186
  %v1188 = vpop.xlane.xlu0 %1187
  %v1189 = vsel %vm1143, %v1094, -inf
  %1190 = vmax.xlane.f32.xlu0 %v1189
  %v1191 = vpop.xlane.xlu0 %1190
  %v1192 = vsel %vm1143, %v1095, -inf
  %1193 = vmax.xlane.f32.xlu0 %v1192
  %v1194 = vpop.xlane.xlu0 %1193
  %v1195 = vsel %vm1143, %v1096, -inf
  %1196 = vmax.xlane.f32.xlu0 %v1195
  %v1197 = vpop.xlane.xlu0 %1196
  %v1198 = vsel %vm1143, %v1097, -inf
  %1199 = vmax.xlane.f32.xlu0 %v1198
  %v1200 = vpop.xlane.xlu0 %1199
  %v1201 = vsel %vm1143, %v1098, -inf
  %1202 = vmax.xlane.f32.xlu0 %v1201
  %v1203 = vpop.xlane.xlu0 %1202
  %v1204 = vsel %vm1143, %v1099, -inf
  %1205 = vmax.xlane.f32.xlu0 %v1204
  %v1206 = vpop.xlane.xlu0 %1205
  %v1207 = vsel %vm1143, %v1100, -inf
  %1208 = vmax.xlane.f32.xlu0 %v1207
  %v1209 = vpop.xlane.xlu0 %1208
  %v1210 = vsel %vm1143, %v1101, -inf
  %1211 = vmax.xlane.f32.xlu0 %v1210
  %v1212 = vpop.xlane.xlu0 %1211
  %v1213 = vsel %vm1143, %v1102, -inf
  %1214 = vmax.xlane.f32.xlu0 %v1213
  %v1215 = vpop.xlane.xlu0 %1214
  %v1216 = vsel %vm1143, %v1103, -inf
  %1217 = vmax.xlane.f32.xlu0 %v1216
  %v1218 = vpop.xlane.xlu0 %1217
  %v1219 = vsel %vm1143, %v1104, -inf
  %1220 = vmax.xlane.f32.xlu0 %v1219
  %v1221 = vpop.xlane.xlu0 %1220
  %v1222 = vsel %vm1143, %v1105, -inf
  %1223 = vmax.xlane.f32.xlu0 %v1222
  %v1224 = vpop.xlane.xlu0 %1223
  %v1225 = vsel %vm1143, %v1106, -inf
  %1226 = vmax.xlane.f32.xlu0 %v1225
  %v1227 = vpop.xlane.xlu0 %1226
  %v1228 = vsel %vm1143, %v1107, -inf
  %1229 = vmax.xlane.f32.xlu0 %v1228
  %v1230 = vpop.xlane.xlu0 %1229
  %v1231 = vsel %vm1143, %v1108, -inf
  %1232 = vmax.xlane.f32.xlu0 %v1231
  %v1233 = vpop.xlane.xlu0 %1232
  %v1234 = vsel %vm1143, %v1109, -inf
  %1235 = vmax.xlane.f32.xlu0 %v1234
  %v1236 = vpop.xlane.xlu0 %1235
  %v1237 = vsel %vm1143, %v1110, -inf
  %1238 = vmax.xlane.f32.xlu0 %v1237
  %v1239 = vpop.xlane.xlu0 %1238
  %v1240 = vsel %vm1143, %v1111, -inf
  %1241 = vmax.xlane.f32.xlu0 %v1240
  %v1242 = vpop.xlane.xlu0 %1241
  %v1243 = vsel %vm1143, %v1112, -inf
  %1244 = vmax.xlane.f32.xlu0 %v1243
  %v1245 = vpop.xlane.xlu0 %1244
  %v1246 = vsel %vm1143, %v1113, -inf
  %1247 = vmax.xlane.f32.xlu0 %v1246
  %v1248 = vpop.xlane.xlu0 %1247
  %v1249 = vsel %vm1143, %v1114, -inf
  %1250 = vmax.xlane.f32.xlu0 %v1249
  %v1251 = vpop.xlane.xlu0 %1250
  %v1252 = vsel %vm1143, %v1115, -inf
  %1253 = vmax.xlane.f32.xlu0 %v1252
  %v1254 = vpop.xlane.xlu0 %1253
  %v1255 = vsel %vm1143, %v1116, -inf
  %1256 = vmax.xlane.f32.xlu0 %v1255
  %v1257 = vpop.xlane.xlu0 %1256
  %v1258 = vsel %vm1143, %v1117, -inf
  %1259 = vmax.xlane.f32.xlu0 %v1258
  %v1260 = vpop.xlane.xlu0 %1259
  %v1261 = vsel %vm1143, %v1118, -inf
  %1262 = vmax.xlane.f32.xlu0 %v1261
  %v1263 = vpop.xlane.xlu0 %1262
  %v1264 = vsel %vm1143, %v1119, -inf
  %1265 = vmax.xlane.f32.xlu0 %v1264
  %v1266 = vpop.xlane.xlu0 %1265
  %v1267 = vsel %vm1143, %v1120, -inf
  %1268 = vmax.xlane.f32.xlu0 %v1267
  %v1269 = vpop.xlane.xlu0 %1268
  %v1270 = vsel %vm1143, %v1121, -inf
  %1271 = vmax.xlane.f32.xlu0 %v1270
  %v1272 = vpop.xlane.xlu0 %1271
  %v1273 = vsel %vm1143, %v1122, -inf
  %1274 = vmax.xlane.f32.xlu0 %v1273
  %v1275 = vpop.xlane.xlu0 %1274
  %v1276 = vsel %vm1143, %v1123, -inf
  %1277 = vmax.xlane.f32.xlu0 %v1276
  %v1278 = vpop.xlane.xlu0 %1277
  %v1279 = vsel %vm1143, %v1124, -inf
  %1280 = vmax.xlane.f32.xlu0 %v1279
  %v1281 = vpop.xlane.xlu0 %1280
  %v1282 = vsel %vm1143, %v1125, -inf
  %1283 = vmax.xlane.f32.xlu0 %v1282
  %v1284 = vpop.xlane.xlu0 %1283
  %v1285 = vsel %vm1143, %v1126, -inf
  %1286 = vmax.xlane.f32.xlu0 %v1285
  %v1287 = vpop.xlane.xlu0 %1286
  %v1288 = vsel %vm1143, %v1127, -inf
  %1289 = vmax.xlane.f32.xlu0 %v1288
  %v1290 = vpop.xlane.xlu0 %1289
  %v1291 = vsel %vm1143, %v1128, -inf
  %1292 = vmax.xlane.f32.xlu0 %v1291
  %v1293 = vpop.xlane.xlu0 %1292
  %v1294 = vsel %vm1143, %v1129, -inf
  %1295 = vmax.xlane.f32.xlu0 %v1294
  %v1296 = vpop.xlane.xlu0 %1295
  %v1297 = vsel %vm1143, %v1130, -inf
  %1298 = vmax.xlane.f32.xlu0 %v1297
  %v1299 = vpop.xlane.xlu0 %1298
  %v1300 = vsel %vm1143, %v1131, -inf
  %1301 = vmax.xlane.f32.xlu0 %v1300
  %v1302 = vpop.xlane.xlu0 %1301
  %v1303 = vsel %vm1143, %v1132, -inf
  %1304 = vmax.xlane.f32.xlu0 %v1303
  %v1305 = vpop.xlane.xlu0 %1304
  %v1306 = vsel %vm1143, %v1133, -inf
  %1307 = vmax.xlane.f32.xlu0 %v1306
  %v1308 = vpop.xlane.xlu0 %1307
  %v1309 = vsel %vm1143, %v1134, -inf
  %1310 = vmax.xlane.f32.xlu0 %v1309
  %v1311 = vpop.xlane.xlu0 %1310
  %v1312 = vsel %vm1143, %v1135, -inf
  %1313 = vmax.xlane.f32.xlu0 %v1312
  %v1314 = vpop.xlane.xlu0 %1313
  %v1315 = vsel %vm1143, %v1136, -inf
  %1316 = vmax.xlane.f32.xlu0 %v1315
  %v1317 = vpop.xlane.xlu0 %1316
  %v1318 = vsel %vm1143, %v1137, -inf
  %1319 = vmax.xlane.f32.xlu0 %v1318
  %v1320 = vpop.xlane.xlu0 %1319
  %v1321 = vsel %vm1143, %v1138, -inf
  %1322 = vmax.xlane.f32.xlu0 %v1321
  %v1323 = vpop.xlane.xlu0 %1322
  %v1324 = vsel %vm1143, %v1139, -inf
  %1325 = vmax.xlane.f32.xlu0 %v1324
  %v1326 = vpop.xlane.xlu0 %1325
  %v1327 = vsel %vm1143, %v1140, -inf
  %1328 = vmax.xlane.f32.xlu0 %v1327
  %v1329 = vpop.xlane.xlu0 %1328
  %v1330 = vsel %vm1143, %v1141, -inf
  %1331 = vmax.xlane.f32.xlu0 %v1330
  %v1332 = vpop.xlane.xlu0 %1331
  %v1333 = vsel %vm1143, %v1142, -inf
  %1334 = vmax.xlane.f32.xlu0 %v1333
  %v1335 = vpop.xlane.xlu0 %1334
  %v1336 = vsub.f32 %v1079, %v1146
  %v1337 = vsub.f32 %v1080, %v1149
  %v1338 = vsub.f32 %v1081, %v1152
  %v1339 = vsub.f32 %v1082, %v1155
  %v1340 = vsub.f32 %v1083, %v1158
  %v1341 = vsub.f32 %v1084, %v1161
  %v1342 = vsub.f32 %v1085, %v1164
  %v1343 = vsub.f32 %v1086, %v1167
  %v1344 = vsub.f32 %v1087, %v1170
  %v1345 = vsub.f32 %v1088, %v1173
  %v1346 = vsub.f32 %v1089, %v1176
  %v1347 = vsub.f32 %v1090, %v1179
  %v1348 = vsub.f32 %v1091, %v1182
  %v1349 = vsub.f32 %v1092, %v1185
  %v1350 = vsub.f32 %v1093, %v1188
  %v1351 = vsub.f32 %v1094, %v1191
  %v1352 = vsub.f32 %v1095, %v1194
  %v1353 = vsub.f32 %v1096, %v1197
  %v1354 = vsub.f32 %v1097, %v1200
  %v1355 = vsub.f32 %v1098, %v1203
  %v1356 = vsub.f32 %v1099, %v1206
  %v1357 = vsub.f32 %v1100, %v1209
  %v1358 = vsub.f32 %v1101, %v1212
  %v1359 = vsub.f32 %v1102, %v1215
  %v1360 = vsub.f32 %v1103, %v1218
  %v1361 = vsub.f32 %v1104, %v1221
  %v1362 = vsub.f32 %v1105, %v1224
  %v1363 = vsub.f32 %v1106, %v1227
  %v1364 = vsub.f32 %v1107, %v1230
  %v1365 = vsub.f32 %v1108, %v1233
  %v1366 = vsub.f32 %v1109, %v1236
  %v1367 = vsub.f32 %v1110, %v1239
  %v1368 = vsub.f32 %v1111, %v1242
  %v1369 = vsub.f32 %v1112, %v1245
  %v1370 = vsub.f32 %v1113, %v1248
  %v1371 = vsub.f32 %v1114, %v1251
  %v1372 = vsub.f32 %v1115, %v1254
  %v1373 = vsub.f32 %v1116, %v1257
  %v1374 = vsub.f32 %v1117, %v1260
  %v1375 = vsub.f32 %v1118, %v1263
  %v1376 = vsub.f32 %v1119, %v1266
  %v1377 = vsub.f32 %v1120, %v1269
  %v1378 = vsub.f32 %v1121, %v1272
  %v1379 = vsub.f32 %v1122, %v1275
  %v1380 = vsub.f32 %v1123, %v1278
  %v1381 = vsub.f32 %v1124, %v1281
  %v1382 = vsub.f32 %v1125, %v1284
  %v1383 = vsub.f32 %v1126, %v1287
  %v1384 = vsub.f32 %v1127, %v1290
  %v1385 = vsub.f32 %v1128, %v1293
  %v1386 = vsub.f32 %v1129, %v1296
  %v1387 = vsub.f32 %v1130, %v1299
  %v1388 = vsub.f32 %v1131, %v1302
  %v1389 = vsub.f32 %v1132, %v1305
  %v1390 = vsub.f32 %v1133, %v1308
  %v1391 = vsub.f32 %v1134, %v1311
  %v1392 = vsub.f32 %v1135, %v1314
  %v1393 = vsub.f32 %v1136, %v1317
  %v1394 = vsub.f32 %v1137, %v1320
  %v1395 = vsub.f32 %v1138, %v1323
  %v1396 = vsub.f32 %v1139, %v1326
  %v1397 = vsub.f32 %v1140, %v1329
  %v1398 = vsub.f32 %v1141, %v1332
  %v1399 = vsub.f32 %v1142, %v1335
  %v1400 = vmul.f32 %v1336, 1.442695
  %v1401 = vpow.pop %v1400
  %v1402 = vmul.f32 %v1337, 1.442695
  %v1403 = vpow.pop %v1402
  %v1404 = vmul.f32 %v1338, 1.442695
  %v1405 = vpow.pop %v1404
  %v1406 = vmul.f32 %v1339, 1.442695
  %v1407 = vpow.pop %v1406
  %v1408 = vmul.f32 %v1340, 1.442695
  %v1409 = vpow.pop %v1408
  %v1410 = vmul.f32 %v1341, 1.442695
  %v1411 = vpow.pop %v1410
  %v1412 = vmul.f32 %v1342, 1.442695
  %v1413 = vpow.pop %v1412
  %v1414 = vmul.f32 %v1343, 1.442695
  %v1415 = vpow.pop %v1414
  %v1416 = vmul.f32 %v1344, 1.442695
  %v1417 = vpow.pop %v1416
  %v1418 = vmul.f32 %v1345, 1.442695
  %v1419 = vpow.pop %v1418
  %v1420 = vmul.f32 %v1346, 1.442695
  %v1421 = vpow.pop %v1420
  %v1422 = vmul.f32 %v1347, 1.442695
  %v1423 = vpow.pop %v1422
  %v1424 = vmul.f32 %v1348, 1.442695
  %v1425 = vpow.pop %v1424
  %v1426 = vmul.f32 %v1349, 1.442695
  %v1427 = vpow.pop %v1426
  %v1428 = vmul.f32 %v1350, 1.442695
  %v1429 = vpow.pop %v1428
  %v1430 = vmul.f32 %v1351, 1.442695
  %v1431 = vpow.pop %v1430
  %v1432 = vmul.f32 %v1352, 1.442695
  %v1433 = vpow.pop %v1432
  %v1434 = vmul.f32 %v1353, 1.442695
  %v1435 = vpow.pop %v1434
  %v1436 = vmul.f32 %v1354, 1.442695
  %v1437 = vpow.pop %v1436
  %v1438 = vmul.f32 %v1355, 1.442695
  %v1439 = vpow.pop %v1438
  %v1440 = vmul.f32 %v1356, 1.442695
  %v1441 = vpow.pop %v1440
  %v1442 = vmul.f32 %v1357, 1.442695
  %v1443 = vpow.pop %v1442
  %v1444 = vmul.f32 %v1358, 1.442695
  %v1445 = vpow.pop %v1444
  %v1446 = vmul.f32 %v1359, 1.442695
  %v1447 = vpow.pop %v1446
  %v1448 = vmul.f32 %v1360, 1.442695
  %v1449 = vpow.pop %v1448
  %v1450 = vmul.f32 %v1361, 1.442695
  %v1451 = vpow.pop %v1450
  %v1452 = vmul.f32 %v1362, 1.442695
  %v1453 = vpow.pop %v1452
  %v1454 = vmul.f32 %v1363, 1.442695
  %v1455 = vpow.pop %v1454
  %v1456 = vmul.f32 %v1364, 1.442695
  %v1457 = vpow.pop %v1456
  %v1458 = vmul.f32 %v1365, 1.442695
  %v1459 = vpow.pop %v1458
  %v1460 = vmul.f32 %v1366, 1.442695
  %v1461 = vpow.pop %v1460
  %v1462 = vmul.f32 %v1367, 1.442695
  %v1463 = vpow.pop %v1462
  %v1464 = vmul.f32 %v1368, 1.442695
  %v1465 = vpow.pop %v1464
  %v1466 = vmul.f32 %v1369, 1.442695
  %v1467 = vpow.pop %v1466
  %v1468 = vmul.f32 %v1370, 1.442695
  %v1469 = vpow.pop %v1468
  %v1470 = vmul.f32 %v1371, 1.442695
  %v1471 = vpow.pop %v1470
  %v1472 = vmul.f32 %v1372, 1.442695
  %v1473 = vpow.pop %v1472
  %v1474 = vmul.f32 %v1373, 1.442695
  %v1475 = vpow.pop %v1474
  %v1476 = vmul.f32 %v1374, 1.442695
  %v1477 = vpow.pop %v1476
  %v1478 = vmul.f32 %v1375, 1.442695
  %v1479 = vpow.pop %v1478
  %v1480 = vmul.f32 %v1376, 1.442695
  %v1481 = vpow.pop %v1480
  %v1482 = vmul.f32 %v1377, 1.442695
  %v1483 = vpow.pop %v1482
  %v1484 = vmul.f32 %v1378, 1.442695
  %v1485 = vpow.pop %v1484
  %v1486 = vmul.f32 %v1379, 1.442695
  %v1487 = vpow.pop %v1486
  %v1488 = vmul.f32 %v1380, 1.442695
  %v1489 = vpow.pop %v1488
  %v1490 = vmul.f32 %v1381, 1.442695
  %v1491 = vpow.pop %v1490
  %v1492 = vmul.f32 %v1382, 1.442695
  %v1493 = vpow.pop %v1492
  %v1494 = vmul.f32 %v1383, 1.442695
  %v1495 = vpow.pop %v1494
  %v1496 = vmul.f32 %v1384, 1.442695
  %v1497 = vpow.pop %v1496
  %v1498 = vmul.f32 %v1385, 1.442695
  %v1499 = vpow.pop %v1498
  %v1500 = vmul.f32 %v1386, 1.442695
  %v1501 = vpow.pop %v1500
  %v1502 = vmul.f32 %v1387, 1.442695
  %v1503 = vpow.pop %v1502
  %v1504 = vmul.f32 %v1388, 1.442695
  %v1505 = vpow.pop %v1504
  %v1506 = vmul.f32 %v1389, 1.442695
  %v1507 = vpow.pop %v1506
  %v1508 = vmul.f32 %v1390, 1.442695
  %v1509 = vpow.pop %v1508
  %v1510 = vmul.f32 %v1391, 1.442695
  %v1511 = vpow.pop %v1510
  %v1512 = vmul.f32 %v1392, 1.442695
  %v1513 = vpow.pop %v1512
  %v1514 = vmul.f32 %v1393, 1.442695
  %v1515 = vpow.pop %v1514
  %v1516 = vmul.f32 %v1394, 1.442695
  %v1517 = vpow.pop %v1516
  %v1518 = vmul.f32 %v1395, 1.442695
  %v1519 = vpow.pop %v1518
  %v1520 = vmul.f32 %v1396, 1.442695
  %v1521 = vpow.pop %v1520
  %v1522 = vmul.f32 %v1397, 1.442695
  %v1523 = vpow.pop %v1522
  %v1524 = vmul.f32 %v1398, 1.442695
  %v1525 = vpow.pop %v1524
  %v1526 = vmul.f32 %v1399, 1.442695
  %v1527 = vpow.pop %v1526
  %v1528 = vsel %vm1143, %v1401, 0.0
  %1529 = vadd.xlane.f32.xlu0 %v1528
  %v1530 = vpop.xlane.xlu0 %1529
  %v1531 = vsel %vm1143, %v1403, 0.0
  %1532 = vadd.xlane.f32.xlu0 %v1531
  %v1533 = vpop.xlane.xlu0 %1532
  %v1534 = vsel %vm1143, %v1405, 0.0
  %1535 = vadd.xlane.f32.xlu0 %v1534
  %v1536 = vpop.xlane.xlu0 %1535
  %v1537 = vsel %vm1143, %v1407, 0.0
  %1538 = vadd.xlane.f32.xlu0 %v1537
  %v1539 = vpop.xlane.xlu0 %1538
  %v1540 = vsel %vm1143, %v1409, 0.0
  %1541 = vadd.xlane.f32.xlu0 %v1540
  %v1542 = vpop.xlane.xlu0 %1541
  %v1543 = vsel %vm1143, %v1411, 0.0
  %1544 = vadd.xlane.f32.xlu0 %v1543
  %v1545 = vpop.xlane.xlu0 %1544
  %v1546 = vsel %vm1143, %v1413, 0.0
  %1547 = vadd.xlane.f32.xlu0 %v1546
  %v1548 = vpop.xlane.xlu0 %1547
  %v1549 = vsel %vm1143, %v1415, 0.0
  %1550 = vadd.xlane.f32.xlu0 %v1549
  %v1551 = vpop.xlane.xlu0 %1550
  %v1552 = vsel %vm1143, %v1417, 0.0
  %1553 = vadd.xlane.f32.xlu0 %v1552
  %v1554 = vpop.xlane.xlu0 %1553
  %v1555 = vsel %vm1143, %v1419, 0.0
  %1556 = vadd.xlane.f32.xlu0 %v1555
  %v1557 = vpop.xlane.xlu0 %1556
  %v1558 = vsel %vm1143, %v1421, 0.0
  %1559 = vadd.xlane.f32.xlu0 %v1558
  %v1560 = vpop.xlane.xlu0 %1559
  %v1561 = vsel %vm1143, %v1423, 0.0
  %1562 = vadd.xlane.f32.xlu0 %v1561
  %v1563 = vpop.xlane.xlu0 %1562
  %v1564 = vsel %vm1143, %v1425, 0.0
  %1565 = vadd.xlane.f32.xlu0 %v1564
  %v1566 = vpop.xlane.xlu0 %1565
  %v1567 = vsel %vm1143, %v1427, 0.0
  %1568 = vadd.xlane.f32.xlu0 %v1567
  %v1569 = vpop.xlane.xlu0 %1568
  %v1570 = vsel %vm1143, %v1429, 0.0
  %1571 = vadd.xlane.f32.xlu0 %v1570
  %v1572 = vpop.xlane.xlu0 %1571
  %v1573 = vsel %vm1143, %v1431, 0.0
  %1574 = vadd.xlane.f32.xlu0 %v1573
  %v1575 = vpop.xlane.xlu0 %1574
  %v1576 = vsel %vm1143, %v1433, 0.0
  %1577 = vadd.xlane.f32.xlu0 %v1576
  %v1578 = vpop.xlane.xlu0 %1577
  %v1579 = vsel %vm1143, %v1435, 0.0
  %1580 = vadd.xlane.f32.xlu0 %v1579
  %v1581 = vpop.xlane.xlu0 %1580
  %v1582 = vsel %vm1143, %v1437, 0.0
  %1583 = vadd.xlane.f32.xlu0 %v1582
  %v1584 = vpop.xlane.xlu0 %1583
  %v1585 = vsel %vm1143, %v1439, 0.0
  %1586 = vadd.xlane.f32.xlu0 %v1585
  %v1587 = vpop.xlane.xlu0 %1586
  %v1588 = vsel %vm1143, %v1441, 0.0
  %1589 = vadd.xlane.f32.xlu0 %v1588
  %v1590 = vpop.xlane.xlu0 %1589
  %v1591 = vsel %vm1143, %v1443, 0.0
  %1592 = vadd.xlane.f32.xlu0 %v1591
  %v1593 = vpop.xlane.xlu0 %1592
  %v1594 = vsel %vm1143, %v1445, 0.0
  %1595 = vadd.xlane.f32.xlu0 %v1594
  %v1596 = vpop.xlane.xlu0 %1595
  %v1597 = vsel %vm1143, %v1447, 0.0
  %1598 = vadd.xlane.f32.xlu0 %v1597
  %v1599 = vpop.xlane.xlu0 %1598
  %v1600 = vsel %vm1143, %v1449, 0.0
  %1601 = vadd.xlane.f32.xlu0 %v1600
  %v1602 = vpop.xlane.xlu0 %1601
  %v1603 = vsel %vm1143, %v1451, 0.0
  %1604 = vadd.xlane.f32.xlu0 %v1603
  %v1605 = vpop.xlane.xlu0 %1604
  %v1606 = vsel %vm1143, %v1453, 0.0
  %1607 = vadd.xlane.f32.xlu0 %v1606
  %v1608 = vpop.xlane.xlu0 %1607
  %v1609 = vsel %vm1143, %v1455, 0.0
  %1610 = vadd.xlane.f32.xlu0 %v1609
  %v1611 = vpop.xlane.xlu0 %1610
  %v1612 = vsel %vm1143, %v1457, 0.0
  %1613 = vadd.xlane.f32.xlu0 %v1612
  %v1614 = vpop.xlane.xlu0 %1613
  %v1615 = vsel %vm1143, %v1459, 0.0
  %1616 = vadd.xlane.f32.xlu0 %v1615
  %v1617 = vpop.xlane.xlu0 %1616
  %v1618 = vsel %vm1143, %v1461, 0.0
  %1619 = vadd.xlane.f32.xlu0 %v1618
  %v1620 = vpop.xlane.xlu0 %1619
  %v1621 = vsel %vm1143, %v1463, 0.0
  %1622 = vadd.xlane.f32.xlu0 %v1621
  %v1623 = vpop.xlane.xlu0 %1622
  %v1624 = vsel %vm1143, %v1465, 0.0
  %1625 = vadd.xlane.f32.xlu0 %v1624
  %v1626 = vpop.xlane.xlu0 %1625
  %v1627 = vsel %vm1143, %v1467, 0.0
  %1628 = vadd.xlane.f32.xlu0 %v1627
  %v1629 = vpop.xlane.xlu0 %1628
  %v1630 = vsel %vm1143, %v1469, 0.0
  %1631 = vadd.xlane.f32.xlu0 %v1630
  %v1632 = vpop.xlane.xlu0 %1631
  %v1633 = vsel %vm1143, %v1471, 0.0
  %1634 = vadd.xlane.f32.xlu0 %v1633
  %v1635 = vpop.xlane.xlu0 %1634
  %v1636 = vsel %vm1143, %v1473, 0.0
  %1637 = vadd.xlane.f32.xlu0 %v1636
  %v1638 = vpop.xlane.xlu0 %1637
  %v1639 = vsel %vm1143, %v1475, 0.0
  %1640 = vadd.xlane.f32.xlu0 %v1639
  %v1641 = vpop.xlane.xlu0 %1640
  %v1642 = vsel %vm1143, %v1477, 0.0
  %1643 = vadd.xlane.f32.xlu0 %v1642
  %v1644 = vpop.xlane.xlu0 %1643
  %v1645 = vsel %vm1143, %v1479, 0.0
  %1646 = vadd.xlane.f32.xlu0 %v1645
  %v1647 = vpop.xlane.xlu0 %1646
  %v1648 = vsel %vm1143, %v1481, 0.0
  %1649 = vadd.xlane.f32.xlu0 %v1648
  %v1650 = vpop.xlane.xlu0 %1649
  %v1651 = vsel %vm1143, %v1483, 0.0
  %1652 = vadd.xlane.f32.xlu0 %v1651
  %v1653 = vpop.xlane.xlu0 %1652
  %v1654 = vsel %vm1143, %v1485, 0.0
  %1655 = vadd.xlane.f32.xlu0 %v1654
  %v1656 = vpop.xlane.xlu0 %1655
  %v1657 = vsel %vm1143, %v1487, 0.0
  %1658 = vadd.xlane.f32.xlu0 %v1657
  %v1659 = vpop.xlane.xlu0 %1658
  %v1660 = vsel %vm1143, %v1489, 0.0
  %1661 = vadd.xlane.f32.xlu0 %v1660
  %v1662 = vpop.xlane.xlu0 %1661
  %v1663 = vsel %vm1143, %v1491, 0.0
  %1664 = vadd.xlane.f32.xlu0 %v1663
  %v1665 = vpop.xlane.xlu0 %1664
  %v1666 = vsel %vm1143, %v1493, 0.0
  %1667 = vadd.xlane.f32.xlu0 %v1666
  %v1668 = vpop.xlane.xlu0 %1667
  %v1669 = vsel %vm1143, %v1495, 0.0
  %1670 = vadd.xlane.f32.xlu0 %v1669
  %v1671 = vpop.xlane.xlu0 %1670
  %v1672 = vsel %vm1143, %v1497, 0.0
  %1673 = vadd.xlane.f32.xlu0 %v1672
  %v1674 = vpop.xlane.xlu0 %1673
  %v1675 = vsel %vm1143, %v1499, 0.0
  %1676 = vadd.xlane.f32.xlu0 %v1675
  %v1677 = vpop.xlane.xlu0 %1676
  %v1678 = vsel %vm1143, %v1501, 0.0
  %1679 = vadd.xlane.f32.xlu0 %v1678
  %v1680 = vpop.xlane.xlu0 %1679
  %v1681 = vsel %vm1143, %v1503, 0.0
  %1682 = vadd.xlane.f32.xlu0 %v1681
  %v1683 = vpop.xlane.xlu0 %1682
  %v1684 = vsel %vm1143, %v1505, 0.0
  %1685 = vadd.xlane.f32.xlu0 %v1684
  %v1686 = vpop.xlane.xlu0 %1685
  %v1687 = vsel %vm1143, %v1507, 0.0
  %1688 = vadd.xlane.f32.xlu0 %v1687
  %v1689 = vpop.xlane.xlu0 %1688
  %v1690 = vsel %vm1143, %v1509, 0.0
  %1691 = vadd.xlane.f32.xlu0 %v1690
  %v1692 = vpop.xlane.xlu0 %1691
  %v1693 = vsel %vm1143, %v1511, 0.0
  %1694 = vadd.xlane.f32.xlu0 %v1693
  %v1695 = vpop.xlane.xlu0 %1694
  %v1696 = vsel %vm1143, %v1513, 0.0
  %1697 = vadd.xlane.f32.xlu0 %v1696
  %v1698 = vpop.xlane.xlu0 %1697
  %v1699 = vsel %vm1143, %v1515, 0.0
  %1700 = vadd.xlane.f32.xlu0 %v1699
  %v1701 = vpop.xlane.xlu0 %1700
  %v1702 = vsel %vm1143, %v1517, 0.0
  %1703 = vadd.xlane.f32.xlu0 %v1702
  %v1704 = vpop.xlane.xlu0 %1703
  %v1705 = vsel %vm1143, %v1519, 0.0
  %1706 = vadd.xlane.f32.xlu0 %v1705
  %v1707 = vpop.xlane.xlu0 %1706
  %v1708 = vsel %vm1143, %v1521, 0.0
  %1709 = vadd.xlane.f32.xlu0 %v1708
  %v1710 = vpop.xlane.xlu0 %1709
  %v1711 = vsel %vm1143, %v1523, 0.0
  %1712 = vadd.xlane.f32.xlu0 %v1711
  %v1713 = vpop.xlane.xlu0 %1712
  %v1714 = vsel %vm1143, %v1525, 0.0
  %1715 = vadd.xlane.f32.xlu0 %v1714
  %v1716 = vpop.xlane.xlu0 %1715
  %v1717 = vsel %vm1143, %v1527, 0.0
  %1718 = vadd.xlane.f32.xlu0 %v1717
  %v1719 = vpop.xlane.xlu0 %1718
  %v1720 = vrcp.pop %v1530
  %v1721 = vrcp.pop %v1533
  %v1722 = vrcp.pop %v1536
  %v1723 = vrcp.pop %v1539
  %v1724 = vrcp.pop %v1542
  %v1725 = vrcp.pop %v1545
  %v1726 = vrcp.pop %v1548
  %v1727 = vrcp.pop %v1551
  %v1728 = vrcp.pop %v1554
  %v1729 = vrcp.pop %v1557
  %v1730 = vrcp.pop %v1560
  %v1731 = vrcp.pop %v1563
  %v1732 = vrcp.pop %v1566
  %v1733 = vrcp.pop %v1569
  %v1734 = vrcp.pop %v1572
  %v1735 = vrcp.pop %v1575
  %v1736 = vrcp.pop %v1578
  %v1737 = vrcp.pop %v1581
  %v1738 = vrcp.pop %v1584
  %v1739 = vrcp.pop %v1587
  %v1740 = vrcp.pop %v1590
  %v1741 = vrcp.pop %v1593
  %v1742 = vrcp.pop %v1596
  %v1743 = vrcp.pop %v1599
  %v1744 = vrcp.pop %v1602
  %v1745 = vrcp.pop %v1605
  %v1746 = vrcp.pop %v1608
  %v1747 = vrcp.pop %v1611
  %v1748 = vrcp.pop %v1614
  %v1749 = vrcp.pop %v1617
  %v1750 = vrcp.pop %v1620
  %v1751 = vrcp.pop %v1623
  %v1752 = vrcp.pop %v1626
  %v1753 = vrcp.pop %v1629
  %v1754 = vrcp.pop %v1632
  %v1755 = vrcp.pop %v1635
  %v1756 = vrcp.pop %v1638
  %v1757 = vrcp.pop %v1641
  %v1758 = vrcp.pop %v1644
  %v1759 = vrcp.pop %v1647
  %v1760 = vrcp.pop %v1650
  %v1761 = vrcp.pop %v1653
  %v1762 = vrcp.pop %v1656
  %v1763 = vrcp.pop %v1659
  %v1764 = vrcp.pop %v1662
  %v1765 = vrcp.pop %v1665
  %v1766 = vrcp.pop %v1668
  %v1767 = vrcp.pop %v1671
  %v1768 = vrcp.pop %v1674
  %v1769 = vrcp.pop %v1677
  %v1770 = vrcp.pop %v1680
  %v1771 = vrcp.pop %v1683
  %v1772 = vrcp.pop %v1686
  %v1773 = vrcp.pop %v1689
  %v1774 = vrcp.pop %v1692
  %v1775 = vrcp.pop %v1695
  %v1776 = vrcp.pop %v1698
  %v1777 = vrcp.pop %v1701
  %v1778 = vrcp.pop %v1704
  %v1779 = vrcp.pop %v1707
  %v1780 = vrcp.pop %v1710
  %v1781 = vrcp.pop %v1713
  %v1782 = vrcp.pop %v1716
  %v1783 = vrcp.pop %v1719
  %v1784 = vmul.f32 %v1401, %v1720
  %v1785 = vmul.f32 %v1403, %v1721
  %v1786 = vmul.f32 %v1405, %v1722
  %v1787 = vmul.f32 %v1407, %v1723
  %v1788 = vmul.f32 %v1409, %v1724
  %v1789 = vmul.f32 %v1411, %v1725
  %v1790 = vmul.f32 %v1413, %v1726
  %v1791 = vmul.f32 %v1415, %v1727
  %v1792 = vmul.f32 %v1417, %v1728
  %v1793 = vmul.f32 %v1419, %v1729
  %v1794 = vmul.f32 %v1421, %v1730
  %v1795 = vmul.f32 %v1423, %v1731
  %v1796 = vmul.f32 %v1425, %v1732
  %v1797 = vmul.f32 %v1427, %v1733
  %v1798 = vmul.f32 %v1429, %v1734
  %v1799 = vmul.f32 %v1431, %v1735
  %v1800 = vmul.f32 %v1433, %v1736
  %v1801 = vmul.f32 %v1435, %v1737
  %v1802 = vmul.f32 %v1437, %v1738
  %v1803 = vmul.f32 %v1439, %v1739
  %v1804 = vmul.f32 %v1441, %v1740
  %v1805 = vmul.f32 %v1443, %v1741
  %v1806 = vmul.f32 %v1445, %v1742
  %v1807 = vmul.f32 %v1447, %v1743
  %v1808 = vmul.f32 %v1449, %v1744
  %v1809 = vmul.f32 %v1451, %v1745
  %v1810 = vmul.f32 %v1453, %v1746
  %v1811 = vmul.f32 %v1455, %v1747
  %v1812 = vmul.f32 %v1457, %v1748
  %v1813 = vmul.f32 %v1459, %v1749
  %v1814 = vmul.f32 %v1461, %v1750
  %v1815 = vmul.f32 %v1463, %v1751
  %v1816 = vmul.f32 %v1465, %v1752
  %v1817 = vmul.f32 %v1467, %v1753
  %v1818 = vmul.f32 %v1469, %v1754
  %v1819 = vmul.f32 %v1471, %v1755
  %v1820 = vmul.f32 %v1473, %v1756
  %v1821 = vmul.f32 %v1475, %v1757
  %v1822 = vmul.f32 %v1477, %v1758
  %v1823 = vmul.f32 %v1479, %v1759
  %v1824 = vmul.f32 %v1481, %v1760
  %v1825 = vmul.f32 %v1483, %v1761
  %v1826 = vmul.f32 %v1485, %v1762
  %v1827 = vmul.f32 %v1487, %v1763
  %v1828 = vmul.f32 %v1489, %v1764
  %v1829 = vmul.f32 %v1491, %v1765
  %v1830 = vmul.f32 %v1493, %v1766
  %v1831 = vmul.f32 %v1495, %v1767
  %v1832 = vmul.f32 %v1497, %v1768
  %v1833 = vmul.f32 %v1499, %v1769
  %v1834 = vmul.f32 %v1501, %v1770
  %v1835 = vmul.f32 %v1503, %v1771
  %v1836 = vmul.f32 %v1505, %v1772
  %v1837 = vmul.f32 %v1507, %v1773
  %v1838 = vmul.f32 %v1509, %v1774
  %v1839 = vmul.f32 %v1511, %v1775
  %v1840 = vmul.f32 %v1513, %v1776
  %v1841 = vmul.f32 %v1515, %v1777
  %v1842 = vmul.f32 %v1517, %v1778
  %v1843 = vmul.f32 %v1519, %v1779
  %v1844 = vmul.f32 %v1521, %v1780
  %v1845 = vmul.f32 %v1523, %v1781
  %v1846 = vmul.f32 %v1525, %v1782
  %v1847 = vmul.f32 %v1527, %v1783
  %v1848 = vpack.c.bf16 %v1784, %v1784
  %v1849 = vpack.c.bf16 %v1785, %v1785
  %v1850 = vpack.c.bf16 %v1786, %v1786
  %v1851 = vpack.c.bf16 %v1787, %v1787
  %v1852 = vpack.c.bf16 %v1788, %v1788
  %v1853 = vpack.c.bf16 %v1789, %v1789
  %v1854 = vpack.c.bf16 %v1790, %v1790
  %v1855 = vpack.c.bf16 %v1791, %v1791
  %v1856 = vpack.c.bf16 %v1792, %v1792
  %v1857 = vpack.c.bf16 %v1793, %v1793
  %v1858 = vpack.c.bf16 %v1794, %v1794
  %v1859 = vpack.c.bf16 %v1795, %v1795
  %v1860 = vpack.c.bf16 %v1796, %v1796
  %v1861 = vpack.c.bf16 %v1797, %v1797
  %v1862 = vpack.c.bf16 %v1798, %v1798
  %v1863 = vpack.c.bf16 %v1799, %v1799
  %v1864 = vpack.c.bf16 %v1800, %v1800
  %v1865 = vpack.c.bf16 %v1801, %v1801
  %v1866 = vpack.c.bf16 %v1802, %v1802
  %v1867 = vpack.c.bf16 %v1803, %v1803
  %v1868 = vpack.c.bf16 %v1804, %v1804
  %v1869 = vpack.c.bf16 %v1805, %v1805
  %v1870 = vpack.c.bf16 %v1806, %v1806
  %v1871 = vpack.c.bf16 %v1807, %v1807
  %v1872 = vpack.c.bf16 %v1808, %v1808
  %v1873 = vpack.c.bf16 %v1809, %v1809
  %v1874 = vpack.c.bf16 %v1810, %v1810
  %v1875 = vpack.c.bf16 %v1811, %v1811
  %v1876 = vpack.c.bf16 %v1812, %v1812
  %v1877 = vpack.c.bf16 %v1813, %v1813
  %v1878 = vpack.c.bf16 %v1814, %v1814
  %v1879 = vpack.c.bf16 %v1815, %v1815
  %v1880 = vpack.c.bf16 %v1816, %v1816
  %v1881 = vpack.c.bf16 %v1817, %v1817
  %v1882 = vpack.c.bf16 %v1818, %v1818
  %v1883 = vpack.c.bf16 %v1819, %v1819
  %v1884 = vpack.c.bf16 %v1820, %v1820
  %v1885 = vpack.c.bf16 %v1821, %v1821
  %v1886 = vpack.c.bf16 %v1822, %v1822
  %v1887 = vpack.c.bf16 %v1823, %v1823
  %v1888 = vpack.c.bf16 %v1824, %v1824
  %v1889 = vpack.c.bf16 %v1825, %v1825
  %v1890 = vpack.c.bf16 %v1826, %v1826
  %v1891 = vpack.c.bf16 %v1827, %v1827
  %v1892 = vpack.c.bf16 %v1828, %v1828
  %v1893 = vpack.c.bf16 %v1829, %v1829
  %v1894 = vpack.c.bf16 %v1830, %v1830
  %v1895 = vpack.c.bf16 %v1831, %v1831
  %v1896 = vpack.c.bf16 %v1832, %v1832
  %v1897 = vpack.c.bf16 %v1833, %v1833
  %v1898 = vpack.c.bf16 %v1834, %v1834
  %v1899 = vpack.c.bf16 %v1835, %v1835
  %v1900 = vpack.c.bf16 %v1836, %v1836
  %v1901 = vpack.c.bf16 %v1837, %v1837
  %v1902 = vpack.c.bf16 %v1838, %v1838
  %v1903 = vpack.c.bf16 %v1839, %v1839
  %v1904 = vpack.c.bf16 %v1840, %v1840
  %v1905 = vpack.c.bf16 %v1841, %v1841
  %v1906 = vpack.c.bf16 %v1842, %v1842
  %v1907 = vpack.c.bf16 %v1843, %v1843
  %v1908 = vpack.c.bf16 %v1844, %v1844
  %v1909 = vpack.c.bf16 %v1845, %v1845
  %v1910 = vpack.c.bf16 %v1846, %v1846
  %v1911 = vpack.c.bf16 %v1847, %v1847
  %v1914 = vunpack.c.l.b16 %v1848
  %v1915 = vunpack.c.l.b16 %v1849
  %v1916 = vpack.c.b16 %v1915, %v1914
  %1917 = vrot.lane.b32.xlu0 %v272, 64
  %v1918 = vpop.permute.xlu0 %1917
  %v1921 = vsel %vm1143, %v1916, 0
  %1923 = vmatpush.bf16.msra.mxu0 0
  %1924 = vmatpush.bf16.msra.mxu0 0
  %1925 = vmatpush.bf16.msra.mxu0 0
  %1926 = vmatpush.bf16.msra.mxu0 0
  %1927 = vmatpush.bf16.msra.mxu0 0
  %1928 = vmatpush.bf16.msra.mxu0 0
  %1929 = vmatpush.bf16.msra.mxu0 0
  %1930 = vmatpush.bf16.msra.mxu0 %v1918
  %1931 = vmatmul.bf16.gmra.mxu0 %v1921
  %v1932 = vpop.f32.mrf.mxu0
  %v1933 = vadd.f32 0.0, %v1932
  %v1934 = vpop.f32.mrf.mxu0
  %v1935 = vadd.f32 0.0, %v1934
  %1936 = vdwg.mxu0
  %v1939 = vunpack.c.l.b16 %v1850
  %v1940 = vunpack.c.l.b16 %v1851
  %v1941 = vpack.c.b16 %v1940, %v1939
  %1942 = vrot.lane.b32.xlu0 %v298, 64
  %v1943 = vpop.permute.xlu0 %1942
  %v1946 = vsel %vm1143, %v1941, 0
  %1948 = vmatpush.bf16.msra.mxu0 0
  %1949 = vmatpush.bf16.msra.mxu0 0
  %1950 = vmatpush.bf16.msra.mxu0 0
  %1951 = vmatpush.bf16.msra.mxu0 0
  %1952 = vmatpush.bf16.msra.mxu0 0
  %1953 = vmatpush.bf16.msra.mxu0 0
  %1954 = vmatpush.bf16.msra.mxu0 0
  %1955 = vmatpush.bf16.msra.mxu0 %v1943
  %1956 = vmatmul.bf16.gmra.mxu0 %v1946
  %v1957 = vpop.f32.mrf.mxu0
  %v1958 = vadd.f32 0.0, %v1957
  %v1959 = vpop.f32.mrf.mxu0
  %v1960 = vadd.f32 0.0, %v1959
  %1961 = vdwg.mxu0
  %v1964 = vunpack.c.l.b16 %v1852
  %v1965 = vunpack.c.l.b16 %v1853
  %v1966 = vpack.c.b16 %v1965, %v1964
  %1967 = vrot.lane.b32.xlu0 %v323, 64
  %v1968 = vpop.permute.xlu0 %1967
  %v1971 = vsel %vm1143, %v1966, 0
  %1973 = vmatpush.bf16.msra.mxu0 0
  %1974 = vmatpush.bf16.msra.mxu0 0
  %1975 = vmatpush.bf16.msra.mxu0 0
  %1976 = vmatpush.bf16.msra.mxu0 0
  %1977 = vmatpush.bf16.msra.mxu0 0
  %1978 = vmatpush.bf16.msra.mxu0 0
  %1979 = vmatpush.bf16.msra.mxu0 0
  %1980 = vmatpush.bf16.msra.mxu0 %v1968
  %1981 = vmatmul.bf16.gmra.mxu0 %v1971
  %v1982 = vpop.f32.mrf.mxu0
  %v1983 = vadd.f32 0.0, %v1982
  %v1984 = vpop.f32.mrf.mxu0
  %v1985 = vadd.f32 0.0, %v1984
  %1986 = vdwg.mxu0
  %v1989 = vunpack.c.l.b16 %v1854
  %v1990 = vunpack.c.l.b16 %v1855
  %v1991 = vpack.c.b16 %v1990, %v1989
  %1992 = vrot.lane.b32.xlu0 %v348, 64
  %v1993 = vpop.permute.xlu0 %1992
  %v1996 = vsel %vm1143, %v1991, 0
  %1998 = vmatpush.bf16.msra.mxu0 0
  %1999 = vmatpush.bf16.msra.mxu0 0
  %2000 = vmatpush.bf16.msra.mxu0 0
  %2001 = vmatpush.bf16.msra.mxu0 0
  %2002 = vmatpush.bf16.msra.mxu0 0
  %2003 = vmatpush.bf16.msra.mxu0 0
  %2004 = vmatpush.bf16.msra.mxu0 0
  %2005 = vmatpush.bf16.msra.mxu0 %v1993
  %2006 = vmatmul.bf16.gmra.mxu0 %v1996
  %v2007 = vpop.f32.mrf.mxu0
  %v2008 = vadd.f32 0.0, %v2007
  %v2009 = vpop.f32.mrf.mxu0
  %v2010 = vadd.f32 0.0, %v2009
  %2011 = vdwg.mxu0
  %v2014 = vunpack.c.l.b16 %v1856
  %v2015 = vunpack.c.l.b16 %v1857
  %v2016 = vpack.c.b16 %v2015, %v2014
  %2017 = vrot.lane.b32.xlu0 %v373, 64
  %v2018 = vpop.permute.xlu0 %2017
  %v2021 = vsel %vm1143, %v2016, 0
  %2023 = vmatpush.bf16.msra.mxu0 0
  %2024 = vmatpush.bf16.msra.mxu0 0
  %2025 = vmatpush.bf16.msra.mxu0 0
  %2026 = vmatpush.bf16.msra.mxu0 0
  %2027 = vmatpush.bf16.msra.mxu0 0
  %2028 = vmatpush.bf16.msra.mxu0 0
  %2029 = vmatpush.bf16.msra.mxu0 0
  %2030 = vmatpush.bf16.msra.mxu0 %v2018
  %2031 = vmatmul.bf16.gmra.mxu0 %v2021
  %v2032 = vpop.f32.mrf.mxu0
  %v2033 = vadd.f32 0.0, %v2032
  %v2034 = vpop.f32.mrf.mxu0
  %v2035 = vadd.f32 0.0, %v2034
  %2036 = vdwg.mxu0
  %v2039 = vunpack.c.l.b16 %v1858
  %v2040 = vunpack.c.l.b16 %v1859
  %v2041 = vpack.c.b16 %v2040, %v2039
  %2042 = vrot.lane.b32.xlu0 %v398, 64
  %v2043 = vpop.permute.xlu0 %2042
  %v2046 = vsel %vm1143, %v2041, 0
  %2048 = vmatpush.bf16.msra.mxu0 0
  %2049 = vmatpush.bf16.msra.mxu0 0
  %2050 = vmatpush.bf16.msra.mxu0 0
  %2051 = vmatpush.bf16.msra.mxu0 0
  %2052 = vmatpush.bf16.msra.mxu0 0
  %2053 = vmatpush.bf16.msra.mxu0 0
  %2054 = vmatpush.bf16.msra.mxu0 0
  %2055 = vmatpush.bf16.msra.mxu0 %v2043
  %2056 = vmatmul.bf16.gmra.mxu0 %v2046
  %v2057 = vpop.f32.mrf.mxu0
  %v2058 = vadd.f32 0.0, %v2057
  %v2059 = vpop.f32.mrf.mxu0
  %v2060 = vadd.f32 0.0, %v2059
  %2061 = vdwg.mxu0
  %v2064 = vunpack.c.l.b16 %v1860
  %v2065 = vunpack.c.l.b16 %v1861
  %v2066 = vpack.c.b16 %v2065, %v2064
  %2067 = vrot.lane.b32.xlu0 %v423, 64
  %v2068 = vpop.permute.xlu0 %2067
  %v2071 = vsel %vm1143, %v2066, 0
  %2073 = vmatpush.bf16.msra.mxu0 0
  %2074 = vmatpush.bf16.msra.mxu0 0
  %2075 = vmatpush.bf16.msra.mxu0 0
  %2076 = vmatpush.bf16.msra.mxu0 0
  %2077 = vmatpush.bf16.msra.mxu0 0
  %2078 = vmatpush.bf16.msra.mxu0 0
  %2079 = vmatpush.bf16.msra.mxu0 0
  %2080 = vmatpush.bf16.msra.mxu0 %v2068
  %2081 = vmatmul.bf16.gmra.mxu0 %v2071
  %v2082 = vpop.f32.mrf.mxu0
  %v2083 = vadd.f32 0.0, %v2082
  %v2084 = vpop.f32.mrf.mxu0
  %v2085 = vadd.f32 0.0, %v2084
  %2086 = vdwg.mxu0
  %v2089 = vunpack.c.l.b16 %v1862
  %v2090 = vunpack.c.l.b16 %v1863
  %v2091 = vpack.c.b16 %v2090, %v2089
  %2092 = vrot.lane.b32.xlu0 %v448, 64
  %v2093 = vpop.permute.xlu0 %2092
  %v2096 = vsel %vm1143, %v2091, 0
  %2098 = vmatpush.bf16.msra.mxu0 0
  %2099 = vmatpush.bf16.msra.mxu0 0
  %2100 = vmatpush.bf16.msra.mxu0 0
  %2101 = vmatpush.bf16.msra.mxu0 0
  %2102 = vmatpush.bf16.msra.mxu0 0
  %2103 = vmatpush.bf16.msra.mxu0 0
  %2104 = vmatpush.bf16.msra.mxu0 0
  %2105 = vmatpush.bf16.msra.mxu0 %v2093
  %2106 = vmatmul.bf16.gmra.mxu0 %v2096
  %v2107 = vpop.f32.mrf.mxu0
  %v2108 = vadd.f32 0.0, %v2107
  %v2109 = vpop.f32.mrf.mxu0
  %v2110 = vadd.f32 0.0, %v2109
  %2111 = vdwg.mxu0
  %v2114 = vunpack.c.l.b16 %v1864
  %v2115 = vunpack.c.l.b16 %v1865
  %v2116 = vpack.c.b16 %v2115, %v2114
  %2117 = vrot.lane.b32.xlu0 %v473, 64
  %v2118 = vpop.permute.xlu0 %2117
  %v2121 = vsel %vm1143, %v2116, 0
  %2123 = vmatpush.bf16.msra.mxu0 0
  %2124 = vmatpush.bf16.msra.mxu0 0
  %2125 = vmatpush.bf16.msra.mxu0 0
  %2126 = vmatpush.bf16.msra.mxu0 0
  %2127 = vmatpush.bf16.msra.mxu0 0
  %2128 = vmatpush.bf16.msra.mxu0 0
  %2129 = vmatpush.bf16.msra.mxu0 0
  %2130 = vmatpush.bf16.msra.mxu0 %v2118
  %2131 = vmatmul.bf16.gmra.mxu0 %v2121
  %v2132 = vpop.f32.mrf.mxu0
  %v2133 = vadd.f32 0.0, %v2132
  %v2134 = vpop.f32.mrf.mxu0
  %v2135 = vadd.f32 0.0, %v2134
  %2136 = vdwg.mxu0
  %v2139 = vunpack.c.l.b16 %v1866
  %v2140 = vunpack.c.l.b16 %v1867
  %v2141 = vpack.c.b16 %v2140, %v2139
  %2142 = vrot.lane.b32.xlu0 %v498, 64
  %v2143 = vpop.permute.xlu0 %2142
  %v2146 = vsel %vm1143, %v2141, 0
  %2148 = vmatpush.bf16.msra.mxu0 0
  %2149 = vmatpush.bf16.msra.mxu0 0
  %2150 = vmatpush.bf16.msra.mxu0 0
  %2151 = vmatpush.bf16.msra.mxu0 0
  %2152 = vmatpush.bf16.msra.mxu0 0
  %2153 = vmatpush.bf16.msra.mxu0 0
  %2154 = vmatpush.bf16.msra.mxu0 0
  %2155 = vmatpush.bf16.msra.mxu0 %v2143
  %2156 = vmatmul.bf16.gmra.mxu0 %v2146
  %v2157 = vpop.f32.mrf.mxu0
  %v2158 = vadd.f32 0.0, %v2157
  %v2159 = vpop.f32.mrf.mxu0
  %v2160 = vadd.f32 0.0, %v2159
  %2161 = vdwg.mxu0
  %v2164 = vunpack.c.l.b16 %v1868
  %v2165 = vunpack.c.l.b16 %v1869
  %v2166 = vpack.c.b16 %v2165, %v2164
  %2167 = vrot.lane.b32.xlu0 %v523, 64
  %v2168 = vpop.permute.xlu0 %2167
  %v2171 = vsel %vm1143, %v2166, 0
  %2173 = vmatpush.bf16.msra.mxu0 0
  %2174 = vmatpush.bf16.msra.mxu0 0
  %2175 = vmatpush.bf16.msra.mxu0 0
  %2176 = vmatpush.bf16.msra.mxu0 0
  %2177 = vmatpush.bf16.msra.mxu0 0
  %2178 = vmatpush.bf16.msra.mxu0 0
  %2179 = vmatpush.bf16.msra.mxu0 0
  %2180 = vmatpush.bf16.msra.mxu0 %v2168
  %2181 = vmatmul.bf16.gmra.mxu0 %v2171
  %v2182 = vpop.f32.mrf.mxu0
  %v2183 = vadd.f32 0.0, %v2182
  %v2184 = vpop.f32.mrf.mxu0
  %v2185 = vadd.f32 0.0, %v2184
  %2186 = vdwg.mxu0
  %v2189 = vunpack.c.l.b16 %v1870
  %v2190 = vunpack.c.l.b16 %v1871
  %v2191 = vpack.c.b16 %v2190, %v2189
  %2192 = vrot.lane.b32.xlu0 %v548, 64
  %v2193 = vpop.permute.xlu0 %2192
  %v2196 = vsel %vm1143, %v2191, 0
  %2198 = vmatpush.bf16.msra.mxu0 0
  %2199 = vmatpush.bf16.msra.mxu0 0
  %2200 = vmatpush.bf16.msra.mxu0 0
  %2201 = vmatpush.bf16.msra.mxu0 0
  %2202 = vmatpush.bf16.msra.mxu0 0
  %2203 = vmatpush.bf16.msra.mxu0 0
  %2204 = vmatpush.bf16.msra.mxu0 0
  %2205 = vmatpush.bf16.msra.mxu0 %v2193
  %2206 = vmatmul.bf16.gmra.mxu0 %v2196
  %v2207 = vpop.f32.mrf.mxu0
  %v2208 = vadd.f32 0.0, %v2207
  %v2209 = vpop.f32.mrf.mxu0
  %v2210 = vadd.f32 0.0, %v2209
  %2211 = vdwg.mxu0
  %v2214 = vunpack.c.l.b16 %v1872
  %v2215 = vunpack.c.l.b16 %v1873
  %v2216 = vpack.c.b16 %v2215, %v2214
  %2217 = vrot.lane.b32.xlu0 %v573, 64
  %v2218 = vpop.permute.xlu0 %2217
  %v2221 = vsel %vm1143, %v2216, 0
  %2223 = vmatpush.bf16.msra.mxu0 0
  %2224 = vmatpush.bf16.msra.mxu0 0
  %2225 = vmatpush.bf16.msra.mxu0 0
  %2226 = vmatpush.bf16.msra.mxu0 0
  %2227 = vmatpush.bf16.msra.mxu0 0
  %2228 = vmatpush.bf16.msra.mxu0 0
  %2229 = vmatpush.bf16.msra.mxu0 0
  %2230 = vmatpush.bf16.msra.mxu0 %v2218
  %2231 = vmatmul.bf16.gmra.mxu0 %v2221
  %v2232 = vpop.f32.mrf.mxu0
  %v2233 = vadd.f32 0.0, %v2232
  %v2234 = vpop.f32.mrf.mxu0
  %v2235 = vadd.f32 0.0, %v2234
  %2236 = vdwg.mxu0
  %v2239 = vunpack.c.l.b16 %v1874
  %v2240 = vunpack.c.l.b16 %v1875
  %v2241 = vpack.c.b16 %v2240, %v2239
  %2242 = vrot.lane.b32.xlu0 %v598, 64
  %v2243 = vpop.permute.xlu0 %2242
  %v2246 = vsel %vm1143, %v2241, 0
  %2248 = vmatpush.bf16.msra.mxu0 0
  %2249 = vmatpush.bf16.msra.mxu0 0
  %2250 = vmatpush.bf16.msra.mxu0 0
  %2251 = vmatpush.bf16.msra.mxu0 0
  %2252 = vmatpush.bf16.msra.mxu0 0
  %2253 = vmatpush.bf16.msra.mxu0 0
  %2254 = vmatpush.bf16.msra.mxu0 0
  %2255 = vmatpush.bf16.msra.mxu0 %v2243
  %2256 = vmatmul.bf16.gmra.mxu0 %v2246
  %v2257 = vpop.f32.mrf.mxu0
  %v2258 = vadd.f32 0.0, %v2257
  %v2259 = vpop.f32.mrf.mxu0
  %v2260 = vadd.f32 0.0, %v2259
  %2261 = vdwg.mxu0
  %v2264 = vunpack.c.l.b16 %v1876
  %v2265 = vunpack.c.l.b16 %v1877
  %v2266 = vpack.c.b16 %v2265, %v2264
  %2267 = vrot.lane.b32.xlu0 %v623, 64
  %v2268 = vpop.permute.xlu0 %2267
  %v2271 = vsel %vm1143, %v2266, 0
  %2273 = vmatpush.bf16.msra.mxu0 0
  %2274 = vmatpush.bf16.msra.mxu0 0
  %2275 = vmatpush.bf16.msra.mxu0 0
  %2276 = vmatpush.bf16.msra.mxu0 0
  %2277 = vmatpush.bf16.msra.mxu0 0
  %2278 = vmatpush.bf16.msra.mxu0 0
  %2279 = vmatpush.bf16.msra.mxu0 0
  %2280 = vmatpush.bf16.msra.mxu0 %v2268
  %2281 = vmatmul.bf16.gmra.mxu0 %v2271
  %v2282 = vpop.f32.mrf.mxu0
  %v2283 = vadd.f32 0.0, %v2282
  %v2284 = vpop.f32.mrf.mxu0
  %v2285 = vadd.f32 0.0, %v2284
  %2286 = vdwg.mxu0
  %v2289 = vunpack.c.l.b16 %v1878
  %v2290 = vunpack.c.l.b16 %v1879
  %v2291 = vpack.c.b16 %v2290, %v2289
  %2292 = vrot.lane.b32.xlu0 %v648, 64
  %v2293 = vpop.permute.xlu0 %2292
  %v2296 = vsel %vm1143, %v2291, 0
  %2298 = vmatpush.bf16.msra.mxu0 0
  %2299 = vmatpush.bf16.msra.mxu0 0
  %2300 = vmatpush.bf16.msra.mxu0 0
  %2301 = vmatpush.bf16.msra.mxu0 0
  %2302 = vmatpush.bf16.msra.mxu0 0
  %2303 = vmatpush.bf16.msra.mxu0 0
  %2304 = vmatpush.bf16.msra.mxu0 0
  %2305 = vmatpush.bf16.msra.mxu0 %v2293
  %2306 = vmatmul.bf16.gmra.mxu0 %v2296
  %v2307 = vpop.f32.mrf.mxu0
  %v2308 = vadd.f32 0.0, %v2307
  %v2309 = vpop.f32.mrf.mxu0
  %v2310 = vadd.f32 0.0, %v2309
  %2311 = vdwg.mxu0
  %v2314 = vunpack.c.l.b16 %v1880
  %v2315 = vunpack.c.l.b16 %v1881
  %v2316 = vpack.c.b16 %v2315, %v2314
  %2317 = vrot.lane.b32.xlu0 %v673, 64
  %v2318 = vpop.permute.xlu0 %2317
  %v2321 = vsel %vm1143, %v2316, 0
  %2323 = vmatpush.bf16.msra.mxu0 0
  %2324 = vmatpush.bf16.msra.mxu0 0
  %2325 = vmatpush.bf16.msra.mxu0 0
  %2326 = vmatpush.bf16.msra.mxu0 0
  %2327 = vmatpush.bf16.msra.mxu0 0
  %2328 = vmatpush.bf16.msra.mxu0 0
  %2329 = vmatpush.bf16.msra.mxu0 0
  %2330 = vmatpush.bf16.msra.mxu0 %v2318
  %2331 = vmatmul.bf16.gmra.mxu0 %v2321
  %v2332 = vpop.f32.mrf.mxu0
  %v2333 = vadd.f32 0.0, %v2332
  %v2334 = vpop.f32.mrf.mxu0
  %v2335 = vadd.f32 0.0, %v2334
  %2336 = vdwg.mxu0
  %v2339 = vunpack.c.l.b16 %v1882
  %v2340 = vunpack.c.l.b16 %v1883
  %v2341 = vpack.c.b16 %v2340, %v2339
  %2342 = vrot.lane.b32.xlu0 %v698, 64
  %v2343 = vpop.permute.xlu0 %2342
  %v2346 = vsel %vm1143, %v2341, 0
  %2348 = vmatpush.bf16.msra.mxu0 0
  %2349 = vmatpush.bf16.msra.mxu0 0
  %2350 = vmatpush.bf16.msra.mxu0 0
  %2351 = vmatpush.bf16.msra.mxu0 0
  %2352 = vmatpush.bf16.msra.mxu0 0
  %2353 = vmatpush.bf16.msra.mxu0 0
  %2354 = vmatpush.bf16.msra.mxu0 0
  %2355 = vmatpush.bf16.msra.mxu0 %v2343
  %2356 = vmatmul.bf16.gmra.mxu0 %v2346
  %v2357 = vpop.f32.mrf.mxu0
  %v2358 = vadd.f32 0.0, %v2357
  %v2359 = vpop.f32.mrf.mxu0
  %v2360 = vadd.f32 0.0, %v2359
  %2361 = vdwg.mxu0
  %v2364 = vunpack.c.l.b16 %v1884
  %v2365 = vunpack.c.l.b16 %v1885
  %v2366 = vpack.c.b16 %v2365, %v2364
  %2367 = vrot.lane.b32.xlu0 %v723, 64
  %v2368 = vpop.permute.xlu0 %2367
  %v2371 = vsel %vm1143, %v2366, 0
  %2373 = vmatpush.bf16.msra.mxu0 0
  %2374 = vmatpush.bf16.msra.mxu0 0
  %2375 = vmatpush.bf16.msra.mxu0 0
  %2376 = vmatpush.bf16.msra.mxu0 0
  %2377 = vmatpush.bf16.msra.mxu0 0
  %2378 = vmatpush.bf16.msra.mxu0 0
  %2379 = vmatpush.bf16.msra.mxu0 0
  %2380 = vmatpush.bf16.msra.mxu0 %v2368
  %2381 = vmatmul.bf16.gmra.mxu0 %v2371
  %v2382 = vpop.f32.mrf.mxu0
  %v2383 = vadd.f32 0.0, %v2382
  %v2384 = vpop.f32.mrf.mxu0
  %v2385 = vadd.f32 0.0, %v2384
  %2386 = vdwg.mxu0
  %v2389 = vunpack.c.l.b16 %v1886
  %v2390 = vunpack.c.l.b16 %v1887
  %v2391 = vpack.c.b16 %v2390, %v2389
  %2392 = vrot.lane.b32.xlu0 %v748, 64
  %v2393 = vpop.permute.xlu0 %2392
  %v2396 = vsel %vm1143, %v2391, 0
  %2398 = vmatpush.bf16.msra.mxu0 0
  %2399 = vmatpush.bf16.msra.mxu0 0
  %2400 = vmatpush.bf16.msra.mxu0 0
  %2401 = vmatpush.bf16.msra.mxu0 0
  %2402 = vmatpush.bf16.msra.mxu0 0
  %2403 = vmatpush.bf16.msra.mxu0 0
  %2404 = vmatpush.bf16.msra.mxu0 0
  %2405 = vmatpush.bf16.msra.mxu0 %v2393
  %2406 = vmatmul.bf16.gmra.mxu0 %v2396
  %v2407 = vpop.f32.mrf.mxu0
  %v2408 = vadd.f32 0.0, %v2407
  %v2409 = vpop.f32.mrf.mxu0
  %v2410 = vadd.f32 0.0, %v2409
  %2411 = vdwg.mxu0
  %v2414 = vunpack.c.l.b16 %v1888
  %v2415 = vunpack.c.l.b16 %v1889
  %v2416 = vpack.c.b16 %v2415, %v2414
  %2417 = vrot.lane.b32.xlu0 %v773, 64
  %v2418 = vpop.permute.xlu0 %2417
  %v2421 = vsel %vm1143, %v2416, 0
  %2423 = vmatpush.bf16.msra.mxu0 0
  %2424 = vmatpush.bf16.msra.mxu0 0
  %2425 = vmatpush.bf16.msra.mxu0 0
  %2426 = vmatpush.bf16.msra.mxu0 0
  %2427 = vmatpush.bf16.msra.mxu0 0
  %2428 = vmatpush.bf16.msra.mxu0 0
  %2429 = vmatpush.bf16.msra.mxu0 0
  %2430 = vmatpush.bf16.msra.mxu0 %v2418
  %2431 = vmatmul.bf16.gmra.mxu0 %v2421
  %v2432 = vpop.f32.mrf.mxu0
  %v2433 = vadd.f32 0.0, %v2432
  %v2434 = vpop.f32.mrf.mxu0
  %v2435 = vadd.f32 0.0, %v2434
  %2436 = vdwg.mxu0
  %v2439 = vunpack.c.l.b16 %v1890
  %v2440 = vunpack.c.l.b16 %v1891
  %v2441 = vpack.c.b16 %v2440, %v2439
  %2442 = vrot.lane.b32.xlu0 %v798, 64
  %v2443 = vpop.permute.xlu0 %2442
  %v2446 = vsel %vm1143, %v2441, 0
  %2448 = vmatpush.bf16.msra.mxu0 0
  %2449 = vmatpush.bf16.msra.mxu0 0
  %2450 = vmatpush.bf16.msra.mxu0 0
  %2451 = vmatpush.bf16.msra.mxu0 0
  %2452 = vmatpush.bf16.msra.mxu0 0
  %2453 = vmatpush.bf16.msra.mxu0 0
  %2454 = vmatpush.bf16.msra.mxu0 0
  %2455 = vmatpush.bf16.msra.mxu0 %v2443
  %2456 = vmatmul.bf16.gmra.mxu0 %v2446
  %v2457 = vpop.f32.mrf.mxu0
  %v2458 = vadd.f32 0.0, %v2457
  %v2459 = vpop.f32.mrf.mxu0
  %v2460 = vadd.f32 0.0, %v2459
  %2461 = vdwg.mxu0
  %v2464 = vunpack.c.l.b16 %v1892
  %v2465 = vunpack.c.l.b16 %v1893
  %v2466 = vpack.c.b16 %v2465, %v2464
  %2467 = vrot.lane.b32.xlu0 %v823, 64
  %v2468 = vpop.permute.xlu0 %2467
  %v2471 = vsel %vm1143, %v2466, 0
  %2473 = vmatpush.bf16.msra.mxu0 0
  %2474 = vmatpush.bf16.msra.mxu0 0
  %2475 = vmatpush.bf16.msra.mxu0 0
  %2476 = vmatpush.bf16.msra.mxu0 0
  %2477 = vmatpush.bf16.msra.mxu0 0
  %2478 = vmatpush.bf16.msra.mxu0 0
  %2479 = vmatpush.bf16.msra.mxu0 0
  %2480 = vmatpush.bf16.msra.mxu0 %v2468
  %2481 = vmatmul.bf16.gmra.mxu0 %v2471
  %v2482 = vpop.f32.mrf.mxu0
  %v2483 = vadd.f32 0.0, %v2482
  %v2484 = vpop.f32.mrf.mxu0
  %v2485 = vadd.f32 0.0, %v2484
  %2486 = vdwg.mxu0
  %v2489 = vunpack.c.l.b16 %v1894
  %v2490 = vunpack.c.l.b16 %v1895
  %v2491 = vpack.c.b16 %v2490, %v2489
  %2492 = vrot.lane.b32.xlu0 %v848, 64
  %v2493 = vpop.permute.xlu0 %2492
  %v2496 = vsel %vm1143, %v2491, 0
  %2498 = vmatpush.bf16.msra.mxu0 0
  %2499 = vmatpush.bf16.msra.mxu0 0
  %2500 = vmatpush.bf16.msra.mxu0 0
  %2501 = vmatpush.bf16.msra.mxu0 0
  %2502 = vmatpush.bf16.msra.mxu0 0
  %2503 = vmatpush.bf16.msra.mxu0 0
  %2504 = vmatpush.bf16.msra.mxu0 0
  %2505 = vmatpush.bf16.msra.mxu0 %v2493
  %2506 = vmatmul.bf16.gmra.mxu0 %v2496
  %v2507 = vpop.f32.mrf.mxu0
  %v2508 = vadd.f32 0.0, %v2507
  %v2509 = vpop.f32.mrf.mxu0
  %v2510 = vadd.f32 0.0, %v2509
  %2511 = vdwg.mxu0
  %v2514 = vunpack.c.l.b16 %v1896
  %v2515 = vunpack.c.l.b16 %v1897
  %v2516 = vpack.c.b16 %v2515, %v2514
  %2517 = vrot.lane.b32.xlu0 %v873, 64
  %v2518 = vpop.permute.xlu0 %2517
  %v2521 = vsel %vm1143, %v2516, 0
  %2523 = vmatpush.bf16.msra.mxu0 0
  %2524 = vmatpush.bf16.msra.mxu0 0
  %2525 = vmatpush.bf16.msra.mxu0 0
  %2526 = vmatpush.bf16.msra.mxu0 0
  %2527 = vmatpush.bf16.msra.mxu0 0
  %2528 = vmatpush.bf16.msra.mxu0 0
  %2529 = vmatpush.bf16.msra.mxu0 0
  %2530 = vmatpush.bf16.msra.mxu0 %v2518
  %2531 = vmatmul.bf16.gmra.mxu0 %v2521
  %v2532 = vpop.f32.mrf.mxu0
  %v2533 = vadd.f32 0.0, %v2532
  %v2534 = vpop.f32.mrf.mxu0
  %v2535 = vadd.f32 0.0, %v2534
  %2536 = vdwg.mxu0
  %v2539 = vunpack.c.l.b16 %v1898
  %v2540 = vunpack.c.l.b16 %v1899
  %v2541 = vpack.c.b16 %v2540, %v2539
  %2542 = vrot.lane.b32.xlu0 %v898, 64
  %v2543 = vpop.permute.xlu0 %2542
  %v2546 = vsel %vm1143, %v2541, 0
  %2548 = vmatpush.bf16.msra.mxu0 0
  %2549 = vmatpush.bf16.msra.mxu0 0
  %2550 = vmatpush.bf16.msra.mxu0 0
  %2551 = vmatpush.bf16.msra.mxu0 0
  %2552 = vmatpush.bf16.msra.mxu0 0
  %2553 = vmatpush.bf16.msra.mxu0 0
  %2554 = vmatpush.bf16.msra.mxu0 0
  %2555 = vmatpush.bf16.msra.mxu0 %v2543
  %2556 = vmatmul.bf16.gmra.mxu0 %v2546
  %v2557 = vpop.f32.mrf.mxu0
  %v2558 = vadd.f32 0.0, %v2557
  %v2559 = vpop.f32.mrf.mxu0
  %v2560 = vadd.f32 0.0, %v2559
  %2561 = vdwg.mxu0
  %v2564 = vunpack.c.l.b16 %v1900
  %v2565 = vunpack.c.l.b16 %v1901
  %v2566 = vpack.c.b16 %v2565, %v2564
  %2567 = vrot.lane.b32.xlu0 %v923, 64
  %v2568 = vpop.permute.xlu0 %2567
  %v2571 = vsel %vm1143, %v2566, 0
  %2573 = vmatpush.bf16.msra.mxu0 0
  %2574 = vmatpush.bf16.msra.mxu0 0
  %2575 = vmatpush.bf16.msra.mxu0 0
  %2576 = vmatpush.bf16.msra.mxu0 0
  %2577 = vmatpush.bf16.msra.mxu0 0
  %2578 = vmatpush.bf16.msra.mxu0 0
  %2579 = vmatpush.bf16.msra.mxu0 0
  %2580 = vmatpush.bf16.msra.mxu0 %v2568
  %2581 = vmatmul.bf16.gmra.mxu0 %v2571
  %v2582 = vpop.f32.mrf.mxu0
  %v2583 = vadd.f32 0.0, %v2582
  %v2584 = vpop.f32.mrf.mxu0
  %v2585 = vadd.f32 0.0, %v2584
  %2586 = vdwg.mxu0
  %v2589 = vunpack.c.l.b16 %v1902
  %v2590 = vunpack.c.l.b16 %v1903
  %v2591 = vpack.c.b16 %v2590, %v2589
  %2592 = vrot.lane.b32.xlu0 %v948, 64
  %v2593 = vpop.permute.xlu0 %2592
  %v2596 = vsel %vm1143, %v2591, 0
  %2598 = vmatpush.bf16.msra.mxu0 0
  %2599 = vmatpush.bf16.msra.mxu0 0
  %2600 = vmatpush.bf16.msra.mxu0 0
  %2601 = vmatpush.bf16.msra.mxu0 0
  %2602 = vmatpush.bf16.msra.mxu0 0
  %2603 = vmatpush.bf16.msra.mxu0 0
  %2604 = vmatpush.bf16.msra.mxu0 0
  %2605 = vmatpush.bf16.msra.mxu0 %v2593
  %2606 = vmatmul.bf16.gmra.mxu0 %v2596
  %v2607 = vpop.f32.mrf.mxu0
  %v2608 = vadd.f32 0.0, %v2607
  %v2609 = vpop.f32.mrf.mxu0
  %v2610 = vadd.f32 0.0, %v2609
  %2611 = vdwg.mxu0
  %v2614 = vunpack.c.l.b16 %v1904
  %v2615 = vunpack.c.l.b16 %v1905
  %v2616 = vpack.c.b16 %v2615, %v2614
  %2617 = vrot.lane.b32.xlu0 %v973, 64
  %v2618 = vpop.permute.xlu0 %2617
  %v2621 = vsel %vm1143, %v2616, 0
  %2623 = vmatpush.bf16.msra.mxu0 0
  %2624 = vmatpush.bf16.msra.mxu0 0
  %2625 = vmatpush.bf16.msra.mxu0 0
  %2626 = vmatpush.bf16.msra.mxu0 0
  %2627 = vmatpush.bf16.msra.mxu0 0
  %2628 = vmatpush.bf16.msra.mxu0 0
  %2629 = vmatpush.bf16.msra.mxu0 0
  %2630 = vmatpush.bf16.msra.mxu0 %v2618
  %2631 = vmatmul.bf16.gmra.mxu0 %v2621
  %v2632 = vpop.f32.mrf.mxu0
  %v2633 = vadd.f32 0.0, %v2632
  %v2634 = vpop.f32.mrf.mxu0
  %v2635 = vadd.f32 0.0, %v2634
  %2636 = vdwg.mxu0
  %v2639 = vunpack.c.l.b16 %v1906
  %v2640 = vunpack.c.l.b16 %v1907
  %v2641 = vpack.c.b16 %v2640, %v2639
  %2642 = vrot.lane.b32.xlu0 %v998, 64
  %v2643 = vpop.permute.xlu0 %2642
  %v2646 = vsel %vm1143, %v2641, 0
  %2648 = vmatpush.bf16.msra.mxu0 0
  %2649 = vmatpush.bf16.msra.mxu0 0
  %2650 = vmatpush.bf16.msra.mxu0 0
  %2651 = vmatpush.bf16.msra.mxu0 0
  %2652 = vmatpush.bf16.msra.mxu0 0
  %2653 = vmatpush.bf16.msra.mxu0 0
  %2654 = vmatpush.bf16.msra.mxu0 0
  %2655 = vmatpush.bf16.msra.mxu0 %v2643
  %2656 = vmatmul.bf16.gmra.mxu0 %v2646
  %v2657 = vpop.f32.mrf.mxu0
  %v2658 = vadd.f32 0.0, %v2657
  %v2659 = vpop.f32.mrf.mxu0
  %v2660 = vadd.f32 0.0, %v2659
  %2661 = vdwg.mxu0
  %v2664 = vunpack.c.l.b16 %v1908
  %v2665 = vunpack.c.l.b16 %v1909
  %v2666 = vpack.c.b16 %v2665, %v2664
  %2667 = vrot.lane.b32.xlu0 %v1023, 64
  %v2668 = vpop.permute.xlu0 %2667
  %v2671 = vsel %vm1143, %v2666, 0
  %2673 = vmatpush.bf16.msra.mxu0 0
  %2674 = vmatpush.bf16.msra.mxu0 0
  %2675 = vmatpush.bf16.msra.mxu0 0
  %2676 = vmatpush.bf16.msra.mxu0 0
  %2677 = vmatpush.bf16.msra.mxu0 0
  %2678 = vmatpush.bf16.msra.mxu0 0
  %2679 = vmatpush.bf16.msra.mxu0 0
  %2680 = vmatpush.bf16.msra.mxu0 %v2668
  %2681 = vmatmul.bf16.gmra.mxu0 %v2671
  %v2682 = vpop.f32.mrf.mxu0
  %v2683 = vadd.f32 0.0, %v2682
  %v2684 = vpop.f32.mrf.mxu0
  %v2685 = vadd.f32 0.0, %v2684
  %2686 = vdwg.mxu0
  %v2689 = vunpack.c.l.b16 %v1910
  %v2690 = vunpack.c.l.b16 %v1911
  %v2691 = vpack.c.b16 %v2690, %v2689
  %2692 = vrot.lane.b32.xlu0 %v1048, 64
  %v2693 = vpop.permute.xlu0 %2692
  %v2696 = vsel %vm1143, %v2691, 0
  %2698 = vmatpush.bf16.msra.mxu0 0
  %2699 = vmatpush.bf16.msra.mxu0 0
  %2700 = vmatpush.bf16.msra.mxu0 0
  %2701 = vmatpush.bf16.msra.mxu0 0
  %2702 = vmatpush.bf16.msra.mxu0 0
  %2703 = vmatpush.bf16.msra.mxu0 0
  %2704 = vmatpush.bf16.msra.mxu0 0
  %2705 = vmatpush.bf16.msra.mxu0 %v2693
  %2706 = vmatmul.bf16.gmra.mxu0 %v2696
  %v2707 = vpop.f32.mrf.mxu0
  %v2708 = vadd.f32 0.0, %v2707
  %v2709 = vpop.f32.mrf.mxu0
  %v2710 = vadd.f32 0.0, %v2709
  %2711 = vdwg.mxu0
  %v2712 = vpack.c.bf16 %v1933, %v1933
  %v2713 = vpack.c.bf16 %v1935, %v1935
  %v2714 = vpack.c.bf16 %v1958, %v1958
  %v2715 = vpack.c.bf16 %v1960, %v1960
  %v2716 = vpack.c.bf16 %v1983, %v1983
  %v2717 = vpack.c.bf16 %v1985, %v1985
  %v2718 = vpack.c.bf16 %v2008, %v2008
  %v2719 = vpack.c.bf16 %v2010, %v2010
  %v2720 = vpack.c.bf16 %v2033, %v2033
  %v2721 = vpack.c.bf16 %v2035, %v2035
  %v2722 = vpack.c.bf16 %v2058, %v2058
  %v2723 = vpack.c.bf16 %v2060, %v2060
  %v2724 = vpack.c.bf16 %v2083, %v2083
  %v2725 = vpack.c.bf16 %v2085, %v2085
  %v2726 = vpack.c.bf16 %v2108, %v2108
  %v2727 = vpack.c.bf16 %v2110, %v2110
  %vm2728 = vcmask 60416
  %2729 = vst.msk [vmem:[#allocation2] sm:$0xf] %vm2728, %v2712
  %2730 = vst.msk [vmem:[#allocation2 + $0x4] sm:$0xf] %vm2728, %v2713
  %2731 = vst.msk [vmem:[#allocation2 + $0x8] sm:$0xf] %vm2728, %v2714
  %2732 = vst.msk [vmem:[#allocation2 + $0xc] sm:$0xf] %vm2728, %v2715
  %2733 = vst.msk [vmem:[#allocation2 + $0x10] sm:$0xf] %vm2728, %v2716
  %2734 = vst.msk [vmem:[#allocation2 + $0x14] sm:$0xf] %vm2728, %v2717
  %2735 = vst.msk [vmem:[#allocation2 + $0x18] sm:$0xf] %vm2728, %v2718
  %2736 = vst.msk [vmem:[#allocation2 + $0x1c] sm:$0xf] %vm2728, %v2719
  %2737 = vst.msk [vmem:[#allocation2 + $0x20] sm:$0xf] %vm2728, %v2720
  %2738 = vst.msk [vmem:[#allocation2 + $0x24] sm:$0xf] %vm2728, %v2721
  %2739 = vst.msk [vmem:[#allocation2 + $0x28] sm:$0xf] %vm2728, %v2722
  %2740 = vst.msk [vmem:[#allocation2 + $0x2c] sm:$0xf] %vm2728, %v2723
  %2741 = vst.msk [vmem:[#allocation2 + $0x30] sm:$0xf] %vm2728, %v2724
  %2742 = vst.msk [vmem:[#allocation2 + $0x34] sm:$0xf] %vm2728, %v2725
  %2743 = vst.msk [vmem:[#allocation2 + $0x38] sm:$0xf] %vm2728, %v2726
  %2744 = vst.msk [vmem:[#allocation2 + $0x3c] sm:$0xf] %vm2728, %v2727
  %v2745 = vpack.c.bf16 %v2133, %v2133
  %v2746 = vpack.c.bf16 %v2135, %v2135
  %v2747 = vpack.c.bf16 %v2158, %v2158
  %v2748 = vpack.c.bf16 %v2160, %v2160
  %v2749 = vpack.c.bf16 %v2183, %v2183
  %v2750 = vpack.c.bf16 %v2185, %v2185
  %v2751 = vpack.c.bf16 %v2208, %v2208
  %v2752 = vpack.c.bf16 %v2210, %v2210
  %v2753 = vpack.c.bf16 %v2233, %v2233
  %v2754 = vpack.c.bf16 %v2235, %v2235
  %v2755 = vpack.c.bf16 %v2258, %v2258
  %v2756 = vpack.c.bf16 %v2260, %v2260
  %v2757 = vpack.c.bf16 %v2283, %v2283
  %v2758 = vpack.c.bf16 %v2285, %v2285
  %v2759 = vpack.c.bf16 %v2308, %v2308
  %v2760 = vpack.c.bf16 %v2310, %v2310
  %2777 = vrot.lane.b32.xlu0 %v2745, 8
  %v2778 = vpop.permute.xlu0 %2777
  %2779 = vrot.lane.b32.xlu0 %v2746, 8
  %v2780 = vpop.permute.xlu0 %2779
  %2781 = vrot.lane.b32.xlu0 %v2747, 8
  %v2782 = vpop.permute.xlu0 %2781
  %2783 = vrot.lane.b32.xlu0 %v2748, 8
  %v2784 = vpop.permute.xlu0 %2783
  %2785 = vrot.lane.b32.xlu0 %v2749, 8
  %v2786 = vpop.permute.xlu0 %2785
  %2787 = vrot.lane.b32.xlu0 %v2750, 8
  %v2788 = vpop.permute.xlu0 %2787
  %2789 = vrot.lane.b32.xlu0 %v2751, 8
  %v2790 = vpop.permute.xlu0 %2789
  %2791 = vrot.lane.b32.xlu0 %v2752, 8
  %v2792 = vpop.permute.xlu0 %2791
  %2793 = vrot.lane.b32.xlu0 %v2753, 8
  %v2794 = vpop.permute.xlu0 %2793
  %2795 = vrot.lane.b32.xlu0 %v2754, 8
  %v2796 = vpop.permute.xlu0 %2795
  %2797 = vrot.lane.b32.xlu0 %v2755, 8
  %v2798 = vpop.permute.xlu0 %2797
  %2799 = vrot.lane.b32.xlu0 %v2756, 8
  %v2800 = vpop.permute.xlu0 %2799
  %2801 = vrot.lane.b32.xlu0 %v2757, 8
  %v2802 = vpop.permute.xlu0 %2801
  %2803 = vrot.lane.b32.xlu0 %v2758, 8
  %v2804 = vpop.permute.xlu0 %2803
  %2805 = vrot.lane.b32.xlu0 %v2759, 8
  %v2806 = vpop.permute.xlu0 %2805
  %2807 = vrot.lane.b32.xlu0 %v2760, 8
  %v2808 = vpop.permute.xlu0 %2807
  %vm2825 = vcmask 126016
  %2826 = vst.msk [vmem:[#allocation2] sm:$0xf] %vm2825, %v2778
  %2827 = vst.msk [vmem:[#allocation2 + $0x4] sm:$0xf] %vm2825, %v2780
  %2828 = vst.msk [vmem:[#allocation2 + $0x8] sm:$0xf] %vm2825, %v2782
  %2829 = vst.msk [vmem:[#allocation2 + $0xc] sm:$0xf] %vm2825, %v2784
  %2830 = vst.msk [vmem:[#allocation2 + $0x10] sm:$0xf] %vm2825, %v2786
  %2831 = vst.msk [vmem:[#allocation2 + $0x14] sm:$0xf] %vm2825, %v2788
  %2832 = vst.msk [vmem:[#allocation2 + $0x18] sm:$0xf] %vm2825, %v2790
  %2833 = vst.msk [vmem:[#allocation2 + $0x1c] sm:$0xf] %vm2825, %v2792
  %2834 = vst.msk [vmem:[#allocation2 + $0x20] sm:$0xf] %vm2825, %v2794
  %2835 = vst.msk [vmem:[#allocation2 + $0x24] sm:$0xf] %vm2825, %v2796
  %2836 = vst.msk [vmem:[#allocation2 + $0x28] sm:$0xf] %vm2825, %v2798
  %2837 = vst.msk [vmem:[#allocation2 + $0x2c] sm:$0xf] %vm2825, %v2800
  %2838 = vst.msk [vmem:[#allocation2 + $0x30] sm:$0xf] %vm2825, %v2802
  %2839 = vst.msk [vmem:[#allocation2 + $0x34] sm:$0xf] %vm2825, %v2804
  %2840 = vst.msk [vmem:[#allocation2 + $0x38] sm:$0xf] %vm2825, %v2806
  %2841 = vst.msk [vmem:[#allocation2 + $0x3c] sm:$0xf] %vm2825, %v2808
  %v2842 = vpack.c.bf16 %v2333, %v2333
  %v2843 = vpack.c.bf16 %v2335, %v2335
  %v2844 = vpack.c.bf16 %v2358, %v2358
  %v2845 = vpack.c.bf16 %v2360, %v2360
  %v2846 = vpack.c.bf16 %v2383, %v2383
  %v2847 = vpack.c.bf16 %v2385, %v2385
  %v2848 = vpack.c.bf16 %v2408, %v2408
  %v2849 = vpack.c.bf16 %v2410, %v2410
  %v2850 = vpack.c.bf16 %v2433, %v2433
  %v2851 = vpack.c.bf16 %v2435, %v2435
  %v2852 = vpack.c.bf16 %v2458, %v2458
  %v2853 = vpack.c.bf16 %v2460, %v2460
  %v2854 = vpack.c.bf16 %v2483, %v2483
  %v2855 = vpack.c.bf16 %v2485, %v2485
  %v2856 = vpack.c.bf16 %v2508, %v2508
  %v2857 = vpack.c.bf16 %v2510, %v2510
  %2874 = vrot.lane.b32.xlu0 %v2842, 16
  %v2875 = vpop.permute.xlu0 %2874
  %2876 = vrot.lane.b32.xlu0 %v2843, 16
  %v2877 = vpop.permute.xlu0 %2876
  %2878 = vrot.lane.b32.xlu0 %v2844, 16
  %v2879 = vpop.permute.xlu0 %2878
  %2880 = vrot.lane.b32.xlu0 %v2845, 16
  %v2881 = vpop.permute.xlu0 %2880
  %2882 = vrot.lane.b32.xlu0 %v2846, 16
  %v2883 = vpop.permute.xlu0 %2882
  %2884 = vrot.lane.b32.xlu0 %v2847, 16
  %v2885 = vpop.permute.xlu0 %2884
  %2886 = vrot.lane.b32.xlu0 %v2848, 16
  %v2887 = vpop.permute.xlu0 %2886
  %2888 = vrot.lane.b32.xlu0 %v2849, 16
  %v2889 = vpop.permute.xlu0 %2888
  %2890 = vrot.lane.b32.xlu0 %v2850, 16
  %v2891 = vpop.permute.xlu0 %2890
  %2892 = vrot.lane.b32.xlu0 %v2851, 16
  %v2893 = vpop.permute.xlu0 %2892
  %2894 = vrot.lane.b32.xlu0 %v2852, 16
  %v2895 = vpop.permute.xlu0 %2894
  %2896 = vrot.lane.b32.xlu0 %v2853, 16
  %v2897 = vpop.permute.xlu0 %2896
  %2898 = vrot.lane.b32.xlu0 %v2854, 16
  %v2899 = vpop.permute.xlu0 %2898
  %2900 = vrot.lane.b32.xlu0 %v2855, 16
  %v2901 = vpop.permute.xlu0 %2900
  %2902 = vrot.lane.b32.xlu0 %v2856, 16
  %v2903 = vpop.permute.xlu0 %2902
  %2904 = vrot.lane.b32.xlu0 %v2857, 16
  %v2905 = vpop.permute.xlu0 %2904
  %vm2922 = vcmask 191616
  %2923 = vst.msk [vmem:[#allocation2] sm:$0xf] %vm2922, %v2875
  %2924 = vst.msk [vmem:[#allocation2 + $0x4] sm:$0xf] %vm2922, %v2877
  %2925 = vst.msk [vmem:[#allocation2 + $0x8] sm:$0xf] %vm2922, %v2879
  %2926 = vst.msk [vmem:[#allocation2 + $0xc] sm:$0xf] %vm2922, %v2881
  %2927 = vst.msk [vmem:[#allocation2 + $0x10] sm:$0xf] %vm2922, %v2883
  %2928 = vst.msk [vmem:[#allocation2 + $0x14] sm:$0xf] %vm2922, %v2885
  %2929 = vst.msk [vmem:[#allocation2 + $0x18] sm:$0xf] %vm2922, %v2887
  %2930 = vst.msk [vmem:[#allocation2 + $0x1c] sm:$0xf] %vm2922, %v2889
  %2931 = vst.msk [vmem:[#allocation2 + $0x20] sm:$0xf] %vm2922, %v2891
  %2932 = vst.msk [vmem:[#allocation2 + $0x24] sm:$0xf] %vm2922, %v2893
  %2933 = vst.msk [vmem:[#allocation2 + $0x28] sm:$0xf] %vm2922, %v2895
  %2934 = vst.msk [vmem:[#allocation2 + $0x2c] sm:$0xf] %vm2922, %v2897
  %2935 = vst.msk [vmem:[#allocation2 + $0x30] sm:$0xf] %vm2922, %v2899
  %2936 = vst.msk [vmem:[#allocation2 + $0x34] sm:$0xf] %vm2922, %v2901
  %2937 = vst.msk [vmem:[#allocation2 + $0x38] sm:$0xf] %vm2922, %v2903
  %2938 = vst.msk [vmem:[#allocation2 + $0x3c] sm:$0xf] %vm2922, %v2905
  %v2939 = vpack.c.bf16 %v2533, %v2533
  %v2940 = vpack.c.bf16 %v2535, %v2535
  %v2941 = vpack.c.bf16 %v2558, %v2558
  %v2942 = vpack.c.bf16 %v2560, %v2560
  %v2943 = vpack.c.bf16 %v2583, %v2583
  %v2944 = vpack.c.bf16 %v2585, %v2585
  %v2945 = vpack.c.bf16 %v2608, %v2608
  %v2946 = vpack.c.bf16 %v2610, %v2610
  %v2947 = vpack.c.bf16 %v2633, %v2633
  %v2948 = vpack.c.bf16 %v2635, %v2635
  %v2949 = vpack.c.bf16 %v2658, %v2658
  %v2950 = vpack.c.bf16 %v2660, %v2660
  %v2951 = vpack.c.bf16 %v2683, %v2683
  %v2952 = vpack.c.bf16 %v2685, %v2685
  %v2953 = vpack.c.bf16 %v2708, %v2708
  %v2954 = vpack.c.bf16 %v2710, %v2710
  %2971 = vrot.lane.b32.xlu0 %v2939, 24
  %v2972 = vpop.permute.xlu0 %2971
  %2973 = vrot.lane.b32.xlu0 %v2940, 24
  %v2974 = vpop.permute.xlu0 %2973
  %2975 = vrot.lane.b32.xlu0 %v2941, 24
  %v2976 = vpop.permute.xlu0 %2975
  %2977 = vrot.lane.b32.xlu0 %v2942, 24
  %v2978 = vpop.permute.xlu0 %2977
  %2979 = vrot.lane.b32.xlu0 %v2943, 24
  %v2980 = vpop.permute.xlu0 %2979
  %2981 = vrot.lane.b32.xlu0 %v2944, 24
  %v2982 = vpop.permute.xlu0 %2981
  %2983 = vrot.lane.b32.xlu0 %v2945, 24
  %v2984 = vpop.permute.xlu0 %2983
  %2985 = vrot.lane.b32.xlu0 %v2946, 24
  %v2986 = vpop.permute.xlu0 %2985
  %2987 = vrot.lane.b32.xlu0 %v2947, 24
  %v2988 = vpop.permute.xlu0 %2987
  %2989 = vrot.lane.b32.xlu0 %v2948, 24
  %v2990 = vpop.permute.xlu0 %2989
  %2991 = vrot.lane.b32.xlu0 %v2949, 24
  %v2992 = vpop.permute.xlu0 %2991
  %2993 = vrot.lane.b32.xlu0 %v2950, 24
  %v2994 = vpop.permute.xlu0 %2993
  %2995 = vrot.lane.b32.xlu0 %v2951, 24
  %v2996 = vpop.permute.xlu0 %2995
  %2997 = vrot.lane.b32.xlu0 %v2952, 24
  %v2998 = vpop.permute.xlu0 %2997
  %2999 = vrot.lane.b32.xlu0 %v2953, 24
  %v3000 = vpop.permute.xlu0 %2999
  %3001 = vrot.lane.b32.xlu0 %v2954, 24
  %v3002 = vpop.permute.xlu0 %3001
  %vm3019 = vcmask 257216
  %3020 = vst.msk [vmem:[#allocation2] sm:$0xf] %vm3019, %v2972
  %3021 = vst.msk [vmem:[#allocation2 + $0x4] sm:$0xf] %vm3019, %v2974
  %3022 = vst.msk [vmem:[#allocation2 + $0x8] sm:$0xf] %vm3019, %v2976
  %3023 = vst.msk [vmem:[#allocation2 + $0xc] sm:$0xf] %vm3019, %v2978
  %3024 = vst.msk [vmem:[#allocation2 + $0x10] sm:$0xf] %vm3019, %v2980
  %3025 = vst.msk [vmem:[#allocation2 + $0x14] sm:$0xf] %vm3019, %v2982
  %3026 = vst.msk [vmem:[#allocation2 + $0x18] sm:$0xf] %vm3019, %v2984
  %3027 = vst.msk [vmem:[#allocation2 + $0x1c] sm:$0xf] %vm3019, %v2986
  %3028 = vst.msk [vmem:[#allocation2 + $0x20] sm:$0xf] %vm3019, %v2988
  %3029 = vst.msk [vmem:[#allocation2 + $0x24] sm:$0xf] %vm3019, %v2990
  %3030 = vst.msk [vmem:[#allocation2 + $0x28] sm:$0xf] %vm3019, %v2992
  %3031 = vst.msk [vmem:[#allocation2 + $0x2c] sm:$0xf] %vm3019, %v2994
  %3032 = vst.msk [vmem:[#allocation2 + $0x30] sm:$0xf] %vm3019, %v2996
  %3033 = vst.msk [vmem:[#allocation2 + $0x34] sm:$0xf] %vm3019, %v2998
  %3034 = vst.msk [vmem:[#allocation2 + $0x38] sm:$0xf] %vm3019, %v3000
  %3035 = vst.msk [vmem:[#allocation2 + $0x3c] sm:$0xf] %vm3019, %v3002
  %v3036 = vld [vmem:[#allocation2] sm:$0xf]
  %v3037 = vld [vmem:[#allocation2 + $0x4] sm:$0xf]
  %v3038 = vld [vmem:[#allocation2 + $0x8] sm:$0xf]
  %v3039 = vld [vmem:[#allocation2 + $0xc] sm:$0xf]
  %v3040 = vld [vmem:[#allocation2 + $0x10] sm:$0xf]
  %v3041 = vld [vmem:[#allocation2 + $0x14] sm:$0xf]
  %v3042 = vld [vmem:[#allocation2 + $0x18] sm:$0xf]
  %v3043 = vld [vmem:[#allocation2 + $0x1c] sm:$0xf]
  %v3044 = vld [vmem:[#allocation2 + $0x20] sm:$0xf]
  %v3045 = vld [vmem:[#allocation2 + $0x24] sm:$0xf]
  %v3046 = vld [vmem:[#allocation2 + $0x28] sm:$0xf]
  %v3047 = vld [vmem:[#allocation2 + $0x2c] sm:$0xf]
  %v3048 = vld [vmem:[#allocation2 + $0x30] sm:$0xf]
  %v3049 = vld [vmem:[#allocation2 + $0x34] sm:$0xf]
  %v3050 = vld [vmem:[#allocation2 + $0x38] sm:$0xf]
  %v3051 = vld [vmem:[#allocation2 + $0x3c] sm:$0xf]
  %v3052 = vld [vmem:[%s4] sm:$0xf]
  %v3053 = vld [vmem:[%s4 + $0x4] sm:$0xf]
  %v3054 = vld [vmem:[%s4 + $0x8] sm:$0xf]
  %v3055 = vld [vmem:[%s4 + $0xc] sm:$0xf]
  %v3056 = vld [vmem:[%s5] sm:$0x1]
  %v3058 = vperm.slane %v3056, 0
  %v3076 = vunpack.c.l.b16 %v3036
  %v3077 = vunpack.c.l.b16 %v3037
  %v3078 = vunpack.c.l.b16 %v3038
  %v3079 = vunpack.c.l.b16 %v3039
  %v3080 = vunpack.c.l.b16 %v3040
  %v3081 = vunpack.c.l.b16 %v3041
  %v3082 = vunpack.c.l.b16 %v3042
  %v3083 = vunpack.c.l.b16 %v3043
  %v3084 = vunpack.c.l.b16 %v3044
  %v3085 = vunpack.c.l.b16 %v3045
  %v3086 = vunpack.c.l.b16 %v3046
  %v3087 = vunpack.c.l.b16 %v3047
  %v3088 = vunpack.c.l.b16 %v3048
  %v3089 = vunpack.c.l.b16 %v3049
  %v3090 = vunpack.c.l.b16 %v3050
  %v3091 = vunpack.c.l.b16 %v3051
  %v3092 = vpack.c.b16 %v3077, %v3076
  %v3093 = vpack.c.b16 %v3079, %v3078
  %v3094 = vpack.c.b16 %v3081, %v3080
  %v3095 = vpack.c.b16 %v3083, %v3082
  %v3096 = vpack.c.b16 %v3085, %v3084
  %v3097 = vpack.c.b16 %v3087, %v3086
  %v3098 = vpack.c.b16 %v3089, %v3088
  %v3099 = vpack.c.b16 %v3091, %v3090
  %v3104 = vunpack.c.l.b16 %v3052
  %v3105 = vunpack.c.l.b16 %v3053
  %v3106 = vunpack.c.l.b16 %v3054
  %v3107 = vunpack.c.l.b16 %v3055
  %v3108 = vpack.c.b16 %v3105, %v3104
  %v3109 = vpack.c.b16 %v3107, %v3106
  %v3113 = vsel %vm68, %v3092, 0
  %v3116 = vsel %vm68, %v3093, 0
  %v3119 = vsel %vm68, %v3094, 0
  %v3122 = vsel %vm68, %v3095, 0
  %v3125 = vsel %vm68, %v3096, 0
  %v3128 = vsel %vm68, %v3097, 0
  %v3131 = vsel %vm68, %v3098, 0
  %v3134 = vsel %vm68, %v3099, 0
  %3136 = vmatpush.bf16.msra.mxu0 0
  %3137 = vmatpush.bf16.msra.mxu0 0
  %3138 = vmatpush.bf16.msra.mxu0 0
  %3139 = vmatpush.bf16.msra.mxu0 0
  %3140 = vmatpush.bf16.msra.mxu0 0
  %3141 = vmatpush.bf16.msra.mxu0 0
  %3142 = vmatpush.bf16.msra.mxu0 %v3109
  %3143 = vmatpush.bf16.msra.mxu0 %v3108
  %3144 = vmatmul.bf16.gmra.mxu0 %v3113
  %v3145 = vpop.f32.mrf.mxu0
  %v3146 = vadd.f32 %v3058, %v3145
  %v3147 = vpop.f32.mrf.mxu0
  %v3148 = vadd.f32 %v3058, %v3147
  %3149 = vmatmul.bf16.gmra.mxu0 %v3116
  %v3150 = vpop.f32.mrf.mxu0
  %v3151 = vadd.f32 %v3058, %v3150
  %v3152 = vpop.f32.mrf.mxu0
  %v3153 = vadd.f32 %v3058, %v3152
  %3154 = vmatmul.bf16.gmra.mxu0 %v3119
  %v3155 = vpop.f32.mrf.mxu0
  %v3156 = vadd.f32 %v3058, %v3155
  %v3157 = vpop.f32.mrf.mxu0
  %v3158 = vadd.f32 %v3058, %v3157
  %3159 = vmatmul.bf16.gmra.mxu0 %v3122
  %v3160 = vpop.f32.mrf.mxu0
  %v3161 = vadd.f32 %v3058, %v3160
  %v3162 = vpop.f32.mrf.mxu0
  %v3163 = vadd.f32 %v3058, %v3162
  %3164 = vmatmul.bf16.gmra.mxu0 %v3125
  %v3165 = vpop.f32.mrf.mxu0
  %v3166 = vadd.f32 %v3058, %v3165
  %v3167 = vpop.f32.mrf.mxu0
  %v3168 = vadd.f32 %v3058, %v3167
  %3169 = vmatmul.bf16.gmra.mxu0 %v3128
  %v3170 = vpop.f32.mrf.mxu0
  %v3171 = vadd.f32 %v3058, %v3170
  %v3172 = vpop.f32.mrf.mxu0
  %v3173 = vadd.f32 %v3058, %v3172
  %3174 = vmatmul.bf16.gmra.mxu0 %v3131
  %v3175 = vpop.f32.mrf.mxu0
  %v3176 = vadd.f32 %v3058, %v3175
  %v3177 = vpop.f32.mrf.mxu0
  %v3178 = vadd.f32 %v3058, %v3177
  %3179 = vmatmul.bf16.gmra.mxu0 %v3134
  %v3180 = vpop.f32.mrf.mxu0
  %v3181 = vadd.f32 %v3058, %v3180
  %v3182 = vpop.f32.mrf.mxu0
  %v3183 = vadd.f32 %v3058, %v3182
  %3184 = vdwg.mxu0
  %3185 = vst.msk [vmem:[%s6] sm:$0xff] %vm68, %v3146
  %3186 = vst.msk [vmem:[%s6 + $0x8] sm:$0xff] %vm68, %v3148
  %3187 = vst.msk [vmem:[%s6 + $0x10] sm:$0xff] %vm68, %v3151
  %3188 = vst.msk [vmem:[%s6 + $0x18] sm:$0xff] %vm68, %v3153
  %3189 = vst.msk [vmem:[%s6 + $0x20] sm:$0xff] %vm68, %v3156
  %3190 = vst.msk [vmem:[%s6 + $0x28] sm:$0xff] %vm68, %v3158
  %3191 = vst.msk [vmem:[%s6 + $0x30] sm:$0xff] %vm68, %v3161
  %3192 = vst.msk [vmem:[%s6 + $0x38] sm:$0xff] %vm68, %v3163
  %3193 = vst.msk [vmem:[%s6 + $0x40] sm:$0xff] %vm68, %v3166
  %3194 = vst.msk [vmem:[%s6 + $0x48] sm:$0xff] %vm68, %v3168
  %3195 = vst.msk [vmem:[%s6 + $0x50] sm:$0xff] %vm68, %v3171
  %3196 = vst.msk [vmem:[%s6 + $0x58] sm:$0xff] %vm68, %v3173
  %3197 = vst.msk [vmem:[%s6 + $0x60] sm:$0xff] %vm68, %v3176
  %3198 = vst.msk [vmem:[%s6 + $0x68] sm:$0xff] %vm68, %v3178
  %3199 = vst.msk [vmem:[%s6 + $0x70] sm:$0xff] %vm68, %v3181
  %3200 = vst.msk [vmem:[%s6 + $0x78] sm:$0xff] %vm68, %v3183
  // Predicated region
  $region26: #{tpu_custom_call.1} parent=0 // pred_check
    _
  $region27: #{tpu_custom_call.1} parent=0 // pred_check_branch
    %3202 = sbr.rel (0) target = $region29
  $region28: #{tpu_custom_call.1} parent=0 // pred_region
    _
  $region29: #{tpu_custom_call.1} parent=0 // pred_fallthru
    _
  // Predicated region
  $region30: #{tpu_custom_call.1} parent=0 // pred_check
    _
  $region31: #{tpu_custom_call.1} parent=0 // pred_check_branch
    %3204 = sbr.rel (0) target = $region33
  $region32: #{tpu_custom_call.1} parent=0 // pred_region
    _
  $region33: #{tpu_custom_call.1} parent=0 // pred_fallthru
    _

</llo_original>
